<compile_context>
chip_gen: v7x
topology: tpu7x:2x2x1
jax: 0.10.0
libtpu: 0.0.40
codegen_flags: <defaults>
</compile_context>

<pallas_src>
import functools
import math

import jax
import jax.numpy as jnp
from jax import lax
from jax.experimental import pallas as pl
from jax.experimental.pallas import tpu as pltpu


# ----------------------------- sizing helpers -----------------------------

def _vmem_capacity_bytes():
    try:
        return int(pltpu.get_tpu_info().vmem_capacity_bytes)
    except Exception:
        return 64 * 1024 * 1024          # assume the smallest (v7x per-core VMEM)


_VMEM_CAP = _vmem_capacity_bytes()
# Explicit scoped-VMEM cap: ~48 MiB on v7x (64 MiB physical), ~96 MiB on v5e/v6e.
_VMEM_LIMIT = max(32 * 1024 * 1024, min(96 * 1024 * 1024, (_VMEM_CAP * 3) // 4))
# Budget for keeping (double-buffered) bf16 weight panels fully VMEM-resident:
# roughly D <= ~2.5k for the two-weight mixed kernel on v7x, larger on v5e/v6e.
_RESIDENT_BUDGET = _VMEM_LIMIT // 2


def _pick_tile(dim, pref, gran):
    """Largest multiple of `gran` that divides `dim` and is <= `pref`; else full dim."""
    if dim <= pref:
        return dim
    t = (pref // gran) * gran
    while t >= gran:
        if dim % t == 0:
            return t
        t -= gran
    return dim


def _rows_tile(n, pref=256, gran=16, min_tiles=2):
    """Row tile; prefers >=2 tiles so HBM-bound kernels can shard on v7x megacore."""
    tm = _pick_tile(n, pref, gran)
    if n // tm < min_tiles and n >= min_tiles * gran:
        tm = _pick_tile(n, max(gran, n // min_tiles), gran)
    return tm


def _col_tile(dim, pref=512):
    """256-aligned contraction/output tile (v6e/v7x MXU is 2x256x256); 128 fallback."""
    if dim <= pref:
        return dim
    for gran in (256, 128):
        t = (pref // gran) * gran
        while t >= gran:
            if dim % t == 0:
                return t
            t -= gran
    return dim


def _fits_resident(din, dout, n_mats):
    # bf16 weights, double-buffered by the BlockSpec pipeline.
    return 2 * n_mats * din * dout * 2 <= _RESIDENT_BUDGET


def _compiler_params(semantics):
    return pltpu.CompilerParams(dimension_semantics=semantics,
                                vmem_limit_bytes=_VMEM_LIMIT)


# ----------------------------- Pallas kernels -----------------------------

def _matmul_resident_kernel(x_ref, w_ref, b_ref, o_ref, *, use_gelu):
    # One grid step per row tile; the full bf16 weight panel is VMEM-resident
    # (constant block index -> Pallas fetches it exactly once).  The bf16 cast
    # happens once per tile (no k-loop), keeping x reads at 4 B/elt from HBM.
    y = jnp.dot(x_ref[...].astype(jnp.bfloat16), w_ref[...],
                preferred_element_type=jnp.float32) + b_ref[...]
    if use_gelu:
        y = jax.nn.gelu(y, approximate=True)
    o_ref[...] = y.astype(o_ref.dtype)


def _matmul_tiled_kernel(x_ref, w_ref, b_ref, o_ref, acc_ref, *, use_gelu):
    # Fallback for hidden sizes whose weights do not fit VMEM-resident.
    @pl.when(pl.program_id(2) == 0)
    def _():
        acc_ref[...] = jnp.zeros_like(acc_ref)

    acc_ref[...] += jnp.dot(x_ref[...].astype(jnp.bfloat16), w_ref[...],
                            preferred_element_type=jnp.float32)

    @pl.when(pl.program_id(2) == pl.num_programs(2) - 1)
    def _():
        y = acc_ref[...] + b_ref[...]
        if use_gelu:
            y = jax.nn.gelu(y, approximate=True)
        o_ref[...] = y.astype(o_ref.dtype)


def _mixed_resident_kernel(hm_ref, hs_ref, x_ref, mask_ref, wm_ref, bm_ref,
                           wp_ref, bp_ref, o_ref):
    # motion tokens -> model (linear+gelu); static tokens -> cache projection.
    # hm/hs are scalar-prefetched per-row-tile flags.  Exactly one branch runs
    # per tile: pure-static tiles skip the model matmul AND its gelu epilogue,
    # pure-motion tiles skip the projection.  Weights are resident, so the
    # skip saves MXU work without re-fetching weight DMA per tile.
    i = pl.program_id(0)
    motion = hm_ref[i] > 0
    static = hs_ref[i] > 0

    @pl.when(jnp.logical_and(motion, static))              # mixed tile
    def _():
        x = x_ref[...].astype(jnp.bfloat16)
        m_out = jax.nn.gelu(
            jnp.dot(x, wm_ref[...], preferred_element_type=jnp.float32) + bm_ref[...],
            approximate=True)
        p_out = jnp.dot(x, wp_ref[...], preferred_element_type=jnp.float32) + bp_ref[...]
        keep = mask_ref[...] > 0.5                          # (tm, 1) bool
        o_ref[...] = jnp.where(keep, m_out, p_out).astype(o_ref.dtype)

    @pl.when(jnp.logical_and(motion, jnp.logical_not(static)))   # all-motion tile
    def _():
        x = x_ref[...].astype(jnp.bfloat16)
        m_out = jax.nn.gelu(
            jnp.dot(x, wm_ref[...], preferred_element_type=jnp.float32) + bm_ref[...],
            approximate=True)
        o_ref[...] = m_out.astype(o_ref.dtype)

    @pl.when(jnp.logical_and(jnp.logical_not(motion), static))   # all-static tile
    def _():
        x = x_ref[...].astype(jnp.bfloat16)
        p_out = jnp.dot(x, wp_ref[...], preferred_element_type=jnp.float32) + bp_ref[...]
        o_ref[...] = p_out.astype(o_ref.dtype)


def _stats_kernel(cur_ref, prev_ref, sal_ref, part_ref):
    # Fused single pass over (cur, prev): per-token saliency plus per-row-tile
    # partial Frobenius sums / saliency max.  No cross-step carry -> the row
    # axis stays "parallel" (megacore-shardable on v7x); the tiny (nm, 3)
    # partials are reduced in XLA by the caller.
    cur = cur_ref[...]
    prev = prev_ref[...]
    diff = cur - prev
    row_sal = jnp.max(jnp.abs(diff), axis=-1, keepdims=True)      # (tm, 1)
    sal_ref[...] = row_sal
    part_ref[0, 0] = jnp.sum(diff * diff)
    part_ref[0, 1] = jnp.sum(prev * prev)
    part_ref[0, 2] = jnp.max(row_sal)


def _bg_update_kernel(bg_ref, cur_ref, o_ref):
    o_ref[...] = 0.9 * bg_ref[...] + 0.1 * cur_ref[...]


# ----------------------------- pallas_call wrappers -----------------------------

def _pallas_matmul(x2d, w_t, b_row, *, use_gelu):
    N, Din = x2d.shape
    Dout = w_t.shape[1]
    tm = _rows_tile(N)

    if _fits_resident(Din, Dout, 1):
        kernel = functools.partial(_matmul_resident_kernel, use_gelu=use_gelu)
        return pl.pallas_call(
            kernel,
            out_shape=jax.ShapeDtypeStruct((N, Dout), x2d.dtype),
            grid=(N // tm,),
            in_specs=[pl.BlockSpec((tm, Din), lambda i: (i, 0)),
                      pl.BlockSpec((Din, Dout), lambda i: (0, 0)),
                      pl.BlockSpec((1, Dout), lambda i: (0, 0))],
            out_specs=pl.BlockSpec((tm, Dout), lambda i: (i, 0)),
            compiler_params=_compiler_params(("parallel",)),
        )(x2d, w_t, b_row)

    tn = _col_tile(Dout)
    tk = _col_tile(Din)
    kernel = functools.partial(_matmul_tiled_kernel, use_gelu=use_gelu)
    return pl.pallas_call(
        kernel,
        out_shape=jax.ShapeDtypeStruct((N, Dout), x2d.dtype),
        grid=(N // tm, Dout // tn, Din // tk),
        in_specs=[pl.BlockSpec((tm, tk), lambda i, j, k: (i, k)),
                  pl.BlockSpec((tk, tn), lambda i, j, k: (k, j)),
                  pl.BlockSpec((1, tn), lambda i, j, k: (0, j))],
        out_specs=pl.BlockSpec((tm, tn), lambda i, j, k: (i, j)),
        scratch_shapes=[pltpu.VMEM((tm, tn), jnp.float32)],
        compiler_params=_compiler_params(("parallel", "parallel", "arbitrary")),
    )(x2d, w_t, b_row)


def _pallas_masked_mixed(x2d, mask_col, wm_t, bm_row, wp_t, bp_row):
    N, Din = x2d.shape
    Dout = wm_t.shape[1]

    if not _fits_resident(Din, Dout, 2):
        # TODO(synk): large-hidden fallback computes both paths for every token
        # instead of tile-skipping (reference gathers motion tokens with
        # index_select); results match because the surrogate model is token-wise.
        m_out = _pallas_matmul(x2d, wm_t, bm_row, use_gelu=True)
        p_out = _pallas_matmul(x2d, wp_t, bp_row, use_gelu=False)
        return jnp.where(mask_col > 0.5, m_out, p_out)

    tm = _rows_tile(N)
    nm = N // tm

    # Per-row-tile skip flags (tiny device-side compute, no host sync):
    mask_tiles = mask_col.reshape(nm, tm)
    has_motion = (jnp.max(mask_tiles, axis=1) > 0.5).astype(jnp.int32)
    has_static = (jnp.min(mask_tiles, axis=1) < 0.5).astype(jnp.int32)

    grid_spec = pltpu.PrefetchScalarGridSpec(
        num_scalar_prefetch=2,
        grid=(nm,),
        in_specs=[
            pl.BlockSpec((tm, Din), lambda i, hm, hs: (i, 0)),     # x
            pl.BlockSpec((tm, 1), lambda i, hm, hs: (i, 0)),       # mask
            pl.BlockSpec((Din, Dout), lambda i, hm, hs: (0, 0)),   # Wm (resident)
            pl.BlockSpec((1, Dout), lambda i, hm, hs: (0, 0)),     # bm
            pl.BlockSpec((Din, Dout), lambda i, hm, hs: (0, 0)),   # Wp (resident)
            pl.BlockSpec((1, Dout), lambda i, hm, hs: (0, 0)),     # bp
        ],
        out_specs=pl.BlockSpec((tm, Dout), lambda i, hm, hs: (i, 0)),
    )
    return pl.pallas_call(
        _mixed_resident_kernel,
        out_shape=jax.ShapeDtypeStruct((N, Dout), x2d.dtype),
        grid_spec=grid_spec,
        compiler_params=_compiler_params(("parallel",)),
    )(has_motion, has_static, x2d, mask_col, wm_t, bm_row, wp_t, bp_row)


def _pallas_stats(cur2d, prev2d):
    N, D = cur2d.shape
    tm = _rows_tile(N, pref=512, gran=8)
    nm = N // tm
    return pl.pallas_call(
        _stats_kernel,
        out_shape=(jax.ShapeDtypeStruct((N, 1), jnp.float32),    # per-token saliency
                   jax.ShapeDtypeStruct((nm, 3), jnp.float32)),  # per-tile partials
        grid=(nm,),
        in_specs=[pl.BlockSpec((tm, D), lambda i: (i, 0)),
                  pl.BlockSpec((tm, D), lambda i: (i, 0))],
        out_specs=(pl.BlockSpec((tm, 1), lambda i: (i, 0)),
                   pl.BlockSpec((1, 3), lambda i: (i, 0),
                                memory_space=pltpu.MemorySpace.SMEM)),
        compiler_params=_compiler_params(("parallel",)),
    )(cur2d, prev2d)


def _pallas_bg_ema(bg, cur):
    B, S, D = bg.shape
    tm = _rows_tile(S, pref=256, gran=8)
    return pl.pallas_call(
        _bg_update_kernel,
        out_shape=jax.ShapeDtypeStruct(bg.shape, bg.dtype),
        grid=(B, S // tm),
        in_specs=[pl.BlockSpec((1, tm, D), lambda b, i: (b, i, 0)),
                  pl.BlockSpec((1, tm, D), lambda b, i: (b, i, 0))],
        out_specs=pl.BlockSpec((1, tm, D), lambda b, i: (b, i, 0)),
        input_output_aliases={0: 0},
        compiler_params=_compiler_params(("parallel", "parallel")),
    )(bg, cur)


# ----------------------------- fully on-device step -----------------------------

def _fastcache_step(hidden, prev, bg, timestep, use_cached,
                    wm_t, bm_row, wp_t, bp_row, *,
                    cache_ratio_threshold, motion_threshold, betas):
    """One FastCache step entirely on device: stats -> decision -> path select."""
    B, S, D = hidden.shape
    N = B * S
    cur2d = hidden.reshape(N, D)
    prev2d = prev.reshape(N, D)

    sal, partials = _pallas_stats(cur2d, prev2d)
    s_diff = jnp.sum(partials[:, 0])
    s_prev = jnp.sum(partials[:, 1])
    salmax = jnp.max(partials[:, 2])

    delta = jnp.where(s_prev > 0.0,
                      jnp.sqrt(s_diff) / jnp.sqrt(jnp.maximum(s_prev, 1e-30)),
                      jnp.float32(jnp.inf))

    b0, b1, b2, b3 = betas
    nt = timestep / 1000.0
    adaptive_thr = b0 + b1 * delta + b2 * nt + b3 * nt * nt
    dof = float(S * D)
    statistical_thr = math.sqrt((dof + 1.96 * math.sqrt(2.0 * dof)) / dof)
    final_thr = jnp.maximum(jnp.float32(cache_ratio_threshold),
                            jnp.minimum(jnp.float32(statistical_thr), adaptive_thr))
    hit = jnp.logical_and(use_cached, delta <= final_thr)

    # Normalized saliency > threshold  <=>  saliency > threshold * max.
    norm_thr = jnp.where(salmax > 0.0,
                         jnp.float32(motion_threshold) * salmax,
                         jnp.float32(motion_threshold))
    mask_col = (sal > norm_thr).astype(jnp.float32)            # (N, 1)
    motion_frac = jnp.sum(mask_col) / jnp.float32(N)

    branch = jnp.where(hit, 0,
                       jnp.where(motion_frac > 0.5, 1, 2)).astype(jnp.int32)

    def _cache_branch(x2d):
        return _pallas_matmul(x2d, wp_t, bp_row, use_gelu=False)

    def _model_branch(x2d):
        return _pallas_matmul(x2d, wm_t, bm_row, use_gelu=True)

    def _mixed_branch(x2d):
        return _pallas_masked_mixed(x2d, mask_col, wm_t, bm_row, wp_t, bp_row)

    out2d = lax.switch(branch, [_cache_branch, _model_branch, _mixed_branch], cur2d)
    output = out2d.reshape(B, S, D)

    # Reference semantics: the cache-hit path leaves prev / bg untouched.
    new_prev = lax.cond(hit, lambda: prev, lambda: hidden)
    new_bg = lax.cond(hit, lambda: bg, lambda: _pallas_bg_ema(bg, hidden))

    flags = jnp.stack([hit.astype(jnp.int32), branch])
    return output, new_prev, new_bg, flags


# ----------------------------- FastCache driver -----------------------------

class FastCacheAcceleratorPallas:
    def __init__(self, hidden_size, cache_ratio_threshold=0.05,
                 motion_threshold=0.1, significance_level=0.05,
                 cache_enabled=True, key=None):
        self.hidden_size = hidden_size
        self.cache_ratio_threshold = cache_ratio_threshold
        self.motion_threshold = motion_threshold
        self.significance_level = significance_level
        self.cache_enabled = cache_enabled
        self.prev_hidden_states = None
        self.bg_hidden_states = None
        self.cache_hits = 0
        self.total_steps = 0
        self.beta0, self.beta1 = 0.01, 0.5
        self.beta2, self.beta3 = -0.002, 5e-05
        self.layer_cache_hits = {}
        self._pending = []     # (flags device array, layer_idx) resolved lazily

        if key is None:
            key = jax.random.PRNGKey(0)
        k1, k2, k3, k4 = jax.random.split(key, 4)
        bound = 1.0 / math.sqrt(hidden_size)
        # cache_projection = nn.Linear(hidden, hidden): W [out, in], b [out]
        wp = jax.random.uniform(k1, (hidden_size, hidden_size), jnp.float32,
                                -bound, bound)
        bp = jax.random.uniform(k2, (hidden_size,), jnp.float32, -bound, bound)
        # surrogate wrapped model weights
        wm = jax.random.uniform(k3, (hidden_size, hidden_size), jnp.float32,
                                -bound, bound)
        bm = jax.random.uniform(k4, (hidden_size,), jnp.float32, -bound, bound)
        # bf16 weights for the MXU; f32 biases added to the f32 accumulator.
        self.wp_t = wp.T.astype(jnp.bfloat16)     # [in, out]
        self.bp_row = bp[None, :]                 # [1, out] f32
        self.wm_t = wm.T.astype(jnp.bfloat16)
        self.bm_row = bm[None, :]

        self._step_fn = jax.jit(functools.partial(
            _fastcache_step,
            cache_ratio_threshold=float(cache_ratio_threshold),
            motion_threshold=float(motion_threshold),
            betas=(self.beta0, self.beta1, self.beta2, self.beta3)))
        self._model_fn = jax.jit(
            lambda h, w, b: _pallas_matmul(
                h.reshape(-1, h.shape[-1]), w, b, use_gelu=True).reshape(h.shape))

    # --- lazy cache-hit bookkeeping (avoids per-step host sync) ---

    def _drain_pending(self):
        if not self._pending:
            return
        pending, self._pending = self._pending, []
        host_flags = jax.device_get([f for f, _ in pending])
        for flags, (_, layer_idx) in zip(host_flags, pending):
            if int(flags[0]):
                self.cache_hits += 1
                if layer_idx is not None:
                    self.layer_cache_hits[layer_idx] = \
                        self.layer_cache_hits.get(layer_idx, 0) + 1

    # --- reference API pieces ---

    def get_adaptive_threshold(self, variance_score, timestep):
        nt = timestep / 1000.0
        return (self.beta0 + self.beta1 * variance_score
                + self.beta2 * nt + self.beta3 * nt ** 2)

    def compute_relative_change(self, current, previous):
        if previous is None:
            return float('inf')
        B, S, D = current.shape
        _, partials = _pallas_stats(current.reshape(B * S, D),
                                    previous.reshape(B * S, D))
        p = jax.device_get(partials)
        s_diff = float(p[:, 0].sum())
        s_prev = float(p[:, 1].sum())
        if s_prev == 0.0:
            return float('inf')
        return math.sqrt(s_diff) / math.sqrt(s_prev)

    def should_use_cache(self, hidden_states, timestep):
        if not self.cache_enabled or self.prev_hidden_states is None:
            return False
        delta = self.compute_relative_change(hidden_states, self.prev_hidden_states)
        S, D = hidden_states.shape[1], hidden_states.shape[2]
        dof = S * D
        chi2_threshold = dof + 1.96 * math.sqrt(2 * dof)
        statistical_threshold = math.sqrt(chi2_threshold / dof)
        adaptive_threshold = self.get_adaptive_threshold(delta, timestep)
        final_threshold = max(self.cache_ratio_threshold,
                              min(statistical_threshold, adaptive_threshold))
        return delta <= final_threshold

    def compute_motion_saliency(self, hidden_states):
        B, S, D = hidden_states.shape
        if self.prev_hidden_states is None:
            return jnp.ones((S,), jnp.float32)
        sal, partials = _pallas_stats(hidden_states.reshape(B * S, D),
                                      self.prev_hidden_states.reshape(B * S, D))
        m = jnp.max(partials[:, 2])
        sal = sal[:, 0]
        safe_m = jnp.where(m > 0, m, jnp.float32(1.0))
        return jnp.where(m > 0, sal / safe_m, sal)

    # --- forward ---

    def forward(self, hidden_states, timestep=None, use_cached_states=True,
                layer_idx=None):
        self.total_steps += 1

        # First step / caching disabled: full (surrogate) model.
        if not self.cache_enabled or self.prev_hidden_states is None:
            if layer_idx is not None and layer_idx not in self.layer_cache_hits:
                self.layer_cache_hits[layer_idx] = 0
            output = self._model_fn(hidden_states, self.wm_t, self.bm_row)
            self.prev_hidden_states = hidden_states
            if self.bg_hidden_states is None:
                self.bg_hidden_states = jnp.copy(hidden_states)
            return output

        ts = jnp.float32(0.0 if timestep is None else timestep)
        uc = jnp.asarray(bool(use_cached_states))
        output, new_prev, new_bg, flags = self._step_fn(
            hidden_states, self.prev_hidden_states, self.bg_hidden_states,
            ts, uc, self.wm_t, self.bm_row, self.wp_t, self.bp_row)
        self.prev_hidden_states = new_prev
        self.bg_hidden_states = new_bg

        # Cache-hit counters are resolved lazily -> no blocking device_get here.
        self._pending.append((flags, layer_idx))
        if len(self._pending) >= 64:
            self._drain_pending()
        return output

    def get_cache_hit_ratio(self):
        self._drain_pending()
        return 0.0 if self.total_steps == 0 else self.cache_hits / self.total_steps

    def get_layer_hit_stats(self):
        self._drain_pending()
        if self.total_steps == 0:
            return {f'Layer {i}': 0.0 for i in self.layer_cache_hits}
        return {f'Layer {i}': h / self.total_steps
                for i, h in self.layer_cache_hits.items()}

    def reset_stats(self):
        self._drain_pending()
        self.cache_hits = 0
        self.total_steps = 0
        self.layer_cache_hits = {}


# ----------------------------- demo -----------------------------

if __name__ == "__main__":
    # B=1 matches the PyTorch .squeeze(0) assumption; S/D chosen so every kernel
    # runs multi-tile on its row axis (>=2 parallel tiles) while the bf16
    # weights stay fully VMEM-resident.
    B, S, D = 1, 384, 768
    key = jax.random.PRNGKey(0)
    k_x, k_w, k_n1, k_n2 = jax.random.split(key, 4)

    x0 = jax.random.normal(k_x, (B, S, D), jnp.float32)
    acc = FastCacheAcceleratorPallas(hidden_size=D, key=k_w)

    # step 1: no cache yet -> full (surrogate) model
    out0 = acc.forward(x0, timestep=999)
    # step 2: identical input -> delta == 0 -> cache hit -> cache_projection
    out1 = acc.forward(x0, timestep=500)
    # step 3: global perturbation -> >50% motion -> full-model branch
    x2 = x0 + 0.3 * jax.random.normal(k_n1, (B, S, D), jnp.float32)
    out2 = acc.forward(x2, timestep=200)
    # step 4: perturb only the first 4 tokens -> mixed motion/static branch
    #         (row tile 1 is all-static: exercises the per-tile matmul skip)
    x3 = x2.at[:, :4, :].add(2.0 * jax.random.normal(k_n2, (B, 4, D), jnp.float32))
    out3 = acc.forward(x3, timestep=50)

    jax.block_until_ready((out0, out1, out2, out3,
                           acc.bg_hidden_states, acc.prev_hidden_states))
    assert all(bool(jnp.all(jnp.isfinite(o))) for o in (out0, out1, out2, out3))
    assert acc.get_cache_hit_ratio() == 0.25    # exercises the lazy stats drain
    print("KERNEL_OK")
</pallas_src>

<mosaic_0001>
module attributes {stable_mosaic.version = 11 : i64} {
  func.func @_matmul_resident_kernel(%arg0: i32, %arg1: memref<192x768xf32, #tpu.memory_space<vmem>>, %arg2: memref<768x768xbf16, #tpu.memory_space<vmem>>, %arg3: memref<1x768xf32, #tpu.memory_space<vmem>>, %arg4: memref<192x768xf32, #tpu.memory_space<vmem>>) attributes {dimension_semantics = [#tpu.dimension_semantics<parallel>], iteration_bounds = array<i64: 2>, scalar_prefetch = 0 : i64, scratch_operands = 0 : i64, tpu.core_type = #tpu.core_type<tc>, window_params = [{transform_indices = @transform_0, window_bounds = array<i64: 192, 768>}, {pipeline_mode = #tpu.pipeline_mode<synchronous>, transform_indices = @transform_1, window_bounds = array<i64: 768, 768>}, {pipeline_mode = #tpu.pipeline_mode<synchronous>, transform_indices = @transform_2, window_bounds = array<i64: 1, 768>}, {transform_indices = @transform_3, window_bounds = array<i64: 192, 768>}]} {
    %c0 = arith.constant 0 : index
    %c0_0 = arith.constant 0 : index
    %0 = vector.load %arg1[%c0, %c0_0] : memref<192x768xf32, #tpu.memory_space<vmem>>, vector<192x768xf32>
    %1 = arith.truncf %0 : vector<192x768xf32> to vector<192x768xbf16>
    %c0_1 = arith.constant 0 : index
    %c0_2 = arith.constant 0 : index
    %2 = vector.load %arg2[%c0_1, %c0_2] : memref<768x768xbf16, #tpu.memory_space<vmem>>, vector<768x768xbf16>
    %cst = arith.constant dense<0.000000e+00> : vector<192x768xf32>
    %3 = tpu.matmul %1, %2, %cst {dimension_numbers = #tpu.dot_dimension_numbers<[1], [0], [0], [1], [0, 0, 1, 1], [], []>} : vector<192x768xbf16>, vector<768x768xbf16>, vector<192x768xf32> -> vector<192x768xf32>
    %c0_3 = arith.constant 0 : index
    %c0_4 = arith.constant 0 : index
    %4 = vector.load %arg3[%c0_3, %c0_4] : memref<1x768xf32, #tpu.memory_space<vmem>>, vector<1x768xf32>
    %5 = vector.broadcast %4 : vector<1x768xf32> to vector<192x768xf32>
    %6 = arith.addf %3, %5 : vector<192x768xf32>
    %7 = arith.mulf %6, %6 : vector<192x768xf32>
    %8 = arith.mulf %6, %7 : vector<192x768xf32>
    %cst_5 = arith.constant 4.471500e-02 : f32
    %9 = vector.broadcast %cst_5 : f32 to vector<192x768xf32>
    %10 = arith.mulf %9, %8 : vector<192x768xf32>
    %11 = arith.addf %6, %10 : vector<192x768xf32>
    %cst_6 = arith.constant 0.797884583 : f32
    %12 = vector.broadcast %cst_6 : f32 to vector<192x768xf32>
    %13 = arith.mulf %12, %11 : vector<192x768xf32>
    %14 = math.tanh %13 : vector<192x768xf32>
    %cst_7 = arith.constant 1.000000e+00 : f32
    %15 = vector.broadcast %cst_7 : f32 to vector<192x768xf32>
    %16 = arith.addf %15, %14 : vector<192x768xf32>
    %cst_8 = arith.constant 5.000000e-01 : f32
    %17 = vector.broadcast %cst_8 : f32 to vector<192x768xf32>
    %18 = arith.mulf %17, %16 : vector<192x768xf32>
    %19 = arith.mulf %6, %18 : vector<192x768xf32>
    %c0_9 = arith.constant 0 : index
    %c0_10 = arith.constant 0 : index
    %20 = vector.load %arg4[%c0_9, %c0_10] : memref<192x768xf32, #tpu.memory_space<vmem>>, vector<192x768xf32>
    tpu.vector_store %arg4[%c0_9, %c0_10], %19 {strides = array<i32>} : memref<192x768xf32, #tpu.memory_space<vmem>>, vector<192x768xf32>,
    return
  }
  func.func @transform_0(%arg0: i32) -> (i32, i32) {
    %c0_i32 = arith.constant 0 : i32
    %c0_i32_0 = arith.constant 0 : i32
    return %arg0, %c0_i32 : i32, i32
  }
  func.func @transform_1(%arg0: i32) -> (i32, i32) {
    %c0_i32 = arith.constant 0 : i32
    %c0_i32_0 = arith.constant 0 : i32
    %c0_i32_1 = arith.constant 0 : i32
    return %c0_i32, %c0_i32_0 : i32, i32
  }
  func.func @transform_2(%arg0: i32) -> (i32, i32) {
    %c0_i32 = arith.constant 0 : i32
    %c0_i32_0 = arith.constant 0 : i32
    %c0_i32_1 = arith.constant 0 : i32
    return %c0_i32, %c0_i32_0 : i32, i32
  }
  func.func @transform_3(%arg0: i32) -> (i32, i32) {
    %c0_i32 = arith.constant 0 : i32
    %c0_i32_0 = arith.constant 0 : i32
    return %arg0, %c0_i32 : i32, i32
  }
}

</mosaic_0001>

<llo_original>
// kernel: _lambda_.1
$region0: #{_lambda_.1}
  #allocation0 [shape = 'u32[]', space=smem, size = 0x4, offset = 0x4, fixed_abs, tag = 'smem constant byte address 0x4 - core index']
  #allocation1 [shape = 'u32[144,128]{1,0:T(1,128)}', space=vmem, size = 0x12000, scoped, tag = 'internal scratch']
  %s0 = inlined_call_operand.hbm [shape: f32[384,768], index: 0, kind: input, shape index: {}]
  %s1 = inlined_call_operand.hbm [shape: bf16[768,768], index: 1, kind: input, shape index: {}]
  %s2 = inlined_call_operand.hbm [shape: f32[1,768], index: 2, kind: input, shape index: {}]
  %s3 = inlined_call_operand.hbm [shape: f32[384,768], index: 3, kind: output, shape index: {}]
  %s4 = sld [smem:[#allocation0]]
  $region57: #{_lambda_.1} parent=0
    _
  %s6 = ssub.s32 1, %s4
  %s7 = scalar_select 0, %s6, %s4
  $region1: #{_lambda_.1} parent=0
    #allocation2 [shape = 'u8[1179648]{0}', space=vmem, size = 0x120000, scoped, tag = 'input window, operand 0']
    #allocation3 [shape = 's32[2]{0}', space=sflag, size = 0x8, scoped, tag = 'scoped memory for _lambda_.1']
    #allocation4 [shape = 's32[2]{0}', space=sflag, size = 0x8, scoped, tag = 'scoped memory for _lambda_.1']
    #allocation5 [shape = 'u8[1179648]{0}', space=vmem, size = 0x120000, scoped, tag = 'input window, operand 1, single buffered']
    #allocation6 [shape = 's32[1]{0}', space=sflag, size = 0x4, scoped, tag = 'scoped memory for _lambda_.1']
    #allocation7 [shape = 'u8[3072]{0}', space=vmem, size = 0xc00, scoped, tag = 'input window, operand 2, single buffered']
    #allocation8 [shape = 'u8[1179648]{0}', space=vmem, size = 0x120000, scoped, tag = 'output window, operand 0']
    %8 = vsyncpa [#allocation3], 0
    %s9 = scalar_lea.sflag [#allocation3], 1
    %10 = vsyncpa %s9, 0
    %11 = vsyncpa [#allocation6], 0
    %12 = vsyncpa [#allocation4], 0
    %s13 = scalar_lea.sflag [#allocation4], 1
    %14 = vsyncpa %s13, 0
    loop: start=0, step=1, limit=4
    $region2: #{_lambda_.1} parent=1 // loop_pre_header
      _
    $region3: #{_lambda_.1} parent=1 // loop_header
      %s16 = sphi 0, %s20
      %p17 = scmp.ge.s32.totalorder %s16, 4
      %s26 = sphi 0, %s28
      %s29 = sphi 0, %s26
      %s30 = sphi 0, %s29
      %s46 = sphi 0, %s30
      %s50 = sphi 0, %s50
      %s52 = sphi 0, %s50
      %s53 = sphi 0, %s52
      %s67 = sphi 0, %s53
      %s71 = sphi 0, %s71
      %s73 = sphi 0, %s71
      %s74 = sphi 0, %s73
      %s88 = sphi 0, %s74
      %s94 = sphi 0, %s96
      %s97 = sphi 0, %s94
      %s98 = sphi 0, %s97
      %s114 = sphi 0, %s98
    $region4: #{_lambda_.1} parent=1 // loop_header_branch
      %19 = sbr.rel (%p17) target = $region8
    $region5: #{_lambda_.1} parent=1 // loop_body
      %s21 = ssub.s32 %s16, 1
      %s22 = ssub.s32 %s16, 2
      %s23 = sadd.s32 %s16, 1
      %s24 = ssub.s32 %s16, %s23
      %p25 = scmp.eq.s32.totalorder %s24, 0
      %s27 = sadd.s32 %s26, 1
      %s28 = scalar_select %p25, %s26, %s27
      %p31 = pneg %p25
      %p32 = scmp.eq.s32.totalorder %s16, 1
      %p33 = por %p31, %p32
      %p34 = scmp.ne.s32.totalorder %s26, %s29
      %p35 = scmp.eq.s32.totalorder %s16, 0
      %p36 = por %p34, %p35
      %p37 = scmp.ne.s32.totalorder %s26, %s29
      %p38 = scmp.eq.s32.totalorder %s21, 1
      %p39 = por %p37, %p38
      %p40 = scmp.ne.s32.totalorder %s29, %s30
      %p41 = scmp.eq.s32.totalorder %s21, 0
      %p42 = por %p40, %p41
      %p43 = scmp.ne.s32.totalorder %s29, %s30
      %p44 = scmp.eq.s32.totalorder %s22, 1
      %p45 = por %p43, %p44
      %p47 = scmp.ne.s32.totalorder %s30, %s46
      %p48 = scmp.eq.s32.totalorder %s22, 0
      %p49 = por %p47, %p48
      %s51 = sadd.s32 %s50, 1
      %p54 = scmp.eq.s32.totalorder %s16, 1
      %p55 = scmp.ne.s32.totalorder %s50, %s52
      %p56 = scmp.eq.s32.totalorder %s16, 0
      %p57 = por %p55, %p56
      %p58 = scmp.ne.s32.totalorder %s50, %s52
      %p59 = scmp.eq.s32.totalorder %s21, 1
      %p60 = por %p58, %p59
      %p61 = scmp.ne.s32.totalorder %s52, %s53
      %p62 = scmp.eq.s32.totalorder %s21, 0
      %p63 = por %p61, %p62
      %p64 = scmp.ne.s32.totalorder %s52, %s53
      %p65 = scmp.eq.s32.totalorder %s22, 1
      %p66 = por %p64, %p65
      %p68 = scmp.ne.s32.totalorder %s53, %s67
      %p69 = scmp.eq.s32.totalorder %s22, 0
      %p70 = por %p68, %p69
      %s72 = sadd.s32 %s71, 1
      %p75 = scmp.eq.s32.totalorder %s16, 1
      %p76 = scmp.ne.s32.totalorder %s71, %s73
      %p77 = scmp.eq.s32.totalorder %s16, 0
      %p78 = por %p76, %p77
      %p79 = scmp.ne.s32.totalorder %s71, %s73
      %p80 = scmp.eq.s32.totalorder %s21, 1
      %p81 = por %p79, %p80
      %p82 = scmp.ne.s32.totalorder %s73, %s74
      %p83 = scmp.eq.s32.totalorder %s21, 0
      %p84 = por %p82, %p83
      %p85 = scmp.ne.s32.totalorder %s73, %s74
      %p86 = scmp.eq.s32.totalorder %s22, 1
      %p87 = por %p85, %p86
      %p89 = scmp.ne.s32.totalorder %s74, %s88
      %p90 = scmp.eq.s32.totalorder %s22, 0
      %p91 = por %p89, %p90
      %s92 = ssub.s32 %s16, %s23
      %p93 = scmp.eq.s32.totalorder %s92, 0
      %s95 = sadd.s32 %s94, 1
      %s96 = scalar_select %p93, %s94, %s95
      %p99 = pneg %p93
      %p100 = scmp.eq.s32.totalorder %s16, 1
      %p101 = por %p99, %p100
      %p102 = scmp.ne.s32.totalorder %s94, %s97
      %p103 = scmp.eq.s32.totalorder %s16, 0
      %p104 = por %p102, %p103
      %p105 = scmp.ne.s32.totalorder %s94, %s97
      %p106 = scmp.eq.s32.totalorder %s21, 1
      %p107 = por %p105, %p106
      %p108 = scmp.ne.s32.totalorder %s97, %s98
      %p109 = scmp.eq.s32.totalorder %s21, 0
      %p110 = por %p108, %p109
      %p111 = scmp.ne.s32.totalorder %s97, %s98
      %p112 = scmp.eq.s32.totalorder %s22, 1
      %p113 = por %p111, %p112
      %p115 = scmp.ne.s32.totalorder %s98, %s114
      %p116 = scmp.eq.s32.totalorder %s22, 0
      %p117 = por %p115, %p116
      %p118 = scmp.le.s32.totalorder 1, %s16
      %p119 = scmp.lt.s32.totalorder %s16, 3
      %p120 = pnand %p118, %p119
      %p121 = pneg %p120
      // Predicated region
      $region9: #{_lambda_.1} parent=5 // pred_check
        _
      $region10: #{_lambda_.1} parent=5 // pred_check_branch
        %123 = sbr.rel (%p120) target = $region12
      $region11: #{_lambda_.1} parent=5 // pred_region
        %s124 = ssub.s32 %s16, 1
        // Predicated region
        $region13: #{_lambda_.1} parent=11 // pred_check
          %p125 = pneg %p63
        $region14: #{_lambda_.1} parent=11 // pred_check_branch
          %127 = sbr.rel (%p125) target = $region16
        $region15: #{_lambda_.1} parent=11 // pred_region
          %s129 = ssub.s32 36864, 36864
          %130 = vsyncadd [#allocation6], %s129
          %s131 = sshll.u32 [#allocation5], 4
          %s132 = int_to_ptr.vmem [resolvable:$true] %s131
          %137 = dma.hbm_to_vmem [thread:$0]  %s1, 36864, %s132, [#allocation6], 384, 384, 24
        $region16: #{_lambda_.1} parent=11 // pred_fallthru
          _
        // Predicated region
        $region17: #{_lambda_.1} parent=11 // pred_check
          %p138 = pneg %p84
        $region18: #{_lambda_.1} parent=11 // pred_check_branch
          %140 = sbr.rel (%p138) target = $region20
        $region19: #{_lambda_.1} parent=11 // pred_region
          %s142 = ssub.s32 96, 96
          %143 = vsyncadd [#allocation6], %s142
          %s145 = sshll.u32 [#allocation7], 4
          %s146 = int_to_ptr.vmem [resolvable:$true] %s145
          %148 = dma.hbm_to_vmem [thread:$0]  %s2, 96, %s146, [#allocation6]
        $region20: #{_lambda_.1} parent=11 // pred_fallthru
          _
      $region12: #{_lambda_.1} parent=5 // pred_fallthru
        _
      %p149 = scmp.lt.s32.totalorder %s16, 2
      // Predicated region
      $region21: #{_lambda_.1} parent=5 // pred_check
        %p150 = pneg %p149
      $region22: #{_lambda_.1} parent=5 // pred_check_branch
        %152 = sbr.rel (%p150) target = $region24
      $region23: #{_lambda_.1} parent=5 // pred_region
        // Predicated region
        $region25: #{_lambda_.1} parent=23 // pred_check
          %p153 = pneg %p36
        $region26: #{_lambda_.1} parent=23 // pred_check_branch
          %155 = sbr.rel (%p153) target = $region28
        $region27: #{_lambda_.1} parent=23 // pred_region
          %s156 = sand.u32 %s26, 1
          %s157 = scalar_lea.sflag [#allocation3], %s156
          %s158 = sand.u32 %s26, 1
          %s159 = smul.addr %s158, 1152
          %s160 = scalar_lea.vmem [#allocation2], %s159
          %s161 = smul.u32 24, %s16
          %s163 = ssub.s32 18432, 18432
          %164 = vsyncadd %s157, %s163
          %s165 = smul.addr %s161, 6
          %s166 = smul.addr %s165, 128
          %s167 = scalar_lea.hbm %s0, %s166
          %s168 = sshll.u32 %s160, 4
          %s169 = int_to_ptr.vmem [resolvable:$true] %s168
          %174 = dma.hbm_to_vmem [thread:$0]  %s167, 18432, %s169, %s157, 768, 768, 48
        $region28: #{_lambda_.1} parent=23 // pred_fallthru
          _
      $region24: #{_lambda_.1} parent=5 // pred_fallthru
        _
      %p175 = scmp.le.s32.totalorder 1, %s16
      %p176 = scmp.lt.s32.totalorder %s16, 3
      %p177 = pnand %p175, %p176
      %p178 = pneg %p177
      // Predicated region
      $region29: #{_lambda_.1} parent=5 // pred_check
        _
      $region30: #{_lambda_.1} parent=5 // pred_check_branch
        %180 = sbr.rel (%p177) target = $region32
      $region31: #{_lambda_.1} parent=5 // pred_region
        %s181 = ssub.s32 %s16, 1
        %s182 = sand.u32 %s29, 1
        %s183 = scalar_lea.sflag [#allocation3], %s182
        %s184 = sand.u32 %s29, 1
        %s185 = smul.addr %s184, 1152
        %s186 = scalar_lea.vmem [#allocation2], %s185
        // Predicated region
        $region33: #{_lambda_.1} parent=31 // pred_check
          %p187 = pneg %p42
        $region34: #{_lambda_.1} parent=31 // pred_check_branch
          %189 = sbr.rel (%p187) target = $region36
        $region35: #{_lambda_.1} parent=31 // pred_region
          %190 = dma.done %s183, 18432
        $region36: #{_lambda_.1} parent=31 // pred_fallthru
          _
        // Predicated region
        $region37: #{_lambda_.1} parent=31 // pred_check
          %p191 = pneg %p63
        $region38: #{_lambda_.1} parent=31 // pred_check_branch
          %193 = sbr.rel (%p191) target = $region40
        $region39: #{_lambda_.1} parent=31 // pred_region
          %194 = dma.done [#allocation6], 36864
        $region40: #{_lambda_.1} parent=31 // pred_fallthru
          _
        // Predicated region
        $region41: #{_lambda_.1} parent=31 // pred_check
          %p195 = pneg %p84
        $region42: #{_lambda_.1} parent=31 // pred_check_branch
          %197 = sbr.rel (%p195) target = $region44
        $region43: #{_lambda_.1} parent=31 // pred_region
          %198 = dma.done [#allocation6], 96
        $region44: #{_lambda_.1} parent=31 // pred_fallthru
          _
        %s199 = sand.u32 %s29, 1
        %s200 = scalar_lea.sflag [#allocation3], %s199
        %s201 = sand.u32 %s29, 1
        %s202 = smul.addr %s201, 1152
        %s203 = scalar_lea.vmem [#allocation2], %s202
        %p204 = pneg %p42
        %p205 = pneg %p39
        %p206 = pneg %p63
        %p207 = pneg %p60
        %p208 = pneg %p84
        %p209 = pneg %p81
        %p210 = pneg %p110
        %p211 = pneg %p107
        %s212 = sand.u32 %s97, 1
        %s213 = scalar_lea.sflag [#allocation4], %s212
        %s214 = sand.u32 %s97, 1
        %s215 = smul.addr %s214, 1152
        %s216 = scalar_lea.vmem [#allocation8], %s215
        %s217 = smul.u32 24, %s21
        %s218 = smul.u32 24, %s21
        %v219 = vld [vmem:[%s186] sm:$0xff]
        %v220 = vld [vmem:[%s186 + $0x8] sm:$0xff]
        %v221 = vld [vmem:[%s186 + $0x10] sm:$0xff]
        %v222 = vld [vmem:[%s186 + $0x18] sm:$0xff]
        %v223 = vld [vmem:[%s186 + $0x20] sm:$0xff]
        %v224 = vld [vmem:[%s186 + $0x28] sm:$0xff]
        %v225 = vld [vmem:[%s186 + $0x30] sm:$0xff]
        %v226 = vld [vmem:[%s186 + $0x38] sm:$0xff]
        %v227 = vld [vmem:[%s186 + $0x40] sm:$0xff]
        %v228 = vld [vmem:[%s186 + $0x48] sm:$0xff]
        %v229 = vld [vmem:[%s186 + $0x50] sm:$0xff]
        %v230 = vld [vmem:[%s186 + $0x58] sm:$0xff]
        %v231 = vld [vmem:[%s186 + $0x60] sm:$0xff]
        %v232 = vld [vmem:[%s186 + $0x68] sm:$0xff]
        %v233 = vld [vmem:[%s186 + $0x70] sm:$0xff]
        %v234 = vld [vmem:[%s186 + $0x78] sm:$0xff]
        %v235 = vld [vmem:[%s186 + $0x80] sm:$0xff]
        %v236 = vld [vmem:[%s186 + $0x88] sm:$0xff]
        %v237 = vld [vmem:[%s186 + $0x90] sm:$0xff]
        %v238 = vld [vmem:[%s186 + $0x98] sm:$0xff]
        %v239 = vld [vmem:[%s186 + $0xa0] sm:$0xff]
        %v240 = vld [vmem:[%s186 + $0xa8] sm:$0xff]
        %v241 = vld [vmem:[%s186 + $0xb0] sm:$0xff]
        %v242 = vld [vmem:[%s186 + $0xb8] sm:$0xff]
        %v243 = vld [vmem:[%s186 + $0xc0] sm:$0xff]
        %v244 = vld [vmem:[%s186 + $0xc8] sm:$0xff]
        %v245 = vld [vmem:[%s186 + $0xd0] sm:$0xff]
        %v246 = vld [vmem:[%s186 + $0xd8] sm:$0xff]
        %v247 = vld [vmem:[%s186 + $0xe0] sm:$0xff]
        %v248 = vld [vmem:[%s186 + $0xe8] sm:$0xff]
        %v249 = vld [vmem:[%s186 + $0xf0] sm:$0xff]
        %v250 = vld [vmem:[%s186 + $0xf8] sm:$0xff]
        %v251 = vld [vmem:[%s186 + $0x100] sm:$0xff]
        %v252 = vld [vmem:[%s186 + $0x108] sm:$0xff]
        %v253 = vld [vmem:[%s186 + $0x110] sm:$0xff]
        %v254 = vld [vmem:[%s186 + $0x118] sm:$0xff]
        %v255 = vld [vmem:[%s186 + $0x120] sm:$0xff]
        %v256 = vld [vmem:[%s186 + $0x128] sm:$0xff]
        %v257 = vld [vmem:[%s186 + $0x130] sm:$0xff]
        %v258 = vld [vmem:[%s186 + $0x138] sm:$0xff]
        %v259 = vld [vmem:[%s186 + $0x140] sm:$0xff]
        %v260 = vld [vmem:[%s186 + $0x148] sm:$0xff]
        %v261 = vld [vmem:[%s186 + $0x150] sm:$0xff]
        %v262 = vld [vmem:[%s186 + $0x158] sm:$0xff]
        %v263 = vld [vmem:[%s186 + $0x160] sm:$0xff]
        %v264 = vld [vmem:[%s186 + $0x168] sm:$0xff]
        %v265 = vld [vmem:[%s186 + $0x170] sm:$0xff]
        %v266 = vld [vmem:[%s186 + $0x178] sm:$0xff]
        %v267 = vld [vmem:[%s186 + $0x180] sm:$0xff]
        %v268 = vld [vmem:[%s186 + $0x188] sm:$0xff]
        %v269 = vld [vmem:[%s186 + $0x190] sm:$0xff]
        %v270 = vld [vmem:[%s186 + $0x198] sm:$0xff]
        %v271 = vld [vmem:[%s186 + $0x1a0] sm:$0xff]
        %v272 = vld [vmem:[%s186 + $0x1a8] sm:$0xff]
        %v273 = vld [vmem:[%s186 + $0x1b0] sm:$0xff]
        %v274 = vld [vmem:[%s186 + $0x1b8] sm:$0xff]
        %v275 = vld [vmem:[%s186 + $0x1c0] sm:$0xff]
        %v276 = vld [vmem:[%s186 + $0x1c8] sm:$0xff]
        %v277 = vld [vmem:[%s186 + $0x1d0] sm:$0xff]
        %v278 = vld [vmem:[%s186 + $0x1d8] sm:$0xff]
        %v279 = vld [vmem:[%s186 + $0x1e0] sm:$0xff]
        %v280 = vld [vmem:[%s186 + $0x1e8] sm:$0xff]
        %v281 = vld [vmem:[%s186 + $0x1f0] sm:$0xff]
        %v282 = vld [vmem:[%s186 + $0x1f8] sm:$0xff]
        %v283 = vld [vmem:[%s186 + $0x200] sm:$0xff]
        %v284 = vld [vmem:[%s186 + $0x208] sm:$0xff]
        %v285 = vld [vmem:[%s186 + $0x210] sm:$0xff]
        %v286 = vld [vmem:[%s186 + $0x218] sm:$0xff]
        %v287 = vld [vmem:[%s186 + $0x220] sm:$0xff]
        %v288 = vld [vmem:[%s186 + $0x228] sm:$0xff]
        %v289 = vld [vmem:[%s186 + $0x230] sm:$0xff]
        %v290 = vld [vmem:[%s186 + $0x238] sm:$0xff]
        %v291 = vld [vmem:[%s186 + $0x240] sm:$0xff]
        %v292 = vld [vmem:[%s186 + $0x248] sm:$0xff]
        %v293 = vld [vmem:[%s186 + $0x250] sm:$0xff]
        %v294 = vld [vmem:[%s186 + $0x258] sm:$0xff]
        %v295 = vld [vmem:[%s186 + $0x260] sm:$0xff]
        %v296 = vld [vmem:[%s186 + $0x268] sm:$0xff]
        %v297 = vld [vmem:[%s186 + $0x270] sm:$0xff]
        %v298 = vld [vmem:[%s186 + $0x278] sm:$0xff]
        %v299 = vld [vmem:[%s186 + $0x280] sm:$0xff]
        %v300 = vld [vmem:[%s186 + $0x288] sm:$0xff]
        %v301 = vld [vmem:[%s186 + $0x290] sm:$0xff]
        %v302 = vld [vmem:[%s186 + $0x298] sm:$0xff]
        %v303 = vld [vmem:[%s186 + $0x2a0] sm:$0xff]
        %v304 = vld [vmem:[%s186 + $0x2a8] sm:$0xff]
        %v305 = vld [vmem:[%s186 + $0x2b0] sm:$0xff]
        %v306 = vld [vmem:[%s186 + $0x2b8] sm:$0xff]
        %v307 = vld [vmem:[%s186 + $0x2c0] sm:$0xff]
        %v308 = vld [vmem:[%s186 + $0x2c8] sm:$0xff]
        %v309 = vld [vmem:[%s186 + $0x2d0] sm:$0xff]
        %v310 = vld [vmem:[%s186 + $0x2d8] sm:$0xff]
        %v311 = vld [vmem:[%s186 + $0x2e0] sm:$0xff]
        %v312 = vld [vmem:[%s186 + $0x2e8] sm:$0xff]
        %v313 = vld [vmem:[%s186 + $0x2f0] sm:$0xff]
        %v314 = vld [vmem:[%s186 + $0x2f8] sm:$0xff]
        %v315 = vld [vmem:[%s186 + $0x300] sm:$0xff]
        %v316 = vld [vmem:[%s186 + $0x308] sm:$0xff]
        %v317 = vld [vmem:[%s186 + $0x310] sm:$0xff]
        %v318 = vld [vmem:[%s186 + $0x318] sm:$0xff]
        %v319 = vld [vmem:[%s186 + $0x320] sm:$0xff]
        %v320 = vld [vmem:[%s186 + $0x328] sm:$0xff]
        %v321 = vld [vmem:[%s186 + $0x330] sm:$0xff]
        %v322 = vld [vmem:[%s186 + $0x338] sm:$0xff]
        %v323 = vld [vmem:[%s186 + $0x340] sm:$0xff]
        %v324 = vld [vmem:[%s186 + $0x348] sm:$0xff]
        %v325 = vld [vmem:[%s186 + $0x350] sm:$0xff]
        %v326 = vld [vmem:[%s186 + $0x358] sm:$0xff]
        %v327 = vld [vmem:[%s186 + $0x360] sm:$0xff]
        %v328 = vld [vmem:[%s186 + $0x368] sm:$0xff]
        %v329 = vld [vmem:[%s186 + $0x370] sm:$0xff]
        %v330 = vld [vmem:[%s186 + $0x378] sm:$0xff]
        %v331 = vld [vmem:[%s186 + $0x380] sm:$0xff]
        %v332 = vld [vmem:[%s186 + $0x388] sm:$0xff]
        %v333 = vld [vmem:[%s186 + $0x390] sm:$0xff]
        %v334 = vld [vmem:[%s186 + $0x398] sm:$0xff]
        %v335 = vld [vmem:[%s186 + $0x3a0] sm:$0xff]
        %v336 = vld [vmem:[%s186 + $0x3a8] sm:$0xff]
        %v337 = vld [vmem:[%s186 + $0x3b0] sm:$0xff]
        %v338 = vld [vmem:[%s186 + $0x3b8] sm:$0xff]
        %v339 = vld [vmem:[%s186 + $0x3c0] sm:$0xff]
        %v340 = vld [vmem:[%s186 + $0x3c8] sm:$0xff]
        %v341 = vld [vmem:[%s186 + $0x3d0] sm:$0xff]
        %v342 = vld [vmem:[%s186 + $0x3d8] sm:$0xff]
        %v343 = vld [vmem:[%s186 + $0x3e0] sm:$0xff]
        %v344 = vld [vmem:[%s186 + $0x3e8] sm:$0xff]
        %v345 = vld [vmem:[%s186 + $0x3f0] sm:$0xff]
        %v346 = vld [vmem:[%s186 + $0x3f8] sm:$0xff]
        %v347 = vld [vmem:[%s186 + $0x400] sm:$0xff]
        %v348 = vld [vmem:[%s186 + $0x408] sm:$0xff]
        %v349 = vld [vmem:[%s186 + $0x410] sm:$0xff]
        %v350 = vld [vmem:[%s186 + $0x418] sm:$0xff]
        %v351 = vld [vmem:[%s186 + $0x420] sm:$0xff]
        %v352 = vld [vmem:[%s186 + $0x428] sm:$0xff]
        %v353 = vld [vmem:[%s186 + $0x430] sm:$0xff]
        %v354 = vld [vmem:[%s186 + $0x438] sm:$0xff]
        %v355 = vld [vmem:[%s186 + $0x440] sm:$0xff]
        %v356 = vld [vmem:[%s186 + $0x448] sm:$0xff]
        %v357 = vld [vmem:[%s186 + $0x450] sm:$0xff]
        %v358 = vld [vmem:[%s186 + $0x458] sm:$0xff]
        %v359 = vld [vmem:[%s186 + $0x460] sm:$0xff]
        %v360 = vld [vmem:[%s186 + $0x468] sm:$0xff]
        %v361 = vld [vmem:[%s186 + $0x470] sm:$0xff]
        %v362 = vld [vmem:[%s186 + $0x478] sm:$0xff]
        %v363 = vpack.c.bf16 %v225, %v219
        %v364 = vpack.c.bf16 %v226, %v220
        %v365 = vpack.c.bf16 %v227, %v221
        %v366 = vpack.c.bf16 %v228, %v222
        %v367 = vpack.c.bf16 %v229, %v223
        %v368 = vpack.c.bf16 %v230, %v224
        %v369 = vpack.c.bf16 %v237, %v231
        %v370 = vpack.c.bf16 %v238, %v232
        %v371 = vpack.c.bf16 %v239, %v233
        %v372 = vpack.c.bf16 %v240, %v234
        %v373 = vpack.c.bf16 %v241, %v235
        %v374 = vpack.c.bf16 %v242, %v236
        %v375 = vpack.c.bf16 %v249, %v243
        %v376 = vpack.c.bf16 %v250, %v244
        %v377 = vpack.c.bf16 %v251, %v245
        %v378 = vpack.c.bf16 %v252, %v246
        %v379 = vpack.c.bf16 %v253, %v247
        %v380 = vpack.c.bf16 %v254, %v248
        %v381 = vpack.c.bf16 %v261, %v255
        %v382 = vpack.c.bf16 %v262, %v256
        %v383 = vpack.c.bf16 %v263, %v257
        %v384 = vpack.c.bf16 %v264, %v258
        %v385 = vpack.c.bf16 %v265, %v259
        %v386 = vpack.c.bf16 %v266, %v260
        %v387 = vpack.c.bf16 %v273, %v267
        %v388 = vpack.c.bf16 %v274, %v268
        %v389 = vpack.c.bf16 %v275, %v269
        %v390 = vpack.c.bf16 %v276, %v270
        %v391 = vpack.c.bf16 %v277, %v271
        %v392 = vpack.c.bf16 %v278, %v272
        %v393 = vpack.c.bf16 %v285, %v279
        %v394 = vpack.c.bf16 %v286, %v280
        %v395 = vpack.c.bf16 %v287, %v281
        %v396 = vpack.c.bf16 %v288, %v282
        %v397 = vpack.c.bf16 %v289, %v283
        %v398 = vpack.c.bf16 %v290, %v284
        %v399 = vpack.c.bf16 %v297, %v291
        %v400 = vpack.c.bf16 %v298, %v292
        %v401 = vpack.c.bf16 %v299, %v293
        %v402 = vpack.c.bf16 %v300, %v294
        %v403 = vpack.c.bf16 %v301, %v295
        %v404 = vpack.c.bf16 %v302, %v296
        %v405 = vpack.c.bf16 %v309, %v303
        %v406 = vpack.c.bf16 %v310, %v304
        %v407 = vpack.c.bf16 %v311, %v305
        %v408 = vpack.c.bf16 %v312, %v306
        %v409 = vpack.c.bf16 %v313, %v307
        %v410 = vpack.c.bf16 %v314, %v308
        %v411 = vpack.c.bf16 %v321, %v315
        %v412 = vpack.c.bf16 %v322, %v316
        %v413 = vpack.c.bf16 %v323, %v317
        %v414 = vpack.c.bf16 %v324, %v318
        %v415 = vpack.c.bf16 %v325, %v319
        %v416 = vpack.c.bf16 %v326, %v320
        %v417 = vpack.c.bf16 %v333, %v327
        %v418 = vpack.c.bf16 %v334, %v328
        %v419 = vpack.c.bf16 %v335, %v329
        %v420 = vpack.c.bf16 %v336, %v330
        %v421 = vpack.c.bf16 %v337, %v331
        %v422 = vpack.c.bf16 %v338, %v332
        %v423 = vpack.c.bf16 %v345, %v339
        %v424 = vpack.c.bf16 %v346, %v340
        %v425 = vpack.c.bf16 %v347, %v341
        %v426 = vpack.c.bf16 %v348, %v342
        %v427 = vpack.c.bf16 %v349, %v343
        %v428 = vpack.c.bf16 %v350, %v344
        %v429 = vpack.c.bf16 %v357, %v351
        %v430 = vpack.c.bf16 %v358, %v352
        %v431 = vpack.c.bf16 %v359, %v353
        %v432 = vpack.c.bf16 %v360, %v354
        %v433 = vpack.c.bf16 %v361, %v355
        %v434 = vpack.c.bf16 %v362, %v356
        %v435 = vld [vmem:[#allocation5] sm:$0xff]
        %v436 = vld [vmem:[#allocation5 + $0x8] sm:$0xff]
        %v437 = vld [vmem:[#allocation5 + $0x10] sm:$0xff]
        %v438 = vld [vmem:[#allocation5 + $0x18] sm:$0xff]
        %v439 = vld [vmem:[#allocation5 + $0x20] sm:$0xff]
        %v440 = vld [vmem:[#allocation5 + $0x28] sm:$0xff]
        %v441 = vld [vmem:[#allocation5 + $0x30] sm:$0xff]
        %v442 = vld [vmem:[#allocation5 + $0x38] sm:$0xff]
        %v443 = vld [vmem:[#allocation5 + $0x40] sm:$0xff]
        %v444 = vld [vmem:[#allocation5 + $0x48] sm:$0xff]
        %v445 = vld [vmem:[#allocation5 + $0x50] sm:$0xff]
        %v446 = vld [vmem:[#allocation5 + $0x58] sm:$0xff]
        %v447 = vld [vmem:[#allocation5 + $0x60] sm:$0xff]
        %v448 = vld [vmem:[#allocation5 + $0x68] sm:$0xff]
        %v449 = vld [vmem:[#allocation5 + $0x70] sm:$0xff]
        %v450 = vld [vmem:[#allocation5 + $0x78] sm:$0xff]
        %v451 = vld [vmem:[#allocation5 + $0x80] sm:$0xff]
        %v452 = vld [vmem:[#allocation5 + $0x88] sm:$0xff]
        %v453 = vld [vmem:[#allocation5 + $0x90] sm:$0xff]
        %v454 = vld [vmem:[#allocation5 + $0x98] sm:$0xff]
        %v455 = vld [vmem:[#allocation5 + $0xa0] sm:$0xff]
        %v456 = vld [vmem:[#allocation5 + $0xa8] sm:$0xff]
        %v457 = vld [vmem:[#allocation5 + $0xb0] sm:$0xff]
        %v458 = vld [vmem:[#allocation5 + $0xb8] sm:$0xff]
        %v459 = vld [vmem:[#allocation5 + $0xc0] sm:$0xff]
        %v460 = vld [vmem:[#allocation5 + $0xc8] sm:$0xff]
        %v461 = vld [vmem:[#allocation5 + $0xd0] sm:$0xff]
        %v462 = vld [vmem:[#allocation5 + $0xd8] sm:$0xff]
        %v463 = vld [vmem:[#allocation5 + $0xe0] sm:$0xff]
        %v464 = vld [vmem:[#allocation5 + $0xe8] sm:$0xff]
        %v465 = vld [vmem:[#allocation5 + $0xf0] sm:$0xff]
        %v466 = vld [vmem:[#allocation5 + $0xf8] sm:$0xff]
        %v467 = vld [vmem:[#allocation5 + $0x100] sm:$0xff]
        %v468 = vld [vmem:[#allocation5 + $0x108] sm:$0xff]
        %v469 = vld [vmem:[#allocation5 + $0x110] sm:$0xff]
        %v470 = vld [vmem:[#allocation5 + $0x118] sm:$0xff]
        %v471 = vld [vmem:[#allocation5 + $0x120] sm:$0xff]
        %v472 = vld [vmem:[#allocation5 + $0x128] sm:$0xff]
        %v473 = vld [vmem:[#allocation5 + $0x130] sm:$0xff]
        %v474 = vld [vmem:[#allocation5 + $0x138] sm:$0xff]
        %v475 = vld [vmem:[#allocation5 + $0x140] sm:$0xff]
        %v476 = vld [vmem:[#allocation5 + $0x148] sm:$0xff]
        %v477 = vld [vmem:[#allocation5 + $0x150] sm:$0xff]
        %v478 = vld [vmem:[#allocation5 + $0x158] sm:$0xff]
        %v479 = vld [vmem:[#allocation5 + $0x160] sm:$0xff]
        %v480 = vld [vmem:[#allocation5 + $0x168] sm:$0xff]
        %v481 = vld [vmem:[#allocation5 + $0x170] sm:$0xff]
        %v482 = vld [vmem:[#allocation5 + $0x178] sm:$0xff]
        %v483 = vld [vmem:[#allocation5 + $0x180] sm:$0xff]
        %v484 = vld [vmem:[#allocation5 + $0x188] sm:$0xff]
        %v485 = vld [vmem:[#allocation5 + $0x190] sm:$0xff]
        %v486 = vld [vmem:[#allocation5 + $0x198] sm:$0xff]
        %v487 = vld [vmem:[#allocation5 + $0x1a0] sm:$0xff]
        %v488 = vld [vmem:[#allocation5 + $0x1a8] sm:$0xff]
        %v489 = vld [vmem:[#allocation5 + $0x1b0] sm:$0xff]
        %v490 = vld [vmem:[#allocation5 + $0x1b8] sm:$0xff]
        %v491 = vld [vmem:[#allocation5 + $0x1c0] sm:$0xff]
        %v492 = vld [vmem:[#allocation5 + $0x1c8] sm:$0xff]
        %v493 = vld [vmem:[#allocation5 + $0x1d0] sm:$0xff]
        %v494 = vld [vmem:[#allocation5 + $0x1d8] sm:$0xff]
        %v495 = vld [vmem:[#allocation5 + $0x1e0] sm:$0xff]
        %v496 = vld [vmem:[#allocation5 + $0x1e8] sm:$0xff]
        %v497 = vld [vmem:[#allocation5 + $0x1f0] sm:$0xff]
        %v498 = vld [vmem:[#allocation5 + $0x1f8] sm:$0xff]
        %v499 = vld [vmem:[#allocation5 + $0x200] sm:$0xff]
        %v500 = vld [vmem:[#allocation5 + $0x208] sm:$0xff]
        %v501 = vld [vmem:[#allocation5 + $0x210] sm:$0xff]
        %v502 = vld [vmem:[#allocation5 + $0x218] sm:$0xff]
        %v503 = vld [vmem:[#allocation5 + $0x220] sm:$0xff]
        %v504 = vld [vmem:[#allocation5 + $0x228] sm:$0xff]
        %v505 = vld [vmem:[#allocation5 + $0x230] sm:$0xff]
        %v506 = vld [vmem:[#allocation5 + $0x238] sm:$0xff]
        %v507 = vld [vmem:[#allocation5 + $0x240] sm:$0xff]
        %v508 = vld [vmem:[#allocation5 + $0x248] sm:$0xff]
        %v509 = vld [vmem:[#allocation5 + $0x250] sm:$0xff]
        %v510 = vld [vmem:[#allocation5 + $0x258] sm:$0xff]
        %v511 = vld [vmem:[#allocation5 + $0x260] sm:$0xff]
        %v512 = vld [vmem:[#allocation5 + $0x268] sm:$0xff]
        %v513 = vld [vmem:[#allocation5 + $0x270] sm:$0xff]
        %v514 = vld [vmem:[#allocation5 + $0x278] sm:$0xff]
        %v515 = vld [vmem:[#allocation5 + $0x280] sm:$0xff]
        %v516 = vld [vmem:[#allocation5 + $0x288] sm:$0xff]
        %v517 = vld [vmem:[#allocation5 + $0x290] sm:$0xff]
        %v518 = vld [vmem:[#allocation5 + $0x298] sm:$0xff]
        %v519 = vld [vmem:[#allocation5 + $0x2a0] sm:$0xff]
        %v520 = vld [vmem:[#allocation5 + $0x2a8] sm:$0xff]
        %v521 = vld [vmem:[#allocation5 + $0x2b0] sm:$0xff]
        %v522 = vld [vmem:[#allocation5 + $0x2b8] sm:$0xff]
        %v523 = vld [vmem:[#allocation5 + $0x2c0] sm:$0xff]
        %v524 = vld [vmem:[#allocation5 + $0x2c8] sm:$0xff]
        %v525 = vld [vmem:[#allocation5 + $0x2d0] sm:$0xff]
        %v526 = vld [vmem:[#allocation5 + $0x2d8] sm:$0xff]
        %v527 = vld [vmem:[#allocation5 + $0x2e0] sm:$0xff]
        %v528 = vld [vmem:[#allocation5 + $0x2e8] sm:$0xff]
        %v529 = vld [vmem:[#allocation5 + $0x2f0] sm:$0xff]
        %v530 = vld [vmem:[#allocation5 + $0x2f8] sm:$0xff]
        %v531 = vld [vmem:[#allocation5 + $0x300] sm:$0xff]
        %v532 = vld [vmem:[#allocation5 + $0x308] sm:$0xff]
        %v533 = vld [vmem:[#allocation5 + $0x310] sm:$0xff]
        %v534 = vld [vmem:[#allocation5 + $0x318] sm:$0xff]
        %v535 = vld [vmem:[#allocation5 + $0x320] sm:$0xff]
        %v536 = vld [vmem:[#allocation5 + $0x328] sm:$0xff]
        %v537 = vld [vmem:[#allocation5 + $0x330] sm:$0xff]
        %v538 = vld [vmem:[#allocation5 + $0x338] sm:$0xff]
        %v539 = vld [vmem:[#allocation5 + $0x340] sm:$0xff]
        %v540 = vld [vmem:[#allocation5 + $0x348] sm:$0xff]
        %v541 = vld [vmem:[#allocation5 + $0x350] sm:$0xff]
        %v542 = vld [vmem:[#allocation5 + $0x358] sm:$0xff]
        %v543 = vld [vmem:[#allocation5 + $0x360] sm:$0xff]
        %v544 = vld [vmem:[#allocation5 + $0x368] sm:$0xff]
        %v545 = vld [vmem:[#allocation5 + $0x370] sm:$0xff]
        %v546 = vld [vmem:[#allocation5 + $0x378] sm:$0xff]
        %v547 = vld [vmem:[#allocation5 + $0x380] sm:$0xff]
        %v548 = vld [vmem:[#allocation5 + $0x388] sm:$0xff]
        %v549 = vld [vmem:[#allocation5 + $0x390] sm:$0xff]
        %v550 = vld [vmem:[#allocation5 + $0x398] sm:$0xff]
        %v551 = vld [vmem:[#allocation5 + $0x3a0] sm:$0xff]
        %v552 = vld [vmem:[#allocation5 + $0x3a8] sm:$0xff]
        %v553 = vld [vmem:[#allocation5 + $0x3b0] sm:$0xff]
        %v554 = vld [vmem:[#allocation5 + $0x3b8] sm:$0xff]
        %v555 = vld [vmem:[#allocation5 + $0x3c0] sm:$0xff]
        %v556 = vld [vmem:[#allocation5 + $0x3c8] sm:$0xff]
        %v557 = vld [vmem:[#allocation5 + $0x3d0] sm:$0xff]
        %v558 = vld [vmem:[#allocation5 + $0x3d8] sm:$0xff]
        %v559 = vld [vmem:[#allocation5 + $0x3e0] sm:$0xff]
        %v560 = vld [vmem:[#allocation5 + $0x3e8] sm:$0xff]
        %v561 = vld [vmem:[#allocation5 + $0x3f0] sm:$0xff]
        %v562 = vld [vmem:[#allocation5 + $0x3f8] sm:$0xff]
        %v563 = vld [vmem:[#allocation5 + $0x400] sm:$0xff]
        %v564 = vld [vmem:[#allocation5 + $0x408] sm:$0xff]
        %v565 = vld [vmem:[#allocation5 + $0x410] sm:$0xff]
        %v566 = vld [vmem:[#allocation5 + $0x418] sm:$0xff]
        %v567 = vld [vmem:[#allocation5 + $0x420] sm:$0xff]
        %v568 = vld [vmem:[#allocation5 + $0x428] sm:$0xff]
        %v569 = vld [vmem:[#allocation5 + $0x430] sm:$0xff]
        %v570 = vld [vmem:[#allocation5 + $0x438] sm:$0xff]
        %v571 = vld [vmem:[#allocation5 + $0x440] sm:$0xff]
        %v572 = vld [vmem:[#allocation5 + $0x448] sm:$0xff]
        %v573 = vld [vmem:[#allocation5 + $0x450] sm:$0xff]
        %v574 = vld [vmem:[#allocation5 + $0x458] sm:$0xff]
        %v575 = vld [vmem:[#allocation5 + $0x460] sm:$0xff]
        %v576 = vld [vmem:[#allocation5 + $0x468] sm:$0xff]
        %v577 = vld [vmem:[#allocation5 + $0x470] sm:$0xff]
        %v578 = vld [vmem:[#allocation5 + $0x478] sm:$0xff]
        %v579 = vld [vmem:[#allocation5 + $0x480] sm:$0xff]
        %v580 = vld [vmem:[#allocation5 + $0x488] sm:$0xff]
        %v581 = vld [vmem:[#allocation5 + $0x490] sm:$0xff]
        %v582 = vld [vmem:[#allocation5 + $0x498] sm:$0xff]
        %v583 = vld [vmem:[#allocation5 + $0x4a0] sm:$0xff]
        %v584 = vld [vmem:[#allocation5 + $0x4a8] sm:$0xff]
        %v585 = vld [vmem:[#allocation5 + $0x4b0] sm:$0xff]
        %v586 = vld [vmem:[#allocation5 + $0x4b8] sm:$0xff]
        %v587 = vld [vmem:[#allocation5 + $0x4c0] sm:$0xff]
        %v588 = vld [vmem:[#allocation5 + $0x4c8] sm:$0xff]
        %v589 = vld [vmem:[#allocation5 + $0x4d0] sm:$0xff]
        %v590 = vld [vmem:[#allocation5 + $0x4d8] sm:$0xff]
        %v591 = vld [vmem:[#allocation5 + $0x4e0] sm:$0xff]
        %v592 = vld [vmem:[#allocation5 + $0x4e8] sm:$0xff]
        %v593 = vld [vmem:[#allocation5 + $0x4f0] sm:$0xff]
        %v594 = vld [vmem:[#allocation5 + $0x4f8] sm:$0xff]
        %v595 = vld [vmem:[#allocation5 + $0x500] sm:$0xff]
        %v596 = vld [vmem:[#allocation5 + $0x508] sm:$0xff]
        %v597 = vld [vmem:[#allocation5 + $0x510] sm:$0xff]
        %v598 = vld [vmem:[#allocation5 + $0x518] sm:$0xff]
        %v599 = vld [vmem:[#allocation5 + $0x520] sm:$0xff]
        %v600 = vld [vmem:[#allocation5 + $0x528] sm:$0xff]
        %v601 = vld [vmem:[#allocation5 + $0x530] sm:$0xff]
        %v602 = vld [vmem:[#allocation5 + $0x538] sm:$0xff]
        %v603 = vld [vmem:[#allocation5 + $0x540] sm:$0xff]
        %v604 = vld [vmem:[#allocation5 + $0x548] sm:$0xff]
        %v605 = vld [vmem:[#allocation5 + $0x550] sm:$0xff]
        %v606 = vld [vmem:[#allocation5 + $0x558] sm:$0xff]
        %v607 = vld [vmem:[#allocation5 + $0x560] sm:$0xff]
        %v608 = vld [vmem:[#allocation5 + $0x568] sm:$0xff]
        %v609 = vld [vmem:[#allocation5 + $0x570] sm:$0xff]
        %v610 = vld [vmem:[#allocation5 + $0x578] sm:$0xff]
        %v611 = vld [vmem:[#allocation5 + $0x580] sm:$0xff]
        %v612 = vld [vmem:[#allocation5 + $0x588] sm:$0xff]
        %v613 = vld [vmem:[#allocation5 + $0x590] sm:$0xff]
        %v614 = vld [vmem:[#allocation5 + $0x598] sm:$0xff]
        %v615 = vld [vmem:[#allocation5 + $0x5a0] sm:$0xff]
        %v616 = vld [vmem:[#allocation5 + $0x5a8] sm:$0xff]
        %v617 = vld [vmem:[#allocation5 + $0x5b0] sm:$0xff]
        %v618 = vld [vmem:[#allocation5 + $0x5b8] sm:$0xff]
        %v619 = vld [vmem:[#allocation5 + $0x5c0] sm:$0xff]
        %v620 = vld [vmem:[#allocation5 + $0x5c8] sm:$0xff]
        %v621 = vld [vmem:[#allocation5 + $0x5d0] sm:$0xff]
        %v622 = vld [vmem:[#allocation5 + $0x5d8] sm:$0xff]
        %v623 = vld [vmem:[#allocation5 + $0x5e0] sm:$0xff]
        %v624 = vld [vmem:[#allocation5 + $0x5e8] sm:$0xff]
        %v625 = vld [vmem:[#allocation5 + $0x5f0] sm:$0xff]
        %v626 = vld [vmem:[#allocation5 + $0x5f8] sm:$0xff]
        %v627 = vld [vmem:[#allocation5 + $0x600] sm:$0xff]
        %v628 = vld [vmem:[#allocation5 + $0x608] sm:$0xff]
        %v629 = vld [vmem:[#allocation5 + $0x610] sm:$0xff]
        %v630 = vld [vmem:[#allocation5 + $0x618] sm:$0xff]
        %v631 = vld [vmem:[#allocation5 + $0x620] sm:$0xff]
        %v632 = vld [vmem:[#allocation5 + $0x628] sm:$0xff]
        %v633 = vld [vmem:[#allocation5 + $0x630] sm:$0xff]
        %v634 = vld [vmem:[#allocation5 + $0x638] sm:$0xff]
        %v635 = vld [vmem:[#allocation5 + $0x640] sm:$0xff]
        %v636 = vld [vmem:[#allocation5 + $0x648] sm:$0xff]
        %v637 = vld [vmem:[#allocation5 + $0x650] sm:$0xff]
        %v638 = vld [vmem:[#allocation5 + $0x658] sm:$0xff]
        %v639 = vld [vmem:[#allocation5 + $0x660] sm:$0xff]
        %v640 = vld [vmem:[#allocation5 + $0x668] sm:$0xff]
        %v641 = vld [vmem:[#allocation5 + $0x670] sm:$0xff]
        %v642 = vld [vmem:[#allocation5 + $0x678] sm:$0xff]
        %v643 = vld [vmem:[#allocation5 + $0x680] sm:$0xff]
        %v644 = vld [vmem:[#allocation5 + $0x688] sm:$0xff]
        %v645 = vld [vmem:[#allocation5 + $0x690] sm:$0xff]
        %v646 = vld [vmem:[#allocation5 + $0x698] sm:$0xff]
        %v647 = vld [vmem:[#allocation5 + $0x6a0] sm:$0xff]
        %v648 = vld [vmem:[#allocation5 + $0x6a8] sm:$0xff]
        %v649 = vld [vmem:[#allocation5 + $0x6b0] sm:$0xff]
        %v650 = vld [vmem:[#allocation5 + $0x6b8] sm:$0xff]
        %v651 = vld [vmem:[#allocation5 + $0x6c0] sm:$0xff]
        %v652 = vld [vmem:[#allocation5 + $0x6c8] sm:$0xff]
        %v653 = vld [vmem:[#allocation5 + $0x6d0] sm:$0xff]
        %v654 = vld [vmem:[#allocation5 + $0x6d8] sm:$0xff]
        %v655 = vld [vmem:[#allocation5 + $0x6e0] sm:$0xff]
        %v656 = vld [vmem:[#allocation5 + $0x6e8] sm:$0xff]
        %v657 = vld [vmem:[#allocation5 + $0x6f0] sm:$0xff]
        %v658 = vld [vmem:[#allocation5 + $0x6f8] sm:$0xff]
        %v659 = vld [vmem:[#allocation5 + $0x700] sm:$0xff]
        %v660 = vld [vmem:[#allocation5 + $0x708] sm:$0xff]
        %v661 = vld [vmem:[#allocation5 + $0x710] sm:$0xff]
        %v662 = vld [vmem:[#allocation5 + $0x718] sm:$0xff]
        %v663 = vld [vmem:[#allocation5 + $0x720] sm:$0xff]
        %v664 = vld [vmem:[#allocation5 + $0x728] sm:$0xff]
        %v665 = vld [vmem:[#allocation5 + $0x730] sm:$0xff]
        %v666 = vld [vmem:[#allocation5 + $0x738] sm:$0xff]
        %v667 = vld [vmem:[#allocation5 + $0x740] sm:$0xff]
        %v668 = vld [vmem:[#allocation5 + $0x748] sm:$0xff]
        %v669 = vld [vmem:[#allocation5 + $0x750] sm:$0xff]
        %v670 = vld [vmem:[#allocation5 + $0x758] sm:$0xff]
        %v671 = vld [vmem:[#allocation5 + $0x760] sm:$0xff]
        %v672 = vld [vmem:[#allocation5 + $0x768] sm:$0xff]
        %v673 = vld [vmem:[#allocation5 + $0x770] sm:$0xff]
        %v674 = vld [vmem:[#allocation5 + $0x778] sm:$0xff]
        %v675 = vld [vmem:[#allocation5 + $0x780] sm:$0xff]
        %v676 = vld [vmem:[#allocation5 + $0x788] sm:$0xff]
        %v677 = vld [vmem:[#allocation5 + $0x790] sm:$0xff]
        %v678 = vld [vmem:[#allocation5 + $0x798] sm:$0xff]
        %v679 = vld [vmem:[#allocation5 + $0x7a0] sm:$0xff]
        %v680 = vld [vmem:[#allocation5 + $0x7a8] sm:$0xff]
        %v681 = vld [vmem:[#allocation5 + $0x7b0] sm:$0xff]
        %v682 = vld [vmem:[#allocation5 + $0x7b8] sm:$0xff]
        %v683 = vld [vmem:[#allocation5 + $0x7c0] sm:$0xff]
        %v684 = vld [vmem:[#allocation5 + $0x7c8] sm:$0xff]
        %v685 = vld [vmem:[#allocation5 + $0x7d0] sm:$0xff]
        %v686 = vld [vmem:[#allocation5 + $0x7d8] sm:$0xff]
        %v687 = vld [vmem:[#allocation5 + $0x7e0] sm:$0xff]
        %v688 = vld [vmem:[#allocation5 + $0x7e8] sm:$0xff]
        %v689 = vld [vmem:[#allocation5 + $0x7f0] sm:$0xff]
        %v690 = vld [vmem:[#allocation5 + $0x7f8] sm:$0xff]
        %v691 = vld [vmem:[#allocation5 + $0x800] sm:$0xff]
        %v692 = vld [vmem:[#allocation5 + $0x808] sm:$0xff]
        %v693 = vld [vmem:[#allocation5 + $0x810] sm:$0xff]
        %v694 = vld [vmem:[#allocation5 + $0x818] sm:$0xff]
        %v695 = vld [vmem:[#allocation5 + $0x820] sm:$0xff]
        %v696 = vld [vmem:[#allocation5 + $0x828] sm:$0xff]
        %v697 = vld [vmem:[#allocation5 + $0x830] sm:$0xff]
        %v698 = vld [vmem:[#allocation5 + $0x838] sm:$0xff]
        %v699 = vld [vmem:[#allocation5 + $0x840] sm:$0xff]
        %v700 = vld [vmem:[#allocation5 + $0x848] sm:$0xff]
        %v701 = vld [vmem:[#allocation5 + $0x850] sm:$0xff]
        %v702 = vld [vmem:[#allocation5 + $0x858] sm:$0xff]
        %v703 = vld [vmem:[#allocation5 + $0x860] sm:$0xff]
        %v704 = vld [vmem:[#allocation5 + $0x868] sm:$0xff]
        %v705 = vld [vmem:[#allocation5 + $0x870] sm:$0xff]
        %v706 = vld [vmem:[#allocation5 + $0x878] sm:$0xff]
        %v707 = vld [vmem:[#allocation5 + $0x880] sm:$0xff]
        %v708 = vld [vmem:[#allocation5 + $0x888] sm:$0xff]
        %v709 = vld [vmem:[#allocation5 + $0x890] sm:$0xff]
        %v710 = vld [vmem:[#allocation5 + $0x898] sm:$0xff]
        %v711 = vld [vmem:[#allocation5 + $0x8a0] sm:$0xff]
        %v712 = vld [vmem:[#allocation5 + $0x8a8] sm:$0xff]
        %v713 = vld [vmem:[#allocation5 + $0x8b0] sm:$0xff]
        %v714 = vld [vmem:[#allocation5 + $0x8b8] sm:$0xff]
        %v715 = vld [vmem:[#allocation5 + $0x8c0] sm:$0xff]
        %v716 = vld [vmem:[#allocation5 + $0x8c8] sm:$0xff]
        %v717 = vld [vmem:[#allocation5 + $0x8d0] sm:$0xff]
        %v718 = vld [vmem:[#allocation5 + $0x8d8] sm:$0xff]
        %v719 = vld [vmem:[#allocation5 + $0x8e0] sm:$0xff]
        %v720 = vld [vmem:[#allocation5 + $0x8e8] sm:$0xff]
        %v721 = vld [vmem:[#allocation5 + $0x8f0] sm:$0xff]
        %v722 = vld [vmem:[#allocation5 + $0x8f8] sm:$0xff]
        %v723 = vld [vmem:[#allocation7] sm:$0x3f]
        %v725 = vlaneseq
        %v726 = vshrl.u32 %v725, 7
        %v727 = vsub.s32 0, %v726
        %v728 = vrot.slane %v723, %v727
        %v729 = vlaneseq
        %v730 = vshrl.u32 %v729, 7
        %v731 = vsub.s32 1, %v730
        %v732 = vrot.slane %v723, %v731
        %v733 = vlaneseq
        %v734 = vshrl.u32 %v733, 7
        %v735 = vsub.s32 2, %v734
        %v736 = vrot.slane %v723, %v735
        %v737 = vlaneseq
        %v738 = vshrl.u32 %v737, 7
        %v739 = vsub.s32 3, %v738
        %v740 = vrot.slane %v723, %v739
        %v741 = vlaneseq
        %v742 = vshrl.u32 %v741, 7
        %v743 = vsub.s32 4, %v742
        %v744 = vrot.slane %v723, %v743
        %v745 = vlaneseq
        %v746 = vshrl.u32 %v745, 7
        %v747 = vsub.s32 5, %v746
        %v748 = vrot.slane %v723, %v747
        %v1043 = vunpack.c.l.b16 %v435
        %v1044 = vunpack.c.h.b16 %v435
        %v1045 = vunpack.c.l.b16 %v436
        %v1046 = vunpack.c.h.b16 %v436
        %v1047 = vunpack.c.l.b16 %v437
        %v1048 = vunpack.c.h.b16 %v437
        %v1049 = vunpack.c.l.b16 %v438
        %v1050 = vunpack.c.h.b16 %v438
        %v1051 = vunpack.c.l.b16 %v439
        %v1052 = vunpack.c.h.b16 %v439
        %v1053 = vunpack.c.l.b16 %v440
        %v1054 = vunpack.c.h.b16 %v440
        %v1055 = vunpack.c.l.b16 %v441
        %v1056 = vunpack.c.h.b16 %v441
        %v1057 = vunpack.c.l.b16 %v442
        %v1058 = vunpack.c.h.b16 %v442
        %v1059 = vunpack.c.l.b16 %v443
        %v1060 = vunpack.c.h.b16 %v443
        %v1061 = vunpack.c.l.b16 %v444
        %v1062 = vunpack.c.h.b16 %v444
        %v1063 = vunpack.c.l.b16 %v445
        %v1064 = vunpack.c.h.b16 %v445
        %v1065 = vunpack.c.l.b16 %v446
        %v1066 = vunpack.c.h.b16 %v446
        %v1067 = vunpack.c.l.b16 %v447
        %v1068 = vunpack.c.h.b16 %v447
        %v1069 = vunpack.c.l.b16 %v448
        %v1070 = vunpack.c.h.b16 %v448
        %v1071 = vunpack.c.l.b16 %v449
        %v1072 = vunpack.c.h.b16 %v449
        %v1073 = vunpack.c.l.b16 %v450
        %v1074 = vunpack.c.h.b16 %v450
        %v1075 = vunpack.c.l.b16 %v451
        %v1076 = vunpack.c.h.b16 %v451
        %v1077 = vunpack.c.l.b16 %v452
        %v1078 = vunpack.c.h.b16 %v452
        %v1079 = vunpack.c.l.b16 %v453
        %v1080 = vunpack.c.h.b16 %v453
        %v1081 = vunpack.c.l.b16 %v454
        %v1082 = vunpack.c.h.b16 %v454
        %v1083 = vunpack.c.l.b16 %v455
        %v1084 = vunpack.c.h.b16 %v455
        %v1085 = vunpack.c.l.b16 %v456
        %v1086 = vunpack.c.h.b16 %v456
        %v1087 = vunpack.c.l.b16 %v457
        %v1088 = vunpack.c.h.b16 %v457
        %v1089 = vunpack.c.l.b16 %v458
        %v1090 = vunpack.c.h.b16 %v458
        %v1091 = vunpack.c.l.b16 %v459
        %v1092 = vunpack.c.h.b16 %v459
        %v1093 = vunpack.c.l.b16 %v460
        %v1094 = vunpack.c.h.b16 %v460
        %v1095 = vunpack.c.l.b16 %v461
        %v1096 = vunpack.c.h.b16 %v461
        %v1097 = vunpack.c.l.b16 %v462
        %v1098 = vunpack.c.h.b16 %v462
        %v1099 = vunpack.c.l.b16 %v463
        %v1100 = vunpack.c.h.b16 %v463
        %v1101 = vunpack.c.l.b16 %v464
        %v1102 = vunpack.c.h.b16 %v464
        %v1103 = vunpack.c.l.b16 %v465
        %v1104 = vunpack.c.h.b16 %v465
        %v1105 = vunpack.c.l.b16 %v466
        %v1106 = vunpack.c.h.b16 %v466
        %v1107 = vunpack.c.l.b16 %v467
        %v1108 = vunpack.c.h.b16 %v467
        %v1109 = vunpack.c.l.b16 %v468
        %v1110 = vunpack.c.h.b16 %v468
        %v1111 = vunpack.c.l.b16 %v469
        %v1112 = vunpack.c.h.b16 %v469
        %v1113 = vunpack.c.l.b16 %v470
        %v1114 = vunpack.c.h.b16 %v470
        %v1115 = vunpack.c.l.b16 %v471
        %v1116 = vunpack.c.h.b16 %v471
        %v1117 = vunpack.c.l.b16 %v472
        %v1118 = vunpack.c.h.b16 %v472
        %v1119 = vunpack.c.l.b16 %v473
        %v1120 = vunpack.c.h.b16 %v473
        %v1121 = vunpack.c.l.b16 %v474
        %v1122 = vunpack.c.h.b16 %v474
        %v1123 = vunpack.c.l.b16 %v475
        %v1124 = vunpack.c.h.b16 %v475
        %v1125 = vunpack.c.l.b16 %v476
        %v1126 = vunpack.c.h.b16 %v476
        %v1127 = vunpack.c.l.b16 %v477
        %v1128 = vunpack.c.h.b16 %v477
        %v1129 = vunpack.c.l.b16 %v478
        %v1130 = vunpack.c.h.b16 %v478
        %v1131 = vunpack.c.l.b16 %v479
        %v1132 = vunpack.c.h.b16 %v479
        %v1133 = vunpack.c.l.b16 %v480
        %v1134 = vunpack.c.h.b16 %v480
        %v1135 = vunpack.c.l.b16 %v481
        %v1136 = vunpack.c.h.b16 %v481
        %v1137 = vunpack.c.l.b16 %v482
        %v1138 = vunpack.c.h.b16 %v482
        %v1139 = vunpack.c.l.b16 %v483
        %v1140 = vunpack.c.h.b16 %v483
        %v1141 = vunpack.c.l.b16 %v484
        %v1142 = vunpack.c.h.b16 %v484
        %v1143 = vunpack.c.l.b16 %v485
        %v1144 = vunpack.c.h.b16 %v485
        %v1145 = vunpack.c.l.b16 %v486
        %v1146 = vunpack.c.h.b16 %v486
        %v1147 = vunpack.c.l.b16 %v487
        %v1148 = vunpack.c.h.b16 %v487
        %v1149 = vunpack.c.l.b16 %v488
        %v1150 = vunpack.c.h.b16 %v488
        %v1151 = vunpack.c.l.b16 %v489
        %v1152 = vunpack.c.h.b16 %v489
        %v1153 = vunpack.c.l.b16 %v490
        %v1154 = vunpack.c.h.b16 %v490
        %v1155 = vunpack.c.l.b16 %v491
        %v1156 = vunpack.c.h.b16 %v491
        %v1157 = vunpack.c.l.b16 %v492
        %v1158 = vunpack.c.h.b16 %v492
        %v1159 = vunpack.c.l.b16 %v493
        %v1160 = vunpack.c.h.b16 %v493
        %v1161 = vunpack.c.l.b16 %v494
        %v1162 = vunpack.c.h.b16 %v494
        %v1163 = vunpack.c.l.b16 %v495
        %v1164 = vunpack.c.h.b16 %v495
        %v1165 = vunpack.c.l.b16 %v496
        %v1166 = vunpack.c.h.b16 %v496
        %v1167 = vunpack.c.l.b16 %v497
        %v1168 = vunpack.c.h.b16 %v497
        %v1169 = vunpack.c.l.b16 %v498
        %v1170 = vunpack.c.h.b16 %v498
        %v1171 = vunpack.c.l.b16 %v499
        %v1172 = vunpack.c.h.b16 %v499
        %v1173 = vunpack.c.l.b16 %v500
        %v1174 = vunpack.c.h.b16 %v500
        %v1175 = vunpack.c.l.b16 %v501
        %v1176 = vunpack.c.h.b16 %v501
        %v1177 = vunpack.c.l.b16 %v502
        %v1178 = vunpack.c.h.b16 %v502
        %v1179 = vunpack.c.l.b16 %v503
        %v1180 = vunpack.c.h.b16 %v503
        %v1181 = vunpack.c.l.b16 %v504
        %v1182 = vunpack.c.h.b16 %v504
        %v1183 = vunpack.c.l.b16 %v505
        %v1184 = vunpack.c.h.b16 %v505
        %v1185 = vunpack.c.l.b16 %v506
        %v1186 = vunpack.c.h.b16 %v506
        %v1187 = vunpack.c.l.b16 %v507
        %v1188 = vunpack.c.h.b16 %v507
        %v1189 = vunpack.c.l.b16 %v508
        %v1190 = vunpack.c.h.b16 %v508
        %v1191 = vunpack.c.l.b16 %v509
        %v1192 = vunpack.c.h.b16 %v509
        %v1193 = vunpack.c.l.b16 %v510
        %v1194 = vunpack.c.h.b16 %v510
        %v1195 = vunpack.c.l.b16 %v511
        %v1196 = vunpack.c.h.b16 %v511
        %v1197 = vunpack.c.l.b16 %v512
        %v1198 = vunpack.c.h.b16 %v512
        %v1199 = vunpack.c.l.b16 %v513
        %v1200 = vunpack.c.h.b16 %v513
        %v1201 = vunpack.c.l.b16 %v514
        %v1202 = vunpack.c.h.b16 %v514
        %v1203 = vunpack.c.l.b16 %v515
        %v1204 = vunpack.c.h.b16 %v515
        %v1205 = vunpack.c.l.b16 %v516
        %v1206 = vunpack.c.h.b16 %v516
        %v1207 = vunpack.c.l.b16 %v517
        %v1208 = vunpack.c.h.b16 %v517
        %v1209 = vunpack.c.l.b16 %v518
        %v1210 = vunpack.c.h.b16 %v518
        %v1211 = vunpack.c.l.b16 %v519
        %v1212 = vunpack.c.h.b16 %v519
        %v1213 = vunpack.c.l.b16 %v520
        %v1214 = vunpack.c.h.b16 %v520
        %v1215 = vunpack.c.l.b16 %v521
        %v1216 = vunpack.c.h.b16 %v521
        %v1217 = vunpack.c.l.b16 %v522
        %v1218 = vunpack.c.h.b16 %v522
        %v1219 = vunpack.c.l.b16 %v523
        %v1220 = vunpack.c.h.b16 %v523
        %v1221 = vunpack.c.l.b16 %v524
        %v1222 = vunpack.c.h.b16 %v524
        %v1223 = vunpack.c.l.b16 %v525
        %v1224 = vunpack.c.h.b16 %v525
        %v1225 = vunpack.c.l.b16 %v526
        %v1226 = vunpack.c.h.b16 %v526
        %v1227 = vunpack.c.l.b16 %v527
        %v1228 = vunpack.c.h.b16 %v527
        %v1229 = vunpack.c.l.b16 %v528
        %v1230 = vunpack.c.h.b16 %v528
        %v1231 = vunpack.c.l.b16 %v529
        %v1232 = vunpack.c.h.b16 %v529
        %v1233 = vunpack.c.l.b16 %v530
        %v1234 = vunpack.c.h.b16 %v530
        %v1235 = vunpack.c.l.b16 %v531
        %v1236 = vunpack.c.h.b16 %v531
        %v1237 = vunpack.c.l.b16 %v532
        %v1238 = vunpack.c.h.b16 %v532
        %v1239 = vunpack.c.l.b16 %v533
        %v1240 = vunpack.c.h.b16 %v533
        %v1241 = vunpack.c.l.b16 %v534
        %v1242 = vunpack.c.h.b16 %v534
        %v1243 = vunpack.c.l.b16 %v535
        %v1244 = vunpack.c.h.b16 %v535
        %v1245 = vunpack.c.l.b16 %v536
        %v1246 = vunpack.c.h.b16 %v536
        %v1247 = vunpack.c.l.b16 %v537
        %v1248 = vunpack.c.h.b16 %v537
        %v1249 = vunpack.c.l.b16 %v538
        %v1250 = vunpack.c.h.b16 %v538
        %v1251 = vunpack.c.l.b16 %v539
        %v1252 = vunpack.c.h.b16 %v539
        %v1253 = vunpack.c.l.b16 %v540
        %v1254 = vunpack.c.h.b16 %v540
        %v1255 = vunpack.c.l.b16 %v541
        %v1256 = vunpack.c.h.b16 %v541
        %v1257 = vunpack.c.l.b16 %v542
        %v1258 = vunpack.c.h.b16 %v542
        %v1259 = vunpack.c.l.b16 %v543
        %v1260 = vunpack.c.h.b16 %v543
        %v1261 = vunpack.c.l.b16 %v544
        %v1262 = vunpack.c.h.b16 %v544
        %v1263 = vunpack.c.l.b16 %v545
        %v1264 = vunpack.c.h.b16 %v545
        %v1265 = vunpack.c.l.b16 %v546
        %v1266 = vunpack.c.h.b16 %v546
        %v1267 = vunpack.c.l.b16 %v547
        %v1268 = vunpack.c.h.b16 %v547
        %v1269 = vunpack.c.l.b16 %v548
        %v1270 = vunpack.c.h.b16 %v548
        %v1271 = vunpack.c.l.b16 %v549
        %v1272 = vunpack.c.h.b16 %v549
        %v1273 = vunpack.c.l.b16 %v550
        %v1274 = vunpack.c.h.b16 %v550
        %v1275 = vunpack.c.l.b16 %v551
        %v1276 = vunpack.c.h.b16 %v551
        %v1277 = vunpack.c.l.b16 %v552
        %v1278 = vunpack.c.h.b16 %v552
        %v1279 = vunpack.c.l.b16 %v553
        %v1280 = vunpack.c.h.b16 %v553
        %v1281 = vunpack.c.l.b16 %v554
        %v1282 = vunpack.c.h.b16 %v554
        %v1283 = vunpack.c.l.b16 %v555
        %v1284 = vunpack.c.h.b16 %v555
        %v1285 = vunpack.c.l.b16 %v556
        %v1286 = vunpack.c.h.b16 %v556
        %v1287 = vunpack.c.l.b16 %v557
        %v1288 = vunpack.c.h.b16 %v557
        %v1289 = vunpack.c.l.b16 %v558
        %v1290 = vunpack.c.h.b16 %v558
        %v1291 = vunpack.c.l.b16 %v559
        %v1292 = vunpack.c.h.b16 %v559
        %v1293 = vunpack.c.l.b16 %v560
        %v1294 = vunpack.c.h.b16 %v560
        %v1295 = vunpack.c.l.b16 %v561
        %v1296 = vunpack.c.h.b16 %v561
        %v1297 = vunpack.c.l.b16 %v562
        %v1298 = vunpack.c.h.b16 %v562
        %v1299 = vunpack.c.l.b16 %v563
        %v1300 = vunpack.c.h.b16 %v563
        %v1301 = vunpack.c.l.b16 %v564
        %v1302 = vunpack.c.h.b16 %v564
        %v1303 = vunpack.c.l.b16 %v565
        %v1304 = vunpack.c.h.b16 %v565
        %v1305 = vunpack.c.l.b16 %v566
        %v1306 = vunpack.c.h.b16 %v566
        %v1307 = vunpack.c.l.b16 %v567
        %v1308 = vunpack.c.h.b16 %v567
        %v1309 = vunpack.c.l.b16 %v568
        %v1310 = vunpack.c.h.b16 %v568
        %v1311 = vunpack.c.l.b16 %v569
        %v1312 = vunpack.c.h.b16 %v569
        %v1313 = vunpack.c.l.b16 %v570
        %v1314 = vunpack.c.h.b16 %v570
        %v1315 = vunpack.c.l.b16 %v571
        %v1316 = vunpack.c.h.b16 %v571
        %v1317 = vunpack.c.l.b16 %v572
        %v1318 = vunpack.c.h.b16 %v572
        %v1319 = vunpack.c.l.b16 %v573
        %v1320 = vunpack.c.h.b16 %v573
        %v1321 = vunpack.c.l.b16 %v574
        %v1322 = vunpack.c.h.b16 %v574
        %v1323 = vunpack.c.l.b16 %v575
        %v1324 = vunpack.c.h.b16 %v575
        %v1325 = vunpack.c.l.b16 %v576
        %v1326 = vunpack.c.h.b16 %v576
        %v1327 = vunpack.c.l.b16 %v577
        %v1328 = vunpack.c.h.b16 %v577
        %v1329 = vunpack.c.l.b16 %v578
        %v1330 = vunpack.c.h.b16 %v578
        %v1331 = vunpack.c.l.b16 %v579
        %v1332 = vunpack.c.h.b16 %v579
        %v1333 = vunpack.c.l.b16 %v580
        %v1334 = vunpack.c.h.b16 %v580
        %v1335 = vunpack.c.l.b16 %v581
        %v1336 = vunpack.c.h.b16 %v581
        %v1337 = vunpack.c.l.b16 %v582
        %v1338 = vunpack.c.h.b16 %v582
        %v1339 = vunpack.c.l.b16 %v583
        %v1340 = vunpack.c.h.b16 %v583
        %v1341 = vunpack.c.l.b16 %v584
        %v1342 = vunpack.c.h.b16 %v584
        %v1343 = vunpack.c.l.b16 %v585
        %v1344 = vunpack.c.h.b16 %v585
        %v1345 = vunpack.c.l.b16 %v586
        %v1346 = vunpack.c.h.b16 %v586
        %v1347 = vunpack.c.l.b16 %v587
        %v1348 = vunpack.c.h.b16 %v587
        %v1349 = vunpack.c.l.b16 %v588
        %v1350 = vunpack.c.h.b16 %v588
        %v1351 = vunpack.c.l.b16 %v589
        %v1352 = vunpack.c.h.b16 %v589
        %v1353 = vunpack.c.l.b16 %v590
        %v1354 = vunpack.c.h.b16 %v590
        %v1355 = vunpack.c.l.b16 %v591
        %v1356 = vunpack.c.h.b16 %v591
        %v1357 = vunpack.c.l.b16 %v592
        %v1358 = vunpack.c.h.b16 %v592
        %v1359 = vunpack.c.l.b16 %v593
        %v1360 = vunpack.c.h.b16 %v593
        %v1361 = vunpack.c.l.b16 %v594
        %v1362 = vunpack.c.h.b16 %v594
        %v1363 = vunpack.c.l.b16 %v595
        %v1364 = vunpack.c.h.b16 %v595
        %v1365 = vunpack.c.l.b16 %v596
        %v1366 = vunpack.c.h.b16 %v596
        %v1367 = vunpack.c.l.b16 %v597
        %v1368 = vunpack.c.h.b16 %v597
        %v1369 = vunpack.c.l.b16 %v598
        %v1370 = vunpack.c.h.b16 %v598
        %v1371 = vunpack.c.l.b16 %v599
        %v1372 = vunpack.c.h.b16 %v599
        %v1373 = vunpack.c.l.b16 %v600
        %v1374 = vunpack.c.h.b16 %v600
        %v1375 = vunpack.c.l.b16 %v601
        %v1376 = vunpack.c.h.b16 %v601
        %v1377 = vunpack.c.l.b16 %v602
        %v1378 = vunpack.c.h.b16 %v602
        %v1379 = vunpack.c.l.b16 %v603
        %v1380 = vunpack.c.h.b16 %v603
        %v1381 = vunpack.c.l.b16 %v604
        %v1382 = vunpack.c.h.b16 %v604
        %v1383 = vunpack.c.l.b16 %v605
        %v1384 = vunpack.c.h.b16 %v605
        %v1385 = vunpack.c.l.b16 %v606
        %v1386 = vunpack.c.h.b16 %v606
        %v1387 = vunpack.c.l.b16 %v607
        %v1388 = vunpack.c.h.b16 %v607
        %v1389 = vunpack.c.l.b16 %v608
        %v1390 = vunpack.c.h.b16 %v608
        %v1391 = vunpack.c.l.b16 %v609
        %v1392 = vunpack.c.h.b16 %v609
        %v1393 = vunpack.c.l.b16 %v610
        %v1394 = vunpack.c.h.b16 %v610
        %v1395 = vunpack.c.l.b16 %v611
        %v1396 = vunpack.c.h.b16 %v611
        %v1397 = vunpack.c.l.b16 %v612
        %v1398 = vunpack.c.h.b16 %v612
        %v1399 = vunpack.c.l.b16 %v613
        %v1400 = vunpack.c.h.b16 %v613
        %v1401 = vunpack.c.l.b16 %v614
        %v1402 = vunpack.c.h.b16 %v614
        %v1403 = vunpack.c.l.b16 %v615
        %v1404 = vunpack.c.h.b16 %v615
        %v1405 = vunpack.c.l.b16 %v616
        %v1406 = vunpack.c.h.b16 %v616
        %v1407 = vunpack.c.l.b16 %v617
        %v1408 = vunpack.c.h.b16 %v617
        %v1409 = vunpack.c.l.b16 %v618
        %v1410 = vunpack.c.h.b16 %v618
        %v1411 = vunpack.c.l.b16 %v619
        %v1412 = vunpack.c.h.b16 %v619
        %v1413 = vunpack.c.l.b16 %v620
        %v1414 = vunpack.c.h.b16 %v620
        %v1415 = vunpack.c.l.b16 %v621
        %v1416 = vunpack.c.h.b16 %v621
        %v1417 = vunpack.c.l.b16 %v622
        %v1418 = vunpack.c.h.b16 %v622
        %v1419 = vunpack.c.l.b16 %v623
        %v1420 = vunpack.c.h.b16 %v623
        %v1421 = vunpack.c.l.b16 %v624
        %v1422 = vunpack.c.h.b16 %v624
        %v1423 = vunpack.c.l.b16 %v625
        %v1424 = vunpack.c.h.b16 %v625
        %v1425 = vunpack.c.l.b16 %v626
        %v1426 = vunpack.c.h.b16 %v626
        %v1427 = vunpack.c.l.b16 %v627
        %v1428 = vunpack.c.h.b16 %v627
        %v1429 = vunpack.c.l.b16 %v628
        %v1430 = vunpack.c.h.b16 %v628
        %v1431 = vunpack.c.l.b16 %v629
        %v1432 = vunpack.c.h.b16 %v629
        %v1433 = vunpack.c.l.b16 %v630
        %v1434 = vunpack.c.h.b16 %v630
        %v1435 = vunpack.c.l.b16 %v631
        %v1436 = vunpack.c.h.b16 %v631
        %v1437 = vunpack.c.l.b16 %v632
        %v1438 = vunpack.c.h.b16 %v632
        %v1439 = vunpack.c.l.b16 %v633
        %v1440 = vunpack.c.h.b16 %v633
        %v1441 = vunpack.c.l.b16 %v634
        %v1442 = vunpack.c.h.b16 %v634
        %v1443 = vunpack.c.l.b16 %v635
        %v1444 = vunpack.c.h.b16 %v635
        %v1445 = vunpack.c.l.b16 %v636
        %v1446 = vunpack.c.h.b16 %v636
        %v1447 = vunpack.c.l.b16 %v637
        %v1448 = vunpack.c.h.b16 %v637
        %v1449 = vunpack.c.l.b16 %v638
        %v1450 = vunpack.c.h.b16 %v638
        %v1451 = vunpack.c.l.b16 %v639
        %v1452 = vunpack.c.h.b16 %v639
        %v1453 = vunpack.c.l.b16 %v640
        %v1454 = vunpack.c.h.b16 %v640
        %v1455 = vunpack.c.l.b16 %v641
        %v1456 = vunpack.c.h.b16 %v641
        %v1457 = vunpack.c.l.b16 %v642
        %v1458 = vunpack.c.h.b16 %v642
        %v1459 = vunpack.c.l.b16 %v643
        %v1460 = vunpack.c.h.b16 %v643
        %v1461 = vunpack.c.l.b16 %v644
        %v1462 = vunpack.c.h.b16 %v644
        %v1463 = vunpack.c.l.b16 %v645
        %v1464 = vunpack.c.h.b16 %v645
        %v1465 = vunpack.c.l.b16 %v646
        %v1466 = vunpack.c.h.b16 %v646
        %v1467 = vunpack.c.l.b16 %v647
        %v1468 = vunpack.c.h.b16 %v647
        %v1469 = vunpack.c.l.b16 %v648
        %v1470 = vunpack.c.h.b16 %v648
        %v1471 = vunpack.c.l.b16 %v649
        %v1472 = vunpack.c.h.b16 %v649
        %v1473 = vunpack.c.l.b16 %v650
        %v1474 = vunpack.c.h.b16 %v650
        %v1475 = vunpack.c.l.b16 %v651
        %v1476 = vunpack.c.h.b16 %v651
        %v1477 = vunpack.c.l.b16 %v652
        %v1478 = vunpack.c.h.b16 %v652
        %v1479 = vunpack.c.l.b16 %v653
        %v1480 = vunpack.c.h.b16 %v653
        %v1481 = vunpack.c.l.b16 %v654
        %v1482 = vunpack.c.h.b16 %v654
        %v1483 = vunpack.c.l.b16 %v655
        %v1484 = vunpack.c.h.b16 %v655
        %v1485 = vunpack.c.l.b16 %v656
        %v1486 = vunpack.c.h.b16 %v656
        %v1487 = vunpack.c.l.b16 %v657
        %v1488 = vunpack.c.h.b16 %v657
        %v1489 = vunpack.c.l.b16 %v658
        %v1490 = vunpack.c.h.b16 %v658
        %v1491 = vunpack.c.l.b16 %v659
        %v1492 = vunpack.c.h.b16 %v659
        %v1493 = vunpack.c.l.b16 %v660
        %v1494 = vunpack.c.h.b16 %v660
        %v1495 = vunpack.c.l.b16 %v661
        %v1496 = vunpack.c.h.b16 %v661
        %v1497 = vunpack.c.l.b16 %v662
        %v1498 = vunpack.c.h.b16 %v662
        %v1499 = vunpack.c.l.b16 %v663
        %v1500 = vunpack.c.h.b16 %v663
        %v1501 = vunpack.c.l.b16 %v664
        %v1502 = vunpack.c.h.b16 %v664
        %v1503 = vunpack.c.l.b16 %v665
        %v1504 = vunpack.c.h.b16 %v665
        %v1505 = vunpack.c.l.b16 %v666
        %v1506 = vunpack.c.h.b16 %v666
        %v1507 = vunpack.c.l.b16 %v667
        %v1508 = vunpack.c.h.b16 %v667
        %v1509 = vunpack.c.l.b16 %v668
        %v1510 = vunpack.c.h.b16 %v668
        %v1511 = vunpack.c.l.b16 %v669
        %v1512 = vunpack.c.h.b16 %v669
        %v1513 = vunpack.c.l.b16 %v670
        %v1514 = vunpack.c.h.b16 %v670
        %v1515 = vunpack.c.l.b16 %v671
        %v1516 = vunpack.c.h.b16 %v671
        %v1517 = vunpack.c.l.b16 %v672
        %v1518 = vunpack.c.h.b16 %v672
        %v1519 = vunpack.c.l.b16 %v673
        %v1520 = vunpack.c.h.b16 %v673
        %v1521 = vunpack.c.l.b16 %v674
        %v1522 = vunpack.c.h.b16 %v674
        %v1523 = vunpack.c.l.b16 %v675
        %v1524 = vunpack.c.h.b16 %v675
        %v1525 = vunpack.c.l.b16 %v676
        %v1526 = vunpack.c.h.b16 %v676
        %v1527 = vunpack.c.l.b16 %v677
        %v1528 = vunpack.c.h.b16 %v677
        %v1529 = vunpack.c.l.b16 %v678
        %v1530 = vunpack.c.h.b16 %v678
        %v1531 = vunpack.c.l.b16 %v679
        %v1532 = vunpack.c.h.b16 %v679
        %v1533 = vunpack.c.l.b16 %v680
        %v1534 = vunpack.c.h.b16 %v680
        %v1535 = vunpack.c.l.b16 %v681
        %v1536 = vunpack.c.h.b16 %v681
        %v1537 = vunpack.c.l.b16 %v682
        %v1538 = vunpack.c.h.b16 %v682
        %v1539 = vunpack.c.l.b16 %v683
        %v1540 = vunpack.c.h.b16 %v683
        %v1541 = vunpack.c.l.b16 %v684
        %v1542 = vunpack.c.h.b16 %v684
        %v1543 = vunpack.c.l.b16 %v685
        %v1544 = vunpack.c.h.b16 %v685
        %v1545 = vunpack.c.l.b16 %v686
        %v1546 = vunpack.c.h.b16 %v686
        %v1547 = vunpack.c.l.b16 %v687
        %v1548 = vunpack.c.h.b16 %v687
        %v1549 = vunpack.c.l.b16 %v688
        %v1550 = vunpack.c.h.b16 %v688
        %v1551 = vunpack.c.l.b16 %v689
        %v1552 = vunpack.c.h.b16 %v689
        %v1553 = vunpack.c.l.b16 %v690
        %v1554 = vunpack.c.h.b16 %v690
        %v1555 = vunpack.c.l.b16 %v691
        %v1556 = vunpack.c.h.b16 %v691
        %v1557 = vunpack.c.l.b16 %v692
        %v1558 = vunpack.c.h.b16 %v692
        %v1559 = vunpack.c.l.b16 %v693
        %v1560 = vunpack.c.h.b16 %v693
        %v1561 = vunpack.c.l.b16 %v694
        %v1562 = vunpack.c.h.b16 %v694
        %v1563 = vunpack.c.l.b16 %v695
        %v1564 = vunpack.c.h.b16 %v695
        %v1565 = vunpack.c.l.b16 %v696
        %v1566 = vunpack.c.h.b16 %v696
        %v1567 = vunpack.c.l.b16 %v697
        %v1568 = vunpack.c.h.b16 %v697
        %v1569 = vunpack.c.l.b16 %v698
        %v1570 = vunpack.c.h.b16 %v698
        %v1571 = vunpack.c.l.b16 %v699
        %v1572 = vunpack.c.h.b16 %v699
        %v1573 = vunpack.c.l.b16 %v700
        %v1574 = vunpack.c.h.b16 %v700
        %v1575 = vunpack.c.l.b16 %v701
        %v1576 = vunpack.c.h.b16 %v701
        %v1577 = vunpack.c.l.b16 %v702
        %v1578 = vunpack.c.h.b16 %v702
        %v1579 = vunpack.c.l.b16 %v703
        %v1580 = vunpack.c.h.b16 %v703
        %v1581 = vunpack.c.l.b16 %v704
        %v1582 = vunpack.c.h.b16 %v704
        %v1583 = vunpack.c.l.b16 %v705
        %v1584 = vunpack.c.h.b16 %v705
        %v1585 = vunpack.c.l.b16 %v706
        %v1586 = vunpack.c.h.b16 %v706
        %v1587 = vunpack.c.l.b16 %v707
        %v1588 = vunpack.c.h.b16 %v707
        %v1589 = vunpack.c.l.b16 %v708
        %v1590 = vunpack.c.h.b16 %v708
        %v1591 = vunpack.c.l.b16 %v709
        %v1592 = vunpack.c.h.b16 %v709
        %v1593 = vunpack.c.l.b16 %v710
        %v1594 = vunpack.c.h.b16 %v710
        %v1595 = vunpack.c.l.b16 %v711
        %v1596 = vunpack.c.h.b16 %v711
        %v1597 = vunpack.c.l.b16 %v712
        %v1598 = vunpack.c.h.b16 %v712
        %v1599 = vunpack.c.l.b16 %v713
        %v1600 = vunpack.c.h.b16 %v713
        %v1601 = vunpack.c.l.b16 %v714
        %v1602 = vunpack.c.h.b16 %v714
        %v1603 = vunpack.c.l.b16 %v715
        %v1604 = vunpack.c.h.b16 %v715
        %v1605 = vunpack.c.l.b16 %v716
        %v1606 = vunpack.c.h.b16 %v716
        %v1607 = vunpack.c.l.b16 %v717
        %v1608 = vunpack.c.h.b16 %v717
        %v1609 = vunpack.c.l.b16 %v718
        %v1610 = vunpack.c.h.b16 %v718
        %v1611 = vunpack.c.l.b16 %v719
        %v1612 = vunpack.c.h.b16 %v719
        %v1613 = vunpack.c.l.b16 %v720
        %v1614 = vunpack.c.h.b16 %v720
        %v1615 = vunpack.c.l.b16 %v721
        %v1616 = vunpack.c.h.b16 %v721
        %v1617 = vunpack.c.l.b16 %v722
        %v1618 = vunpack.c.h.b16 %v722
        %v1619 = vpack.c.b16 %v1049, %v1043
        %v1620 = vpack.c.b16 %v1050, %v1044
        %v1621 = vpack.c.b16 %v1051, %v1045
        %v1622 = vpack.c.b16 %v1052, %v1046
        %v1623 = vpack.c.b16 %v1053, %v1047
        %v1624 = vpack.c.b16 %v1054, %v1048
        %v1625 = vpack.c.b16 %v1061, %v1055
        %v1626 = vpack.c.b16 %v1062, %v1056
        %v1627 = vpack.c.b16 %v1063, %v1057
        %v1628 = vpack.c.b16 %v1064, %v1058
        %v1629 = vpack.c.b16 %v1065, %v1059
        %v1630 = vpack.c.b16 %v1066, %v1060
        %v1631 = vpack.c.b16 %v1073, %v1067
        %v1632 = vpack.c.b16 %v1074, %v1068
        %v1633 = vpack.c.b16 %v1075, %v1069
        %v1634 = vpack.c.b16 %v1076, %v1070
        %v1635 = vpack.c.b16 %v1077, %v1071
        %v1636 = vpack.c.b16 %v1078, %v1072
        %v1637 = vpack.c.b16 %v1085, %v1079
        %v1638 = vpack.c.b16 %v1086, %v1080
        %v1639 = vpack.c.b16 %v1087, %v1081
        %v1640 = vpack.c.b16 %v1088, %v1082
        %v1641 = vpack.c.b16 %v1089, %v1083
        %v1642 = vpack.c.b16 %v1090, %v1084
        %v1643 = vpack.c.b16 %v1097, %v1091
        %v1644 = vpack.c.b16 %v1098, %v1092
        %v1645 = vpack.c.b16 %v1099, %v1093
        %v1646 = vpack.c.b16 %v1100, %v1094
        %v1647 = vpack.c.b16 %v1101, %v1095
        %v1648 = vpack.c.b16 %v1102, %v1096
        %v1649 = vpack.c.b16 %v1109, %v1103
        %v1650 = vpack.c.b16 %v1110, %v1104
        %v1651 = vpack.c.b16 %v1111, %v1105
        %v1652 = vpack.c.b16 %v1112, %v1106
        %v1653 = vpack.c.b16 %v1113, %v1107
        %v1654 = vpack.c.b16 %v1114, %v1108
        %v1655 = vpack.c.b16 %v1121, %v1115
        %v1656 = vpack.c.b16 %v1122, %v1116
        %v1657 = vpack.c.b16 %v1123, %v1117
        %v1658 = vpack.c.b16 %v1124, %v1118
        %v1659 = vpack.c.b16 %v1125, %v1119
        %v1660 = vpack.c.b16 %v1126, %v1120
        %v1661 = vpack.c.b16 %v1133, %v1127
        %v1662 = vpack.c.b16 %v1134, %v1128
        %v1663 = vpack.c.b16 %v1135, %v1129
        %v1664 = vpack.c.b16 %v1136, %v1130
        %v1665 = vpack.c.b16 %v1137, %v1131
        %v1666 = vpack.c.b16 %v1138, %v1132
        %v1667 = vpack.c.b16 %v1145, %v1139
        %v1668 = vpack.c.b16 %v1146, %v1140
        %v1669 = vpack.c.b16 %v1147, %v1141
        %v1670 = vpack.c.b16 %v1148, %v1142
        %v1671 = vpack.c.b16 %v1149, %v1143
        %v1672 = vpack.c.b16 %v1150, %v1144
        %v1673 = vpack.c.b16 %v1157, %v1151
        %v1674 = vpack.c.b16 %v1158, %v1152
        %v1675 = vpack.c.b16 %v1159, %v1153
        %v1676 = vpack.c.b16 %v1160, %v1154
        %v1677 = vpack.c.b16 %v1161, %v1155
        %v1678 = vpack.c.b16 %v1162, %v1156
        %v1679 = vpack.c.b16 %v1169, %v1163
        %v1680 = vpack.c.b16 %v1170, %v1164
        %v1681 = vpack.c.b16 %v1171, %v1165
        %v1682 = vpack.c.b16 %v1172, %v1166
        %v1683 = vpack.c.b16 %v1173, %v1167
        %v1684 = vpack.c.b16 %v1174, %v1168
        %v1685 = vpack.c.b16 %v1181, %v1175
        %v1686 = vpack.c.b16 %v1182, %v1176
        %v1687 = vpack.c.b16 %v1183, %v1177
        %v1688 = vpack.c.b16 %v1184, %v1178
        %v1689 = vpack.c.b16 %v1185, %v1179
        %v1690 = vpack.c.b16 %v1186, %v1180
        %v1691 = vpack.c.b16 %v1193, %v1187
        %v1692 = vpack.c.b16 %v1194, %v1188
        %v1693 = vpack.c.b16 %v1195, %v1189
        %v1694 = vpack.c.b16 %v1196, %v1190
        %v1695 = vpack.c.b16 %v1197, %v1191
        %v1696 = vpack.c.b16 %v1198, %v1192
        %v1697 = vpack.c.b16 %v1205, %v1199
        %v1698 = vpack.c.b16 %v1206, %v1200
        %v1699 = vpack.c.b16 %v1207, %v1201
        %v1700 = vpack.c.b16 %v1208, %v1202
        %v1701 = vpack.c.b16 %v1209, %v1203
        %v1702 = vpack.c.b16 %v1210, %v1204
        %v1703 = vpack.c.b16 %v1217, %v1211
        %v1704 = vpack.c.b16 %v1218, %v1212
        %v1705 = vpack.c.b16 %v1219, %v1213
        %v1706 = vpack.c.b16 %v1220, %v1214
        %v1707 = vpack.c.b16 %v1221, %v1215
        %v1708 = vpack.c.b16 %v1222, %v1216
        %v1709 = vpack.c.b16 %v1229, %v1223
        %v1710 = vpack.c.b16 %v1230, %v1224
        %v1711 = vpack.c.b16 %v1231, %v1225
        %v1712 = vpack.c.b16 %v1232, %v1226
        %v1713 = vpack.c.b16 %v1233, %v1227
        %v1714 = vpack.c.b16 %v1234, %v1228
        %v1715 = vpack.c.b16 %v1241, %v1235
        %v1716 = vpack.c.b16 %v1242, %v1236
        %v1717 = vpack.c.b16 %v1243, %v1237
        %v1718 = vpack.c.b16 %v1244, %v1238
        %v1719 = vpack.c.b16 %v1245, %v1239
        %v1720 = vpack.c.b16 %v1246, %v1240
        %v1721 = vpack.c.b16 %v1253, %v1247
        %v1722 = vpack.c.b16 %v1254, %v1248
        %v1723 = vpack.c.b16 %v1255, %v1249
        %v1724 = vpack.c.b16 %v1256, %v1250
        %v1725 = vpack.c.b16 %v1257, %v1251
        %v1726 = vpack.c.b16 %v1258, %v1252
        %v1727 = vpack.c.b16 %v1265, %v1259
        %v1728 = vpack.c.b16 %v1266, %v1260
        %v1729 = vpack.c.b16 %v1267, %v1261
        %v1730 = vpack.c.b16 %v1268, %v1262
        %v1731 = vpack.c.b16 %v1269, %v1263
        %v1732 = vpack.c.b16 %v1270, %v1264
        %v1733 = vpack.c.b16 %v1277, %v1271
        %v1734 = vpack.c.b16 %v1278, %v1272
        %v1735 = vpack.c.b16 %v1279, %v1273
        %v1736 = vpack.c.b16 %v1280, %v1274
        %v1737 = vpack.c.b16 %v1281, %v1275
        %v1738 = vpack.c.b16 %v1282, %v1276
        %v1739 = vpack.c.b16 %v1289, %v1283
        %v1740 = vpack.c.b16 %v1290, %v1284
        %v1741 = vpack.c.b16 %v1291, %v1285
        %v1742 = vpack.c.b16 %v1292, %v1286
        %v1743 = vpack.c.b16 %v1293, %v1287
        %v1744 = vpack.c.b16 %v1294, %v1288
        %v1745 = vpack.c.b16 %v1301, %v1295
        %v1746 = vpack.c.b16 %v1302, %v1296
        %v1747 = vpack.c.b16 %v1303, %v1297
        %v1748 = vpack.c.b16 %v1304, %v1298
        %v1749 = vpack.c.b16 %v1305, %v1299
        %v1750 = vpack.c.b16 %v1306, %v1300
        %v1751 = vpack.c.b16 %v1313, %v1307
        %v1752 = vpack.c.b16 %v1314, %v1308
        %v1753 = vpack.c.b16 %v1315, %v1309
        %v1754 = vpack.c.b16 %v1316, %v1310
        %v1755 = vpack.c.b16 %v1317, %v1311
        %v1756 = vpack.c.b16 %v1318, %v1312
        %v1757 = vpack.c.b16 %v1325, %v1319
        %v1758 = vpack.c.b16 %v1326, %v1320
        %v1759 = vpack.c.b16 %v1327, %v1321
        %v1760 = vpack.c.b16 %v1328, %v1322
        %v1761 = vpack.c.b16 %v1329, %v1323
        %v1762 = vpack.c.b16 %v1330, %v1324
        %v1763 = vpack.c.b16 %v1337, %v1331
        %v1764 = vpack.c.b16 %v1338, %v1332
        %v1765 = vpack.c.b16 %v1339, %v1333
        %v1766 = vpack.c.b16 %v1340, %v1334
        %v1767 = vpack.c.b16 %v1341, %v1335
        %v1768 = vpack.c.b16 %v1342, %v1336
        %v1769 = vpack.c.b16 %v1349, %v1343
        %v1770 = vpack.c.b16 %v1350, %v1344
        %v1771 = vpack.c.b16 %v1351, %v1345
        %v1772 = vpack.c.b16 %v1352, %v1346
        %v1773 = vpack.c.b16 %v1353, %v1347
        %v1774 = vpack.c.b16 %v1354, %v1348
        %v1775 = vpack.c.b16 %v1361, %v1355
        %v1776 = vpack.c.b16 %v1362, %v1356
        %v1777 = vpack.c.b16 %v1363, %v1357
        %v1778 = vpack.c.b16 %v1364, %v1358
        %v1779 = vpack.c.b16 %v1365, %v1359
        %v1780 = vpack.c.b16 %v1366, %v1360
        %v1781 = vpack.c.b16 %v1373, %v1367
        %v1782 = vpack.c.b16 %v1374, %v1368
        %v1783 = vpack.c.b16 %v1375, %v1369
        %v1784 = vpack.c.b16 %v1376, %v1370
        %v1785 = vpack.c.b16 %v1377, %v1371
        %v1786 = vpack.c.b16 %v1378, %v1372
        %v1787 = vpack.c.b16 %v1385, %v1379
        %v1788 = vpack.c.b16 %v1386, %v1380
        %v1789 = vpack.c.b16 %v1387, %v1381
        %v1790 = vpack.c.b16 %v1388, %v1382
        %v1791 = vpack.c.b16 %v1389, %v1383
        %v1792 = vpack.c.b16 %v1390, %v1384
        %v1793 = vpack.c.b16 %v1397, %v1391
        %v1794 = vpack.c.b16 %v1398, %v1392
        %v1795 = vpack.c.b16 %v1399, %v1393
        %v1796 = vpack.c.b16 %v1400, %v1394
        %v1797 = vpack.c.b16 %v1401, %v1395
        %v1798 = vpack.c.b16 %v1402, %v1396
        %v1799 = vpack.c.b16 %v1409, %v1403
        %v1800 = vpack.c.b16 %v1410, %v1404
        %v1801 = vpack.c.b16 %v1411, %v1405
        %v1802 = vpack.c.b16 %v1412, %v1406
        %v1803 = vpack.c.b16 %v1413, %v1407
        %v1804 = vpack.c.b16 %v1414, %v1408
        %v1805 = vpack.c.b16 %v1421, %v1415
        %v1806 = vpack.c.b16 %v1422, %v1416
        %v1807 = vpack.c.b16 %v1423, %v1417
        %v1808 = vpack.c.b16 %v1424, %v1418
        %v1809 = vpack.c.b16 %v1425, %v1419
        %v1810 = vpack.c.b16 %v1426, %v1420
        %v1811 = vpack.c.b16 %v1433, %v1427
        %v1812 = vpack.c.b16 %v1434, %v1428
        %v1813 = vpack.c.b16 %v1435, %v1429
        %v1814 = vpack.c.b16 %v1436, %v1430
        %v1815 = vpack.c.b16 %v1437, %v1431
        %v1816 = vpack.c.b16 %v1438, %v1432
        %v1817 = vpack.c.b16 %v1445, %v1439
        %v1818 = vpack.c.b16 %v1446, %v1440
        %v1819 = vpack.c.b16 %v1447, %v1441
        %v1820 = vpack.c.b16 %v1448, %v1442
        %v1821 = vpack.c.b16 %v1449, %v1443
        %v1822 = vpack.c.b16 %v1450, %v1444
        %v1823 = vpack.c.b16 %v1457, %v1451
        %v1824 = vpack.c.b16 %v1458, %v1452
        %v1825 = vpack.c.b16 %v1459, %v1453
        %v1826 = vpack.c.b16 %v1460, %v1454
        %v1827 = vpack.c.b16 %v1461, %v1455
        %v1828 = vpack.c.b16 %v1462, %v1456
        %v1829 = vpack.c.b16 %v1469, %v1463
        %v1830 = vpack.c.b16 %v1470, %v1464
        %v1831 = vpack.c.b16 %v1471, %v1465
        %v1832 = vpack.c.b16 %v1472, %v1466
        %v1833 = vpack.c.b16 %v1473, %v1467
        %v1834 = vpack.c.b16 %v1474, %v1468
        %v1835 = vpack.c.b16 %v1481, %v1475
        %v1836 = vpack.c.b16 %v1482, %v1476
        %v1837 = vpack.c.b16 %v1483, %v1477
        %v1838 = vpack.c.b16 %v1484, %v1478
        %v1839 = vpack.c.b16 %v1485, %v1479
        %v1840 = vpack.c.b16 %v1486, %v1480
        %v1841 = vpack.c.b16 %v1493, %v1487
        %v1842 = vpack.c.b16 %v1494, %v1488
        %v1843 = vpack.c.b16 %v1495, %v1489
        %v1844 = vpack.c.b16 %v1496, %v1490
        %v1845 = vpack.c.b16 %v1497, %v1491
        %v1846 = vpack.c.b16 %v1498, %v1492
        %v1847 = vpack.c.b16 %v1505, %v1499
        %v1848 = vpack.c.b16 %v1506, %v1500
        %v1849 = vpack.c.b16 %v1507, %v1501
        %v1850 = vpack.c.b16 %v1508, %v1502
        %v1851 = vpack.c.b16 %v1509, %v1503
        %v1852 = vpack.c.b16 %v1510, %v1504
        %v1853 = vpack.c.b16 %v1517, %v1511
        %v1854 = vpack.c.b16 %v1518, %v1512
        %v1855 = vpack.c.b16 %v1519, %v1513
        %v1856 = vpack.c.b16 %v1520, %v1514
        %v1857 = vpack.c.b16 %v1521, %v1515
        %v1858 = vpack.c.b16 %v1522, %v1516
        %v1859 = vpack.c.b16 %v1529, %v1523
        %v1860 = vpack.c.b16 %v1530, %v1524
        %v1861 = vpack.c.b16 %v1531, %v1525
        %v1862 = vpack.c.b16 %v1532, %v1526
        %v1863 = vpack.c.b16 %v1533, %v1527
        %v1864 = vpack.c.b16 %v1534, %v1528
        %v1865 = vpack.c.b16 %v1541, %v1535
        %v1866 = vpack.c.b16 %v1542, %v1536
        %v1867 = vpack.c.b16 %v1543, %v1537
        %v1868 = vpack.c.b16 %v1544, %v1538
        %v1869 = vpack.c.b16 %v1545, %v1539
        %v1870 = vpack.c.b16 %v1546, %v1540
        %v1871 = vpack.c.b16 %v1553, %v1547
        %v1872 = vpack.c.b16 %v1554, %v1548
        %v1873 = vpack.c.b16 %v1555, %v1549
        %v1874 = vpack.c.b16 %v1556, %v1550
        %v1875 = vpack.c.b16 %v1557, %v1551
        %v1876 = vpack.c.b16 %v1558, %v1552
        %v1877 = vpack.c.b16 %v1565, %v1559
        %v1878 = vpack.c.b16 %v1566, %v1560
        %v1879 = vpack.c.b16 %v1567, %v1561
        %v1880 = vpack.c.b16 %v1568, %v1562
        %v1881 = vpack.c.b16 %v1569, %v1563
        %v1882 = vpack.c.b16 %v1570, %v1564
        %v1883 = vpack.c.b16 %v1577, %v1571
        %v1884 = vpack.c.b16 %v1578, %v1572
        %v1885 = vpack.c.b16 %v1579, %v1573
        %v1886 = vpack.c.b16 %v1580, %v1574
        %v1887 = vpack.c.b16 %v1581, %v1575
        %v1888 = vpack.c.b16 %v1582, %v1576
        %v1889 = vpack.c.b16 %v1589, %v1583
        %v1890 = vpack.c.b16 %v1590, %v1584
        %v1891 = vpack.c.b16 %v1591, %v1585
        %v1892 = vpack.c.b16 %v1592, %v1586
        %v1893 = vpack.c.b16 %v1593, %v1587
        %v1894 = vpack.c.b16 %v1594, %v1588
        %v1895 = vpack.c.b16 %v1601, %v1595
        %v1896 = vpack.c.b16 %v1602, %v1596
        %v1897 = vpack.c.b16 %v1603, %v1597
        %v1898 = vpack.c.b16 %v1604, %v1598
        %v1899 = vpack.c.b16 %v1605, %v1599
        %v1900 = vpack.c.b16 %v1606, %v1600
        %v1901 = vpack.c.b16 %v1613, %v1607
        %v1902 = vpack.c.b16 %v1614, %v1608
        %v1903 = vpack.c.b16 %v1615, %v1609
        %v1904 = vpack.c.b16 %v1616, %v1610
        %v1905 = vpack.c.b16 %v1617, %v1611
        %v1906 = vpack.c.b16 %v1618, %v1612
        %2195 = vmatprep.subr.bf16.mxu0 %v1620
        %2196 = vmatpush1.bf16.msra.mxu0 %v1619
        %2197 = vmatprep.subr.bf16.mxu0 %v1626
        %2198 = vmatpush1.bf16.msra.mxu0 %v1625
        %2199 = vmatprep.subr.bf16.mxu0 %v1632
        %2200 = vmatpush1.bf16.msra.mxu0 %v1631
        %2201 = vmatprep.subr.bf16.mxu0 %v1638
        %2202 = vmatpush1.bf16.msra.mxu0 %v1637
        %2203 = vmatprep.subr.bf16.mxu0 %v1644
        %2204 = vmatpush1.bf16.msra.mxu0 %v1643
        %2205 = vmatprep.subr.bf16.mxu0 %v1650
        %2206 = vmatpush1.bf16.msra.mxu0 %v1649
        %2207 = vmatprep.subr.bf16.mxu0 %v1656
        %2208 = vmatpush1.bf16.msra.mxu0 %v1655
        %2209 = vmatprep.subr.bf16.mxu0 %v1662
        %2210 = vmatpush1.bf16.msra.mxu0 %v1661
        %2211 = vmatprep.subr.bf16.mxu0 %v1668
        %2212 = vmatpush1.bf16.msra.mxu0 %v1667
        %2213 = vmatprep.subr.bf16.mxu0 %v1674
        %2214 = vmatpush1.bf16.msra.mxu0 %v1673
        %2215 = vmatprep.subr.bf16.mxu0 %v1680
        %2216 = vmatpush1.bf16.msra.mxu0 %v1679
        %2217 = vmatprep.subr.bf16.mxu0 %v1686
        %2218 = vmatpush1.bf16.msra.mxu0 %v1685
        %2219 = vmatprep.subr.bf16.mxu0 %v1692
        %2220 = vmatpush1.bf16.msra.mxu0 %v1691
        %2221 = vmatprep.subr.bf16.mxu0 %v1698
        %2222 = vmatpush1.bf16.msra.mxu0 %v1697
        %2223 = vmatprep.subr.bf16.mxu0 %v1704
        %2224 = vmatpush1.bf16.msra.mxu0 %v1703
        %2225 = vmatprep.subr.bf16.mxu0 %v1710
        %2226 = vmatpush1.bf16.msra.mxu0 %v1709
        %2227 = vmatprep.mubr.bf16.mxu0 %v364
        %2228 = vmatmul.mubr.bf16.gmra.mrb[0].mxu0 %v363
        %v2229 = vpop.f32.mrb[0].mxu0
        %v2230 = vadd.f32 %v728, %v2229
        %v2231 = vpop.f32.mrb[0].mxu0
        %v2232 = vadd.f32 %v732, %v2231
        %v2233 = vpop.f32.mrb[0].mxu0
        %v2234 = vadd.f32 %v728, %v2233
        %v2235 = vpop.f32.mrb[0].mxu0
        %v2236 = vadd.f32 %v732, %v2235
        %2237 = vmatprep.mubr.bf16.mxu0 %v370
        %2238 = vmatmul.mubr.bf16.gmra.mrb[0].mxu0 %v369
        %v2239 = vpop.f32.mrb[0].mxu0
        %v2240 = vadd.f32 %v728, %v2239
        %v2241 = vpop.f32.mrb[0].mxu0
        %v2242 = vadd.f32 %v732, %v2241
        %v2243 = vpop.f32.mrb[0].mxu0
        %v2244 = vadd.f32 %v728, %v2243
        %v2245 = vpop.f32.mrb[0].mxu0
        %v2246 = vadd.f32 %v732, %v2245
        %2247 = vmatprep.mubr.bf16.mxu0 %v376
        %2248 = vmatmul.mubr.bf16.gmra.mrb[0].mxu0 %v375
        %v2249 = vpop.f32.mrb[0].mxu0
        %v2250 = vadd.f32 %v728, %v2249
        %v2251 = vpop.f32.mrb[0].mxu0
        %v2252 = vadd.f32 %v732, %v2251
        %v2253 = vpop.f32.mrb[0].mxu0
        %v2254 = vadd.f32 %v728, %v2253
        %v2255 = vpop.f32.mrb[0].mxu0
        %v2256 = vadd.f32 %v732, %v2255
        %2257 = vmatprep.mubr.bf16.mxu0 %v382
        %2258 = vmatmul.mubr.bf16.gmra.mrb[0].mxu0 %v381
        %v2259 = vpop.f32.mrb[0].mxu0
        %v2260 = vadd.f32 %v728, %v2259
        %v2261 = vpop.f32.mrb[0].mxu0
        %v2262 = vadd.f32 %v732, %v2261
        %v2263 = vpop.f32.mrb[0].mxu0
        %v2264 = vadd.f32 %v728, %v2263
        %v2265 = vpop.f32.mrb[0].mxu0
        %v2266 = vadd.f32 %v732, %v2265
        %2267 = vmatprep.mubr.bf16.mxu0 %v388
        %2268 = vmatmul.mubr.bf16.gmra.mrb[0].mxu0 %v387
        %v2269 = vpop.f32.mrb[0].mxu0
        %v2270 = vadd.f32 %v728, %v2269
        %v2271 = vpop.f32.mrb[0].mxu0
        %v2272 = vadd.f32 %v732, %v2271
        %v2273 = vpop.f32.mrb[0].mxu0
        %v2274 = vadd.f32 %v728, %v2273
        %v2275 = vpop.f32.mrb[0].mxu0
        %v2276 = vadd.f32 %v732, %v2275
        %2277 = vmatprep.mubr.bf16.mxu0 %v394
        %2278 = vmatmul.mubr.bf16.gmra.mrb[0].mxu0 %v393
        %v2279 = vpop.f32.mrb[0].mxu0
        %v2280 = vadd.f32 %v728, %v2279
        %v2281 = vpop.f32.mrb[0].mxu0
        %v2282 = vadd.f32 %v732, %v2281
        %v2283 = vpop.f32.mrb[0].mxu0
        %v2284 = vadd.f32 %v728, %v2283
        %v2285 = vpop.f32.mrb[0].mxu0
        %v2286 = vadd.f32 %v732, %v2285
        %2287 = vmatprep.mubr.bf16.mxu0 %v400
        %2288 = vmatmul.mubr.bf16.gmra.mrb[0].mxu0 %v399
        %v2289 = vpop.f32.mrb[0].mxu0
        %v2290 = vadd.f32 %v728, %v2289
        %v2291 = vpop.f32.mrb[0].mxu0
        %v2292 = vadd.f32 %v732, %v2291
        %v2293 = vpop.f32.mrb[0].mxu0
        %v2294 = vadd.f32 %v728, %v2293
        %v2295 = vpop.f32.mrb[0].mxu0
        %v2296 = vadd.f32 %v732, %v2295
        %2297 = vmatprep.mubr.bf16.mxu0 %v406
        %2298 = vmatmul.mubr.bf16.gmra.mrb[0].mxu0 %v405
        %v2299 = vpop.f32.mrb[0].mxu0
        %v2300 = vadd.f32 %v728, %v2299
        %v2301 = vpop.f32.mrb[0].mxu0
        %v2302 = vadd.f32 %v732, %v2301
        %v2303 = vpop.f32.mrb[0].mxu0
        %v2304 = vadd.f32 %v728, %v2303
        %v2305 = vpop.f32.mrb[0].mxu0
        %v2306 = vadd.f32 %v732, %v2305
        %2307 = vmatprep.mubr.bf16.mxu0 %v412
        %2308 = vmatmul.mubr.bf16.gmra.mrb[0].mxu0 %v411
        %v2309 = vpop.f32.mrb[0].mxu0
        %v2310 = vadd.f32 %v728, %v2309
        %v2311 = vpop.f32.mrb[0].mxu0
        %v2312 = vadd.f32 %v732, %v2311
        %v2313 = vpop.f32.mrb[0].mxu0
        %v2314 = vadd.f32 %v728, %v2313
        %v2315 = vpop.f32.mrb[0].mxu0
        %v2316 = vadd.f32 %v732, %v2315
        %2317 = vmatprep.mubr.bf16.mxu0 %v418
        %2318 = vmatmul.mubr.bf16.gmra.mrb[0].mxu0 %v417
        %v2319 = vpop.f32.mrb[0].mxu0
        %v2320 = vadd.f32 %v728, %v2319
        %v2321 = vpop.f32.mrb[0].mxu0
        %v2322 = vadd.f32 %v732, %v2321
        %v2323 = vpop.f32.mrb[0].mxu0
        %v2324 = vadd.f32 %v728, %v2323
        %v2325 = vpop.f32.mrb[0].mxu0
        %v2326 = vadd.f32 %v732, %v2325
        %2327 = vmatprep.mubr.bf16.mxu0 %v424
        %2328 = vmatmul.mubr.bf16.gmra.mrb[0].mxu0 %v423
        %v2329 = vpop.f32.mrb[0].mxu0
        %v2330 = vadd.f32 %v728, %v2329
        %v2331 = vpop.f32.mrb[0].mxu0
        %v2332 = vadd.f32 %v732, %v2331
        %v2333 = vpop.f32.mrb[0].mxu0
        %v2334 = vadd.f32 %v728, %v2333
        %v2335 = vpop.f32.mrb[0].mxu0
        %v2336 = vadd.f32 %v732, %v2335
        %2337 = vmatprep.mubr.bf16.mxu0 %v430
        %2338 = vmatmul.mubr.bf16.gmra.mrb[0].mxu0 %v429
        %v2339 = vpop.f32.mrb[0].mxu0
        %v2340 = vadd.f32 %v728, %v2339
        %v2341 = vpop.f32.mrb[0].mxu0
        %v2342 = vadd.f32 %v732, %v2341
        %v2343 = vpop.f32.mrb[0].mxu0
        %v2344 = vadd.f32 %v728, %v2343
        %v2345 = vpop.f32.mrb[0].mxu0
        %v2346 = vadd.f32 %v732, %v2345
        %2347 = vdwg.mxu0
        %2348 = vmatprep.subr.bf16.mxu0 %v1716
        %2349 = vmatpush1.bf16.msra.mxu0 %v1715
        %2350 = vmatprep.subr.bf16.mxu0 %v1722
        %2351 = vmatpush1.bf16.msra.mxu0 %v1721
        %2352 = vmatprep.subr.bf16.mxu0 %v1728
        %2353 = vmatpush1.bf16.msra.mxu0 %v1727
        %2354 = vmatprep.subr.bf16.mxu0 %v1734
        %2355 = vmatpush1.bf16.msra.mxu0 %v1733
        %2356 = vmatprep.subr.bf16.mxu0 %v1740
        %2357 = vmatpush1.bf16.msra.mxu0 %v1739
        %2358 = vmatprep.subr.bf16.mxu0 %v1746
        %2359 = vmatpush1.bf16.msra.mxu0 %v1745
        %2360 = vmatprep.subr.bf16.mxu0 %v1752
        %2361 = vmatpush1.bf16.msra.mxu0 %v1751
        %2362 = vmatprep.subr.bf16.mxu0 %v1758
        %2363 = vmatpush1.bf16.msra.mxu0 %v1757
        %2364 = vmatprep.subr.bf16.mxu0 %v1764
        %2365 = vmatpush1.bf16.msra.mxu0 %v1763
        %2366 = vmatprep.subr.bf16.mxu0 %v1770
        %2367 = vmatpush1.bf16.msra.mxu0 %v1769
        %2368 = vmatprep.subr.bf16.mxu0 %v1776
        %2369 = vmatpush1.bf16.msra.mxu0 %v1775
        %2370 = vmatprep.subr.bf16.mxu0 %v1782
        %2371 = vmatpush1.bf16.msra.mxu0 %v1781
        %2372 = vmatprep.subr.bf16.mxu0 %v1788
        %2373 = vmatpush1.bf16.msra.mxu0 %v1787
        %2374 = vmatprep.subr.bf16.mxu0 %v1794
        %2375 = vmatpush1.bf16.msra.mxu0 %v1793
        %2376 = vmatprep.subr.bf16.mxu0 %v1800
        %2377 = vmatpush1.bf16.msra.mxu0 %v1799
        %2378 = vmatprep.subr.bf16.mxu0 %v1806
        %2379 = vmatpush1.bf16.msra.mxu0 %v1805
        %2380 = vmatprep.mubr.bf16.mxu0 %v366
        %2381 = vmatmul.mubr.bf16.gmra.mrb[0].mxu0 %v365
        %v2382 = vpop.f32.mrb[0].mxu0
        %v2383 = vadd.f32 %v2230, %v2382
        %v2384 = vpop.f32.mrb[0].mxu0
        %v2385 = vadd.f32 %v2232, %v2384
        %v2386 = vpop.f32.mrb[0].mxu0
        %v2387 = vadd.f32 %v2234, %v2386
        %v2388 = vpop.f32.mrb[0].mxu0
        %v2389 = vadd.f32 %v2236, %v2388
        %2390 = vmatprep.mubr.bf16.mxu0 %v372
        %2391 = vmatmul.mubr.bf16.gmra.mrb[0].mxu0 %v371
        %v2392 = vpop.f32.mrb[0].mxu0
        %v2393 = vadd.f32 %v2240, %v2392
        %v2394 = vpop.f32.mrb[0].mxu0
        %v2395 = vadd.f32 %v2242, %v2394
        %v2396 = vpop.f32.mrb[0].mxu0
        %v2397 = vadd.f32 %v2244, %v2396
        %v2398 = vpop.f32.mrb[0].mxu0
        %v2399 = vadd.f32 %v2246, %v2398
        %2400 = vmatprep.mubr.bf16.mxu0 %v378
        %2401 = vmatmul.mubr.bf16.gmra.mrb[0].mxu0 %v377
        %v2402 = vpop.f32.mrb[0].mxu0
        %v2403 = vadd.f32 %v2250, %v2402
        %v2404 = vpop.f32.mrb[0].mxu0
        %v2405 = vadd.f32 %v2252, %v2404
        %v2406 = vpop.f32.mrb[0].mxu0
        %v2407 = vadd.f32 %v2254, %v2406
        %v2408 = vpop.f32.mrb[0].mxu0
        %v2409 = vadd.f32 %v2256, %v2408
        %2410 = vmatprep.mubr.bf16.mxu0 %v384
        %2411 = vmatmul.mubr.bf16.gmra.mrb[0].mxu0 %v383
        %v2412 = vpop.f32.mrb[0].mxu0
        %v2413 = vadd.f32 %v2260, %v2412
        %v2414 = vpop.f32.mrb[0].mxu0
        %v2415 = vadd.f32 %v2262, %v2414
        %v2416 = vpop.f32.mrb[0].mxu0
        %v2417 = vadd.f32 %v2264, %v2416
        %v2418 = vpop.f32.mrb[0].mxu0
        %v2419 = vadd.f32 %v2266, %v2418
        %2420 = vmatprep.mubr.bf16.mxu0 %v390
        %2421 = vmatmul.mubr.bf16.gmra.mrb[0].mxu0 %v389
        %v2422 = vpop.f32.mrb[0].mxu0
        %v2423 = vadd.f32 %v2270, %v2422
        %v2424 = vpop.f32.mrb[0].mxu0
        %v2425 = vadd.f32 %v2272, %v2424
        %v2426 = vpop.f32.mrb[0].mxu0
        %v2427 = vadd.f32 %v2274, %v2426
        %v2428 = vpop.f32.mrb[0].mxu0
        %v2429 = vadd.f32 %v2276, %v2428
        %2430 = vmatprep.mubr.bf16.mxu0 %v396
        %2431 = vmatmul.mubr.bf16.gmra.mrb[0].mxu0 %v395
        %v2432 = vpop.f32.mrb[0].mxu0
        %v2433 = vadd.f32 %v2280, %v2432
        %v2434 = vpop.f32.mrb[0].mxu0
        %v2435 = vadd.f32 %v2282, %v2434
        %v2436 = vpop.f32.mrb[0].mxu0
        %v2437 = vadd.f32 %v2284, %v2436
        %v2438 = vpop.f32.mrb[0].mxu0
        %v2439 = vadd.f32 %v2286, %v2438
        %2440 = vmatprep.mubr.bf16.mxu0 %v402
        %2441 = vmatmul.mubr.bf16.gmra.mrb[0].mxu0 %v401
        %v2442 = vpop.f32.mrb[0].mxu0
        %v2443 = vadd.f32 %v2290, %v2442
        %v2444 = vpop.f32.mrb[0].mxu0
        %v2445 = vadd.f32 %v2292, %v2444
        %v2446 = vpop.f32.mrb[0].mxu0
        %v2447 = vadd.f32 %v2294, %v2446
        %v2448 = vpop.f32.mrb[0].mxu0
        %v2449 = vadd.f32 %v2296, %v2448
        %2450 = vmatprep.mubr.bf16.mxu0 %v408
        %2451 = vmatmul.mubr.bf16.gmra.mrb[0].mxu0 %v407
        %v2452 = vpop.f32.mrb[0].mxu0
        %v2453 = vadd.f32 %v2300, %v2452
        %v2454 = vpop.f32.mrb[0].mxu0
        %v2455 = vadd.f32 %v2302, %v2454
        %v2456 = vpop.f32.mrb[0].mxu0
        %v2457 = vadd.f32 %v2304, %v2456
        %v2458 = vpop.f32.mrb[0].mxu0
        %v2459 = vadd.f32 %v2306, %v2458
        %2460 = vmatprep.mubr.bf16.mxu0 %v414
        %2461 = vmatmul.mubr.bf16.gmra.mrb[0].mxu0 %v413
        %v2462 = vpop.f32.mrb[0].mxu0
        %v2463 = vadd.f32 %v2310, %v2462
        %v2464 = vpop.f32.mrb[0].mxu0
        %v2465 = vadd.f32 %v2312, %v2464
        %v2466 = vpop.f32.mrb[0].mxu0
        %v2467 = vadd.f32 %v2314, %v2466
        %v2468 = vpop.f32.mrb[0].mxu0
        %v2469 = vadd.f32 %v2316, %v2468
        %2470 = vmatprep.mubr.bf16.mxu0 %v420
        %2471 = vmatmul.mubr.bf16.gmra.mrb[0].mxu0 %v419
        %v2472 = vpop.f32.mrb[0].mxu0
        %v2473 = vadd.f32 %v2320, %v2472
        %v2474 = vpop.f32.mrb[0].mxu0
        %v2475 = vadd.f32 %v2322, %v2474
        %v2476 = vpop.f32.mrb[0].mxu0
        %v2477 = vadd.f32 %v2324, %v2476
        %v2478 = vpop.f32.mrb[0].mxu0
        %v2479 = vadd.f32 %v2326, %v2478
        %2480 = vmatprep.mubr.bf16.mxu0 %v426
        %2481 = vmatmul.mubr.bf16.gmra.mrb[0].mxu0 %v425
        %v2482 = vpop.f32.mrb[0].mxu0
        %v2483 = vadd.f32 %v2330, %v2482
        %v2484 = vpop.f32.mrb[0].mxu0
        %v2485 = vadd.f32 %v2332, %v2484
        %v2486 = vpop.f32.mrb[0].mxu0
        %v2487 = vadd.f32 %v2334, %v2486
        %v2488 = vpop.f32.mrb[0].mxu0
        %v2489 = vadd.f32 %v2336, %v2488
        %2490 = vmatprep.mubr.bf16.mxu0 %v432
        %2491 = vmatmul.mubr.bf16.gmra.mrb[0].mxu0 %v431
        %v2492 = vpop.f32.mrb[0].mxu0
        %v2493 = vadd.f32 %v2340, %v2492
        %v2494 = vpop.f32.mrb[0].mxu0
        %v2495 = vadd.f32 %v2342, %v2494
        %v2496 = vpop.f32.mrb[0].mxu0
        %v2497 = vadd.f32 %v2344, %v2496
        %v2498 = vpop.f32.mrb[0].mxu0
        %v2499 = vadd.f32 %v2346, %v2498
        %2500 = vdwg.mxu0
        %2501 = vmatprep.subr.bf16.mxu0 %v1812
        %2502 = vmatpush1.bf16.msra.mxu0 %v1811
        %2503 = vmatprep.subr.bf16.mxu0 %v1818
        %2504 = vmatpush1.bf16.msra.mxu0 %v1817
        %2505 = vmatprep.subr.bf16.mxu0 %v1824
        %2506 = vmatpush1.bf16.msra.mxu0 %v1823
        %2507 = vmatprep.subr.bf16.mxu0 %v1830
        %2508 = vmatpush1.bf16.msra.mxu0 %v1829
        %2509 = vmatprep.subr.bf16.mxu0 %v1836
        %2510 = vmatpush1.bf16.msra.mxu0 %v1835
        %2511 = vmatprep.subr.bf16.mxu0 %v1842
        %2512 = vmatpush1.bf16.msra.mxu0 %v1841
        %2513 = vmatprep.subr.bf16.mxu0 %v1848
        %2514 = vmatpush1.bf16.msra.mxu0 %v1847
        %2515 = vmatprep.subr.bf16.mxu0 %v1854
        %2516 = vmatpush1.bf16.msra.mxu0 %v1853
        %2517 = vmatprep.subr.bf16.mxu0 %v1860
        %2518 = vmatpush1.bf16.msra.mxu0 %v1859
        %2519 = vmatprep.subr.bf16.mxu0 %v1866
        %2520 = vmatpush1.bf16.msra.mxu0 %v1865
        %2521 = vmatprep.subr.bf16.mxu0 %v1872
        %2522 = vmatpush1.bf16.msra.mxu0 %v1871
        %2523 = vmatprep.subr.bf16.mxu0 %v1878
        %2524 = vmatpush1.bf16.msra.mxu0 %v1877
        %2525 = vmatprep.subr.bf16.mxu0 %v1884
        %2526 = vmatpush1.bf16.msra.mxu0 %v1883
        %2527 = vmatprep.subr.bf16.mxu0 %v1890
        %2528 = vmatpush1.bf16.msra.mxu0 %v1889
        %2529 = vmatprep.subr.bf16.mxu0 %v1896
        %2530 = vmatpush1.bf16.msra.mxu0 %v1895
        %2531 = vmatprep.subr.bf16.mxu0 %v1902
        %2532 = vmatpush1.bf16.msra.mxu0 %v1901
        %2533 = vmatprep.mubr.bf16.mxu0 %v368
        %2534 = vmatmul.mubr.bf16.gmra.mrb[0].mxu0 %v367
        %v2535 = vpop.f32.mrb[0].mxu0
        %v2536 = vadd.f32 %v2383, %v2535
        %v2537 = vpop.f32.mrb[0].mxu0
        %v2538 = vadd.f32 %v2385, %v2537
        %v2539 = vpop.f32.mrb[0].mxu0
        %v2540 = vadd.f32 %v2387, %v2539
        %v2541 = vpop.f32.mrb[0].mxu0
        %v2542 = vadd.f32 %v2389, %v2541
        %2543 = vmatprep.mubr.bf16.mxu0 %v374
        %2544 = vmatmul.mubr.bf16.gmra.mrb[0].mxu0 %v373
        %v2545 = vpop.f32.mrb[0].mxu0
        %v2546 = vadd.f32 %v2393, %v2545
        %v2547 = vpop.f32.mrb[0].mxu0
        %v2548 = vadd.f32 %v2395, %v2547
        %v2549 = vpop.f32.mrb[0].mxu0
        %v2550 = vadd.f32 %v2397, %v2549
        %v2551 = vpop.f32.mrb[0].mxu0
        %v2552 = vadd.f32 %v2399, %v2551
        %2553 = vmatprep.mubr.bf16.mxu0 %v380
        %2554 = vmatmul.mubr.bf16.gmra.mrb[0].mxu0 %v379
        %v2555 = vpop.f32.mrb[0].mxu0
        %v2556 = vadd.f32 %v2403, %v2555
        %v2557 = vpop.f32.mrb[0].mxu0
        %v2558 = vadd.f32 %v2405, %v2557
        %v2559 = vpop.f32.mrb[0].mxu0
        %v2560 = vadd.f32 %v2407, %v2559
        %v2561 = vpop.f32.mrb[0].mxu0
        %v2562 = vadd.f32 %v2409, %v2561
        %2563 = vmatprep.mubr.bf16.mxu0 %v386
        %2564 = vmatmul.mubr.bf16.gmra.mrb[0].mxu0 %v385
        %v2565 = vpop.f32.mrb[0].mxu0
        %v2566 = vadd.f32 %v2413, %v2565
        %v2567 = vpop.f32.mrb[0].mxu0
        %v2568 = vadd.f32 %v2415, %v2567
        %v2569 = vpop.f32.mrb[0].mxu0
        %v2570 = vadd.f32 %v2417, %v2569
        %v2571 = vpop.f32.mrb[0].mxu0
        %v2572 = vadd.f32 %v2419, %v2571
        %2573 = vmatprep.mubr.bf16.mxu0 %v392
        %2574 = vmatmul.mubr.bf16.gmra.mrb[0].mxu0 %v391
        %v2575 = vpop.f32.mrb[0].mxu0
        %v2576 = vadd.f32 %v2423, %v2575
        %v2577 = vpop.f32.mrb[0].mxu0
        %v2578 = vadd.f32 %v2425, %v2577
        %v2579 = vpop.f32.mrb[0].mxu0
        %v2580 = vadd.f32 %v2427, %v2579
        %v2581 = vpop.f32.mrb[0].mxu0
        %v2582 = vadd.f32 %v2429, %v2581
        %2583 = vmatprep.mubr.bf16.mxu0 %v398
        %2584 = vmatmul.mubr.bf16.gmra.mrb[0].mxu0 %v397
        %v2585 = vpop.f32.mrb[0].mxu0
        %v2586 = vadd.f32 %v2433, %v2585
        %v2587 = vpop.f32.mrb[0].mxu0
        %v2588 = vadd.f32 %v2435, %v2587
        %v2589 = vpop.f32.mrb[0].mxu0
        %v2590 = vadd.f32 %v2437, %v2589
        %v2591 = vpop.f32.mrb[0].mxu0
        %v2592 = vadd.f32 %v2439, %v2591
        %2593 = vmatprep.mubr.bf16.mxu0 %v404
        %2594 = vmatmul.mubr.bf16.gmra.mrb[0].mxu0 %v403
        %v2595 = vpop.f32.mrb[0].mxu0
        %v2596 = vadd.f32 %v2443, %v2595
        %v2597 = vpop.f32.mrb[0].mxu0
        %v2598 = vadd.f32 %v2445, %v2597
        %v2599 = vpop.f32.mrb[0].mxu0
        %v2600 = vadd.f32 %v2447, %v2599
        %v2601 = vpop.f32.mrb[0].mxu0
        %v2602 = vadd.f32 %v2449, %v2601
        %2603 = vmatprep.mubr.bf16.mxu0 %v410
        %2604 = vmatmul.mubr.bf16.gmra.mrb[0].mxu0 %v409
        %v2605 = vpop.f32.mrb[0].mxu0
        %v2606 = vadd.f32 %v2453, %v2605
        %v2607 = vpop.f32.mrb[0].mxu0
        %v2608 = vadd.f32 %v2455, %v2607
        %v2609 = vpop.f32.mrb[0].mxu0
        %v2610 = vadd.f32 %v2457, %v2609
        %v2611 = vpop.f32.mrb[0].mxu0
        %v2612 = vadd.f32 %v2459, %v2611
        %2613 = vmatprep.mubr.bf16.mxu0 %v416
        %2614 = vmatmul.mubr.bf16.gmra.mrb[0].mxu0 %v415
        %v2615 = vpop.f32.mrb[0].mxu0
        %v2616 = vadd.f32 %v2463, %v2615
        %v2617 = vpop.f32.mrb[0].mxu0
        %v2618 = vadd.f32 %v2465, %v2617
        %v2619 = vpop.f32.mrb[0].mxu0
        %v2620 = vadd.f32 %v2467, %v2619
        %v2621 = vpop.f32.mrb[0].mxu0
        %v2622 = vadd.f32 %v2469, %v2621
        %2623 = vmatprep.mubr.bf16.mxu0 %v422
        %2624 = vmatmul.mubr.bf16.gmra.mrb[0].mxu0 %v421
        %v2625 = vpop.f32.mrb[0].mxu0
        %v2626 = vadd.f32 %v2473, %v2625
        %v2627 = vpop.f32.mrb[0].mxu0
        %v2628 = vadd.f32 %v2475, %v2627
        %v2629 = vpop.f32.mrb[0].mxu0
        %v2630 = vadd.f32 %v2477, %v2629
        %v2631 = vpop.f32.mrb[0].mxu0
        %v2632 = vadd.f32 %v2479, %v2631
        %2633 = vmatprep.mubr.bf16.mxu0 %v428
        %2634 = vmatmul.mubr.bf16.gmra.mrb[0].mxu0 %v427
        %v2635 = vpop.f32.mrb[0].mxu0
        %v2636 = vadd.f32 %v2483, %v2635
        %v2637 = vpop.f32.mrb[0].mxu0
        %v2638 = vadd.f32 %v2485, %v2637
        %v2639 = vpop.f32.mrb[0].mxu0
        %v2640 = vadd.f32 %v2487, %v2639
        %v2641 = vpop.f32.mrb[0].mxu0
        %v2642 = vadd.f32 %v2489, %v2641
        %2643 = vmatprep.mubr.bf16.mxu0 %v434
        %2644 = vmatmul.mubr.bf16.gmra.mrb[0].mxu0 %v433
        %v2645 = vpop.f32.mrb[0].mxu0
        %v2646 = vadd.f32 %v2493, %v2645
        %v2647 = vpop.f32.mrb[0].mxu0
        %v2648 = vadd.f32 %v2495, %v2647
        %v2649 = vpop.f32.mrb[0].mxu0
        %v2650 = vadd.f32 %v2497, %v2649
        %v2651 = vpop.f32.mrb[0].mxu0
        %v2652 = vadd.f32 %v2499, %v2651
        %2653 = vdwg.mxu0
        %2654 = vmatprep.subr.bf16.mxu0 %v1622
        %2655 = vmatpush1.bf16.msra.mxu0 %v1621
        %2656 = vmatprep.subr.bf16.mxu0 %v1628
        %2657 = vmatpush1.bf16.msra.mxu0 %v1627
        %2658 = vmatprep.subr.bf16.mxu0 %v1634
        %2659 = vmatpush1.bf16.msra.mxu0 %v1633
        %2660 = vmatprep.subr.bf16.mxu0 %v1640
        %2661 = vmatpush1.bf16.msra.mxu0 %v1639
        %2662 = vmatprep.subr.bf16.mxu0 %v1646
        %2663 = vmatpush1.bf16.msra.mxu0 %v1645
        %2664 = vmatprep.subr.bf16.mxu0 %v1652
        %2665 = vmatpush1.bf16.msra.mxu0 %v1651
        %2666 = vmatprep.subr.bf16.mxu0 %v1658
        %2667 = vmatpush1.bf16.msra.mxu0 %v1657
        %2668 = vmatprep.subr.bf16.mxu0 %v1664
        %2669 = vmatpush1.bf16.msra.mxu0 %v1663
        %2670 = vmatprep.subr.bf16.mxu0 %v1670
        %2671 = vmatpush1.bf16.msra.mxu0 %v1669
        %2672 = vmatprep.subr.bf16.mxu0 %v1676
        %2673 = vmatpush1.bf16.msra.mxu0 %v1675
        %2674 = vmatprep.subr.bf16.mxu0 %v1682
        %2675 = vmatpush1.bf16.msra.mxu0 %v1681
        %2676 = vmatprep.subr.bf16.mxu0 %v1688
        %2677 = vmatpush1.bf16.msra.mxu0 %v1687
        %2678 = vmatprep.subr.bf16.mxu0 %v1694
        %2679 = vmatpush1.bf16.msra.mxu0 %v1693
        %2680 = vmatprep.subr.bf16.mxu0 %v1700
        %2681 = vmatpush1.bf16.msra.mxu0 %v1699
        %2682 = vmatprep.subr.bf16.mxu0 %v1706
        %2683 = vmatpush1.bf16.msra.mxu0 %v1705
        %2684 = vmatprep.subr.bf16.mxu0 %v1712
        %2685 = vmatpush1.bf16.msra.mxu0 %v1711
        %2686 = vmatprep.mubr.bf16.mxu0 %v364
        %2687 = vmatmul.mubr.bf16.gmra.mrb[0].mxu0 %v363
        %v2688 = vpop.f32.mrb[0].mxu0
        %v2689 = vadd.f32 %v736, %v2688
        %v2690 = vpop.f32.mrb[0].mxu0
        %v2691 = vadd.f32 %v740, %v2690
        %v2692 = vpop.f32.mrb[0].mxu0
        %v2693 = vadd.f32 %v736, %v2692
        %v2694 = vpop.f32.mrb[0].mxu0
        %v2695 = vadd.f32 %v740, %v2694
        %2696 = vmatprep.mubr.bf16.mxu0 %v370
        %2697 = vmatmul.mubr.bf16.gmra.mrb[0].mxu0 %v369
        %v2698 = vpop.f32.mrb[0].mxu0
        %v2699 = vadd.f32 %v736, %v2698
        %v2700 = vpop.f32.mrb[0].mxu0
        %v2701 = vadd.f32 %v740, %v2700
        %v2702 = vpop.f32.mrb[0].mxu0
        %v2703 = vadd.f32 %v736, %v2702
        %v2704 = vpop.f32.mrb[0].mxu0
        %v2705 = vadd.f32 %v740, %v2704
        %2706 = vmatprep.mubr.bf16.mxu0 %v376
        %2707 = vmatmul.mubr.bf16.gmra.mrb[0].mxu0 %v375
        %v2708 = vpop.f32.mrb[0].mxu0
        %v2709 = vadd.f32 %v736, %v2708
        %v2710 = vpop.f32.mrb[0].mxu0
        %v2711 = vadd.f32 %v740, %v2710
        %v2712 = vpop.f32.mrb[0].mxu0
        %v2713 = vadd.f32 %v736, %v2712
        %v2714 = vpop.f32.mrb[0].mxu0
        %v2715 = vadd.f32 %v740, %v2714
        %2716 = vmatprep.mubr.bf16.mxu0 %v382
        %2717 = vmatmul.mubr.bf16.gmra.mrb[0].mxu0 %v381
        %v2718 = vpop.f32.mrb[0].mxu0
        %v2719 = vadd.f32 %v736, %v2718
        %v2720 = vpop.f32.mrb[0].mxu0
        %v2721 = vadd.f32 %v740, %v2720
        %v2722 = vpop.f32.mrb[0].mxu0
        %v2723 = vadd.f32 %v736, %v2722
        %v2724 = vpop.f32.mrb[0].mxu0
        %v2725 = vadd.f32 %v740, %v2724
        %2726 = vmatprep.mubr.bf16.mxu0 %v388
        %2727 = vmatmul.mubr.bf16.gmra.mrb[0].mxu0 %v387
        %v2728 = vpop.f32.mrb[0].mxu0
        %v2729 = vadd.f32 %v736, %v2728
        %v2730 = vpop.f32.mrb[0].mxu0
        %v2731 = vadd.f32 %v740, %v2730
        %v2732 = vpop.f32.mrb[0].mxu0
        %v2733 = vadd.f32 %v736, %v2732
        %v2734 = vpop.f32.mrb[0].mxu0
        %v2735 = vadd.f32 %v740, %v2734
        %2736 = vmatprep.mubr.bf16.mxu0 %v394
        %2737 = vmatmul.mubr.bf16.gmra.mrb[0].mxu0 %v393
        %v2738 = vpop.f32.mrb[0].mxu0
        %v2739 = vadd.f32 %v736, %v2738
        %v2740 = vpop.f32.mrb[0].mxu0
        %v2741 = vadd.f32 %v740, %v2740
        %v2742 = vpop.f32.mrb[0].mxu0
        %v2743 = vadd.f32 %v736, %v2742
        %v2744 = vpop.f32.mrb[0].mxu0
        %v2745 = vadd.f32 %v740, %v2744
        %2746 = vmatprep.mubr.bf16.mxu0 %v400
        %2747 = vmatmul.mubr.bf16.gmra.mrb[0].mxu0 %v399
        %v2748 = vpop.f32.mrb[0].mxu0
        %v2749 = vadd.f32 %v736, %v2748
        %v2750 = vpop.f32.mrb[0].mxu0
        %v2751 = vadd.f32 %v740, %v2750
        %v2752 = vpop.f32.mrb[0].mxu0
        %v2753 = vadd.f32 %v736, %v2752
        %v2754 = vpop.f32.mrb[0].mxu0
        %v2755 = vadd.f32 %v740, %v2754
        %2756 = vmatprep.mubr.bf16.mxu0 %v406
        %2757 = vmatmul.mubr.bf16.gmra.mrb[0].mxu0 %v405
        %v2758 = vpop.f32.mrb[0].mxu0
        %v2759 = vadd.f32 %v736, %v2758
        %v2760 = vpop.f32.mrb[0].mxu0
        %v2761 = vadd.f32 %v740, %v2760
        %v2762 = vpop.f32.mrb[0].mxu0
        %v2763 = vadd.f32 %v736, %v2762
        %v2764 = vpop.f32.mrb[0].mxu0
        %v2765 = vadd.f32 %v740, %v2764
        %2766 = vmatprep.mubr.bf16.mxu0 %v412
        %2767 = vmatmul.mubr.bf16.gmra.mrb[0].mxu0 %v411
        %v2768 = vpop.f32.mrb[0].mxu0
        %v2769 = vadd.f32 %v736, %v2768
        %v2770 = vpop.f32.mrb[0].mxu0
        %v2771 = vadd.f32 %v740, %v2770
        %v2772 = vpop.f32.mrb[0].mxu0
        %v2773 = vadd.f32 %v736, %v2772
        %v2774 = vpop.f32.mrb[0].mxu0
        %v2775 = vadd.f32 %v740, %v2774
        %2776 = vmatprep.mubr.bf16.mxu0 %v418
        %2777 = vmatmul.mubr.bf16.gmra.mrb[0].mxu0 %v417
        %v2778 = vpop.f32.mrb[0].mxu0
        %v2779 = vadd.f32 %v736, %v2778
        %v2780 = vpop.f32.mrb[0].mxu0
        %v2781 = vadd.f32 %v740, %v2780
        %v2782 = vpop.f32.mrb[0].mxu0
        %v2783 = vadd.f32 %v736, %v2782
        %v2784 = vpop.f32.mrb[0].mxu0
        %v2785 = vadd.f32 %v740, %v2784
        %2786 = vmatprep.mubr.bf16.mxu0 %v424
        %2787 = vmatmul.mubr.bf16.gmra.mrb[0].mxu0 %v423
        %v2788 = vpop.f32.mrb[0].mxu0
        %v2789 = vadd.f32 %v736, %v2788
        %v2790 = vpop.f32.mrb[0].mxu0
        %v2791 = vadd.f32 %v740, %v2790
        %v2792 = vpop.f32.mrb[0].mxu0
        %v2793 = vadd.f32 %v736, %v2792
        %v2794 = vpop.f32.mrb[0].mxu0
        %v2795 = vadd.f32 %v740, %v2794
        %2796 = vmatprep.mubr.bf16.mxu0 %v430
        %2797 = vmatmul.mubr.bf16.gmra.mrb[0].mxu0 %v429
        %v2798 = vpop.f32.mrb[0].mxu0
        %v2799 = vadd.f32 %v736, %v2798
        %v2800 = vpop.f32.mrb[0].mxu0
        %v2801 = vadd.f32 %v740, %v2800
        %v2802 = vpop.f32.mrb[0].mxu0
        %v2803 = vadd.f32 %v736, %v2802
        %v2804 = vpop.f32.mrb[0].mxu0
        %v2805 = vadd.f32 %v740, %v2804
        %2806 = vdwg.mxu0
        %2807 = vmatprep.subr.bf16.mxu0 %v1718
        %2808 = vmatpush1.bf16.msra.mxu0 %v1717
        %2809 = vmatprep.subr.bf16.mxu0 %v1724
        %2810 = vmatpush1.bf16.msra.mxu0 %v1723
        %2811 = vmatprep.subr.bf16.mxu0 %v1730
        %2812 = vmatpush1.bf16.msra.mxu0 %v1729
        %2813 = vmatprep.subr.bf16.mxu0 %v1736
        %2814 = vmatpush1.bf16.msra.mxu0 %v1735
        %2815 = vmatprep.subr.bf16.mxu0 %v1742
        %2816 = vmatpush1.bf16.msra.mxu0 %v1741
        %2817 = vmatprep.subr.bf16.mxu0 %v1748
        %2818 = vmatpush1.bf16.msra.mxu0 %v1747
        %2819 = vmatprep.subr.bf16.mxu0 %v1754
        %2820 = vmatpush1.bf16.msra.mxu0 %v1753
        %2821 = vmatprep.subr.bf16.mxu0 %v1760
        %2822 = vmatpush1.bf16.msra.mxu0 %v1759
        %2823 = vmatprep.subr.bf16.mxu0 %v1766
        %2824 = vmatpush1.bf16.msra.mxu0 %v1765
        %2825 = vmatprep.subr.bf16.mxu0 %v1772
        %2826 = vmatpush1.bf16.msra.mxu0 %v1771
        %2827 = vmatprep.subr.bf16.mxu0 %v1778
        %2828 = vmatpush1.bf16.msra.mxu0 %v1777
        %2829 = vmatprep.subr.bf16.mxu0 %v1784
        %2830 = vmatpush1.bf16.msra.mxu0 %v1783
        %2831 = vmatprep.subr.bf16.mxu0 %v1790
        %2832 = vmatpush1.bf16.msra.mxu0 %v1789
        %2833 = vmatprep.subr.bf16.mxu0 %v1796
        %2834 = vmatpush1.bf16.msra.mxu0 %v1795
        %2835 = vmatprep.subr.bf16.mxu0 %v1802
        %2836 = vmatpush1.bf16.msra.mxu0 %v1801
        %2837 = vmatprep.subr.bf16.mxu0 %v1808
        %2838 = vmatpush1.bf16.msra.mxu0 %v1807
        %2839 = vmatprep.mubr.bf16.mxu0 %v366
        %2840 = vmatmul.mubr.bf16.gmra.mrb[0].mxu0 %v365
        %v2841 = vpop.f32.mrb[0].mxu0
        %v2842 = vadd.f32 %v2689, %v2841
        %v2843 = vpop.f32.mrb[0].mxu0
        %v2844 = vadd.f32 %v2691, %v2843
        %v2845 = vpop.f32.mrb[0].mxu0
        %v2846 = vadd.f32 %v2693, %v2845
        %v2847 = vpop.f32.mrb[0].mxu0
        %v2848 = vadd.f32 %v2695, %v2847
        %2849 = vmatprep.mubr.bf16.mxu0 %v372
        %2850 = vmatmul.mubr.bf16.gmra.mrb[0].mxu0 %v371
        %v2851 = vpop.f32.mrb[0].mxu0
        %v2852 = vadd.f32 %v2699, %v2851
        %v2853 = vpop.f32.mrb[0].mxu0
        %v2854 = vadd.f32 %v2701, %v2853
        %v2855 = vpop.f32.mrb[0].mxu0
        %v2856 = vadd.f32 %v2703, %v2855
        %v2857 = vpop.f32.mrb[0].mxu0
        %v2858 = vadd.f32 %v2705, %v2857
        %2859 = vmatprep.mubr.bf16.mxu0 %v378
        %2860 = vmatmul.mubr.bf16.gmra.mrb[0].mxu0 %v377
        %v2861 = vpop.f32.mrb[0].mxu0
        %v2862 = vadd.f32 %v2709, %v2861
        %v2863 = vpop.f32.mrb[0].mxu0
        %v2864 = vadd.f32 %v2711, %v2863
        %v2865 = vpop.f32.mrb[0].mxu0
        %v2866 = vadd.f32 %v2713, %v2865
        %v2867 = vpop.f32.mrb[0].mxu0
        %v2868 = vadd.f32 %v2715, %v2867
        %2869 = vmatprep.mubr.bf16.mxu0 %v384
        %2870 = vmatmul.mubr.bf16.gmra.mrb[0].mxu0 %v383
        %v2871 = vpop.f32.mrb[0].mxu0
        %v2872 = vadd.f32 %v2719, %v2871
        %v2873 = vpop.f32.mrb[0].mxu0
        %v2874 = vadd.f32 %v2721, %v2873
        %v2875 = vpop.f32.mrb[0].mxu0
        %v2876 = vadd.f32 %v2723, %v2875
        %v2877 = vpop.f32.mrb[0].mxu0
        %v2878 = vadd.f32 %v2725, %v2877
        %2879 = vmatprep.mubr.bf16.mxu0 %v390
        %2880 = vmatmul.mubr.bf16.gmra.mrb[0].mxu0 %v389
        %v2881 = vpop.f32.mrb[0].mxu0
        %v2882 = vadd.f32 %v2729, %v2881
        %v2883 = vpop.f32.mrb[0].mxu0
        %v2884 = vadd.f32 %v2731, %v2883
        %v2885 = vpop.f32.mrb[0].mxu0
        %v2886 = vadd.f32 %v2733, %v2885
        %v2887 = vpop.f32.mrb[0].mxu0
        %v2888 = vadd.f32 %v2735, %v2887
        %2889 = vmatprep.mubr.bf16.mxu0 %v396
        %2890 = vmatmul.mubr.bf16.gmra.mrb[0].mxu0 %v395
        %v2891 = vpop.f32.mrb[0].mxu0
        %v2892 = vadd.f32 %v2739, %v2891
        %v2893 = vpop.f32.mrb[0].mxu0
        %v2894 = vadd.f32 %v2741, %v2893
        %v2895 = vpop.f32.mrb[0].mxu0
        %v2896 = vadd.f32 %v2743, %v2895
        %v2897 = vpop.f32.mrb[0].mxu0
        %v2898 = vadd.f32 %v2745, %v2897
        %2899 = vmatprep.mubr.bf16.mxu0 %v402
        %2900 = vmatmul.mubr.bf16.gmra.mrb[0].mxu0 %v401
        %v2901 = vpop.f32.mrb[0].mxu0
        %v2902 = vadd.f32 %v2749, %v2901
        %v2903 = vpop.f32.mrb[0].mxu0
        %v2904 = vadd.f32 %v2751, %v2903
        %v2905 = vpop.f32.mrb[0].mxu0
        %v2906 = vadd.f32 %v2753, %v2905
        %v2907 = vpop.f32.mrb[0].mxu0
        %v2908 = vadd.f32 %v2755, %v2907
        %2909 = vmatprep.mubr.bf16.mxu0 %v408
        %2910 = vmatmul.mubr.bf16.gmra.mrb[0].mxu0 %v407
        %v2911 = vpop.f32.mrb[0].mxu0
        %v2912 = vadd.f32 %v2759, %v2911
        %v2913 = vpop.f32.mrb[0].mxu0
        %v2914 = vadd.f32 %v2761, %v2913
        %v2915 = vpop.f32.mrb[0].mxu0
        %v2916 = vadd.f32 %v2763, %v2915
        %v2917 = vpop.f32.mrb[0].mxu0
        %v2918 = vadd.f32 %v2765, %v2917
        %2919 = vmatprep.mubr.bf16.mxu0 %v414
        %2920 = vmatmul.mubr.bf16.gmra.mrb[0].mxu0 %v413
        %v2921 = vpop.f32.mrb[0].mxu0
        %v2922 = vadd.f32 %v2769, %v2921
        %v2923 = vpop.f32.mrb[0].mxu0
        %v2924 = vadd.f32 %v2771, %v2923
        %v2925 = vpop.f32.mrb[0].mxu0
        %v2926 = vadd.f32 %v2773, %v2925
        %v2927 = vpop.f32.mrb[0].mxu0
        %v2928 = vadd.f32 %v2775, %v2927
        %2929 = vmatprep.mubr.bf16.mxu0 %v420
        %2930 = vmatmul.mubr.bf16.gmra.mrb[0].mxu0 %v419
        %v2931 = vpop.f32.mrb[0].mxu0
        %v2932 = vadd.f32 %v2779, %v2931
        %v2933 = vpop.f32.mrb[0].mxu0
        %v2934 = vadd.f32 %v2781, %v2933
        %v2935 = vpop.f32.mrb[0].mxu0
        %v2936 = vadd.f32 %v2783, %v2935
        %v2937 = vpop.f32.mrb[0].mxu0
        %v2938 = vadd.f32 %v2785, %v2937
        %2939 = vmatprep.mubr.bf16.mxu0 %v426
        %2940 = vmatmul.mubr.bf16.gmra.mrb[0].mxu0 %v425
        %v2941 = vpop.f32.mrb[0].mxu0
        %v2942 = vadd.f32 %v2789, %v2941
        %v2943 = vpop.f32.mrb[0].mxu0
        %v2944 = vadd.f32 %v2791, %v2943
        %v2945 = vpop.f32.mrb[0].mxu0
        %v2946 = vadd.f32 %v2793, %v2945
        %v2947 = vpop.f32.mrb[0].mxu0
        %v2948 = vadd.f32 %v2795, %v2947
        %2949 = vmatprep.mubr.bf16.mxu0 %v432
        %2950 = vmatmul.mubr.bf16.gmra.mrb[0].mxu0 %v431
        %v2951 = vpop.f32.mrb[0].mxu0
        %v2952 = vadd.f32 %v2799, %v2951
        %v2953 = vpop.f32.mrb[0].mxu0
        %v2954 = vadd.f32 %v2801, %v2953
        %v2955 = vpop.f32.mrb[0].mxu0
        %v2956 = vadd.f32 %v2803, %v2955
        %v2957 = vpop.f32.mrb[0].mxu0
        %v2958 = vadd.f32 %v2805, %v2957
        %2959 = vdwg.mxu0
        %2960 = vmatprep.subr.bf16.mxu0 %v1814
        %2961 = vmatpush1.bf16.msra.mxu0 %v1813
        %2962 = vmatprep.subr.bf16.mxu0 %v1820
        %2963 = vmatpush1.bf16.msra.mxu0 %v1819
        %2964 = vmatprep.subr.bf16.mxu0 %v1826
        %2965 = vmatpush1.bf16.msra.mxu0 %v1825
        %2966 = vmatprep.subr.bf16.mxu0 %v1832
        %2967 = vmatpush1.bf16.msra.mxu0 %v1831
        %2968 = vmatprep.subr.bf16.mxu0 %v1838
        %2969 = vmatpush1.bf16.msra.mxu0 %v1837
        %2970 = vmatprep.subr.bf16.mxu0 %v1844
        %2971 = vmatpush1.bf16.msra.mxu0 %v1843
        %2972 = vmatprep.subr.bf16.mxu0 %v1850
        %2973 = vmatpush1.bf16.msra.mxu0 %v1849
        %2974 = vmatprep.subr.bf16.mxu0 %v1856
        %2975 = vmatpush1.bf16.msra.mxu0 %v1855
        %2976 = vmatprep.subr.bf16.mxu0 %v1862
        %2977 = vmatpush1.bf16.msra.mxu0 %v1861
        %2978 = vmatprep.subr.bf16.mxu0 %v1868
        %2979 = vmatpush1.bf16.msra.mxu0 %v1867
        %2980 = vmatprep.subr.bf16.mxu0 %v1874
        %2981 = vmatpush1.bf16.msra.mxu0 %v1873
        %2982 = vmatprep.subr.bf16.mxu0 %v1880
        %2983 = vmatpush1.bf16.msra.mxu0 %v1879
        %2984 = vmatprep.subr.bf16.mxu0 %v1886
        %2985 = vmatpush1.bf16.msra.mxu0 %v1885
        %2986 = vmatprep.subr.bf16.mxu0 %v1892
        %2987 = vmatpush1.bf16.msra.mxu0 %v1891
        %2988 = vmatprep.subr.bf16.mxu0 %v1898
        %2989 = vmatpush1.bf16.msra.mxu0 %v1897
        %2990 = vmatprep.subr.bf16.mxu0 %v1904
        %2991 = vmatpush1.bf16.msra.mxu0 %v1903
        %2992 = vmatprep.mubr.bf16.mxu0 %v368
        %2993 = vmatmul.mubr.bf16.gmra.mrb[0].mxu0 %v367
        %v2994 = vpop.f32.mrb[0].mxu0
        %v2995 = vadd.f32 %v2842, %v2994
        %v2996 = vpop.f32.mrb[0].mxu0
        %v2997 = vadd.f32 %v2844, %v2996
        %v2998 = vpop.f32.mrb[0].mxu0
        %v2999 = vadd.f32 %v2846, %v2998
        %v3000 = vpop.f32.mrb[0].mxu0
        %v3001 = vadd.f32 %v2848, %v3000
        %3002 = vmatprep.mubr.bf16.mxu0 %v374
        %3003 = vmatmul.mubr.bf16.gmra.mrb[0].mxu0 %v373
        %v3004 = vpop.f32.mrb[0].mxu0
        %v3005 = vadd.f32 %v2852, %v3004
        %v3006 = vpop.f32.mrb[0].mxu0
        %v3007 = vadd.f32 %v2854, %v3006
        %v3008 = vpop.f32.mrb[0].mxu0
        %v3009 = vadd.f32 %v2856, %v3008
        %v3010 = vpop.f32.mrb[0].mxu0
        %v3011 = vadd.f32 %v2858, %v3010
        %3012 = vmatprep.mubr.bf16.mxu0 %v380
        %3013 = vmatmul.mubr.bf16.gmra.mrb[0].mxu0 %v379
        %v3014 = vpop.f32.mrb[0].mxu0
        %v3015 = vadd.f32 %v2862, %v3014
        %v3016 = vpop.f32.mrb[0].mxu0
        %v3017 = vadd.f32 %v2864, %v3016
        %v3018 = vpop.f32.mrb[0].mxu0
        %v3019 = vadd.f32 %v2866, %v3018
        %v3020 = vpop.f32.mrb[0].mxu0
        %v3021 = vadd.f32 %v2868, %v3020
        %3022 = vmatprep.mubr.bf16.mxu0 %v386
        %3023 = vmatmul.mubr.bf16.gmra.mrb[0].mxu0 %v385
        %v3024 = vpop.f32.mrb[0].mxu0
        %v3025 = vadd.f32 %v2872, %v3024
        %v3026 = vpop.f32.mrb[0].mxu0
        %v3027 = vadd.f32 %v2874, %v3026
        %v3028 = vpop.f32.mrb[0].mxu0
        %v3029 = vadd.f32 %v2876, %v3028
        %v3030 = vpop.f32.mrb[0].mxu0
        %v3031 = vadd.f32 %v2878, %v3030
        %3032 = vmatprep.mubr.bf16.mxu0 %v392
        %3033 = vmatmul.mubr.bf16.gmra.mrb[0].mxu0 %v391
        %v3034 = vpop.f32.mrb[0].mxu0
        %v3035 = vadd.f32 %v2882, %v3034
        %v3036 = vpop.f32.mrb[0].mxu0
        %v3037 = vadd.f32 %v2884, %v3036
        %v3038 = vpop.f32.mrb[0].mxu0
        %v3039 = vadd.f32 %v2886, %v3038
        %v3040 = vpop.f32.mrb[0].mxu0
        %v3041 = vadd.f32 %v2888, %v3040
        %3042 = vmatprep.mubr.bf16.mxu0 %v398
        %3043 = vmatmul.mubr.bf16.gmra.mrb[0].mxu0 %v397
        %v3044 = vpop.f32.mrb[0].mxu0
        %v3045 = vadd.f32 %v2892, %v3044
        %v3046 = vpop.f32.mrb[0].mxu0
        %v3047 = vadd.f32 %v2894, %v3046
        %v3048 = vpop.f32.mrb[0].mxu0
        %v3049 = vadd.f32 %v2896, %v3048
        %v3050 = vpop.f32.mrb[0].mxu0
        %v3051 = vadd.f32 %v2898, %v3050
        %3052 = vmatprep.mubr.bf16.mxu0 %v404
        %3053 = vmatmul.mubr.bf16.gmra.mrb[0].mxu0 %v403
        %v3054 = vpop.f32.mrb[0].mxu0
        %v3055 = vadd.f32 %v2902, %v3054
        %v3056 = vpop.f32.mrb[0].mxu0
        %v3057 = vadd.f32 %v2904, %v3056
        %v3058 = vpop.f32.mrb[0].mxu0
        %v3059 = vadd.f32 %v2906, %v3058
        %v3060 = vpop.f32.mrb[0].mxu0
        %v3061 = vadd.f32 %v2908, %v3060
        %3062 = vmatprep.mubr.bf16.mxu0 %v410
        %3063 = vmatmul.mubr.bf16.gmra.mrb[0].mxu0 %v409
        %v3064 = vpop.f32.mrb[0].mxu0
        %v3065 = vadd.f32 %v2912, %v3064
        %v3066 = vpop.f32.mrb[0].mxu0
        %v3067 = vadd.f32 %v2914, %v3066
        %v3068 = vpop.f32.mrb[0].mxu0
        %v3069 = vadd.f32 %v2916, %v3068
        %v3070 = vpop.f32.mrb[0].mxu0
        %v3071 = vadd.f32 %v2918, %v3070
        %3072 = vmatprep.mubr.bf16.mxu0 %v416
        %3073 = vmatmul.mubr.bf16.gmra.mrb[0].mxu0 %v415
        %v3074 = vpop.f32.mrb[0].mxu0
        %v3075 = vadd.f32 %v2922, %v3074
        %v3076 = vpop.f32.mrb[0].mxu0
        %v3077 = vadd.f32 %v2924, %v3076
        %v3078 = vpop.f32.mrb[0].mxu0
        %v3079 = vadd.f32 %v2926, %v3078
        %v3080 = vpop.f32.mrb[0].mxu0
        %v3081 = vadd.f32 %v2928, %v3080
        %3082 = vmatprep.mubr.bf16.mxu0 %v422
        %3083 = vmatmul.mubr.bf16.gmra.mrb[0].mxu0 %v421
        %v3084 = vpop.f32.mrb[0].mxu0
        %v3085 = vadd.f32 %v2932, %v3084
        %v3086 = vpop.f32.mrb[0].mxu0
        %v3087 = vadd.f32 %v2934, %v3086
        %v3088 = vpop.f32.mrb[0].mxu0
        %v3089 = vadd.f32 %v2936, %v3088
        %v3090 = vpop.f32.mrb[0].mxu0
        %v3091 = vadd.f32 %v2938, %v3090
        %3092 = vmatprep.mubr.bf16.mxu0 %v428
        %3093 = vmatmul.mubr.bf16.gmra.mrb[0].mxu0 %v427
        %v3094 = vpop.f32.mrb[0].mxu0
        %v3095 = vadd.f32 %v2942, %v3094
        %v3096 = vpop.f32.mrb[0].mxu0
        %v3097 = vadd.f32 %v2944, %v3096
        %v3098 = vpop.f32.mrb[0].mxu0
        %v3099 = vadd.f32 %v2946, %v3098
        %v3100 = vpop.f32.mrb[0].mxu0
        %v3101 = vadd.f32 %v2948, %v3100
        %3102 = vmatprep.mubr.bf16.mxu0 %v434
        %3103 = vmatmul.mubr.bf16.gmra.mrb[0].mxu0 %v433
        %v3104 = vpop.f32.mrb[0].mxu0
        %v3105 = vadd.f32 %v2952, %v3104
        %v3106 = vpop.f32.mrb[0].mxu0
        %v3107 = vadd.f32 %v2954, %v3106
        %v3108 = vpop.f32.mrb[0].mxu0
        %v3109 = vadd.f32 %v2956, %v3108
        %v3110 = vpop.f32.mrb[0].mxu0
        %v3111 = vadd.f32 %v2958, %v3110
        %3112 = vdwg.mxu0
        %3113 = vmatprep.subr.bf16.mxu0 %v1624
        %3114 = vmatpush1.bf16.msra.mxu0 %v1623
        %3115 = vmatprep.subr.bf16.mxu0 %v1630
        %3116 = vmatpush1.bf16.msra.mxu0 %v1629
        %3117 = vmatprep.subr.bf16.mxu0 %v1636
        %3118 = vmatpush1.bf16.msra.mxu0 %v1635
        %3119 = vmatprep.subr.bf16.mxu0 %v1642
        %3120 = vmatpush1.bf16.msra.mxu0 %v1641
        %3121 = vmatprep.subr.bf16.mxu0 %v1648
        %3122 = vmatpush1.bf16.msra.mxu0 %v1647
        %3123 = vmatprep.subr.bf16.mxu0 %v1654
        %3124 = vmatpush1.bf16.msra.mxu0 %v1653
        %3125 = vmatprep.subr.bf16.mxu0 %v1660
        %3126 = vmatpush1.bf16.msra.mxu0 %v1659
        %3127 = vmatprep.subr.bf16.mxu0 %v1666
        %3128 = vmatpush1.bf16.msra.mxu0 %v1665
        %3129 = vmatprep.subr.bf16.mxu0 %v1672
        %3130 = vmatpush1.bf16.msra.mxu0 %v1671
        %3131 = vmatprep.subr.bf16.mxu0 %v1678
        %3132 = vmatpush1.bf16.msra.mxu0 %v1677
        %3133 = vmatprep.subr.bf16.mxu0 %v1684
        %3134 = vmatpush1.bf16.msra.mxu0 %v1683
        %3135 = vmatprep.subr.bf16.mxu0 %v1690
        %3136 = vmatpush1.bf16.msra.mxu0 %v1689
        %3137 = vmatprep.subr.bf16.mxu0 %v1696
        %3138 = vmatpush1.bf16.msra.mxu0 %v1695
        %3139 = vmatprep.subr.bf16.mxu0 %v1702
        %3140 = vmatpush1.bf16.msra.mxu0 %v1701
        %3141 = vmatprep.subr.bf16.mxu0 %v1708
        %3142 = vmatpush1.bf16.msra.mxu0 %v1707
        %3143 = vmatprep.subr.bf16.mxu0 %v1714
        %3144 = vmatpush1.bf16.msra.mxu0 %v1713
        %3145 = vmatprep.mubr.bf16.mxu0 %v364
        %3146 = vmatmul.mubr.bf16.gmra.mrb[0].mxu0 %v363
        %v3147 = vpop.f32.mrb[0].mxu0
        %v3148 = vadd.f32 %v744, %v3147
        %v3149 = vpop.f32.mrb[0].mxu0
        %v3150 = vadd.f32 %v748, %v3149
        %v3151 = vpop.f32.mrb[0].mxu0
        %v3152 = vadd.f32 %v744, %v3151
        %v3153 = vpop.f32.mrb[0].mxu0
        %v3154 = vadd.f32 %v748, %v3153
        %3155 = vmatprep.mubr.bf16.mxu0 %v370
        %3156 = vmatmul.mubr.bf16.gmra.mrb[0].mxu0 %v369
        %v3157 = vpop.f32.mrb[0].mxu0
        %v3158 = vadd.f32 %v744, %v3157
        %v3159 = vpop.f32.mrb[0].mxu0
        %v3160 = vadd.f32 %v748, %v3159
        %v3161 = vpop.f32.mrb[0].mxu0
        %v3162 = vadd.f32 %v744, %v3161
        %v3163 = vpop.f32.mrb[0].mxu0
        %v3164 = vadd.f32 %v748, %v3163
        %3165 = vmatprep.mubr.bf16.mxu0 %v376
        %3166 = vmatmul.mubr.bf16.gmra.mrb[0].mxu0 %v375
        %v3167 = vpop.f32.mrb[0].mxu0
        %v3168 = vadd.f32 %v744, %v3167
        %v3169 = vpop.f32.mrb[0].mxu0
        %v3170 = vadd.f32 %v748, %v3169
        %v3171 = vpop.f32.mrb[0].mxu0
        %v3172 = vadd.f32 %v744, %v3171
        %v3173 = vpop.f32.mrb[0].mxu0
        %v3174 = vadd.f32 %v748, %v3173
        %3175 = vmatprep.mubr.bf16.mxu0 %v382
        %3176 = vmatmul.mubr.bf16.gmra.mrb[0].mxu0 %v381
        %v3177 = vpop.f32.mrb[0].mxu0
        %v3178 = vadd.f32 %v744, %v3177
        %v3179 = vpop.f32.mrb[0].mxu0
        %v3180 = vadd.f32 %v748, %v3179
        %v3181 = vpop.f32.mrb[0].mxu0
        %v3182 = vadd.f32 %v744, %v3181
        %v3183 = vpop.f32.mrb[0].mxu0
        %v3184 = vadd.f32 %v748, %v3183
        %3185 = vmatprep.mubr.bf16.mxu0 %v388
        %3186 = vmatmul.mubr.bf16.gmra.mrb[0].mxu0 %v387
        %v3187 = vpop.f32.mrb[0].mxu0
        %v3188 = vadd.f32 %v744, %v3187
        %v3189 = vpop.f32.mrb[0].mxu0
        %v3190 = vadd.f32 %v748, %v3189
        %v3191 = vpop.f32.mrb[0].mxu0
        %v3192 = vadd.f32 %v744, %v3191
        %v3193 = vpop.f32.mrb[0].mxu0
        %v3194 = vadd.f32 %v748, %v3193
        %3195 = vmatprep.mubr.bf16.mxu0 %v394
        %3196 = vmatmul.mubr.bf16.gmra.mrb[0].mxu0 %v393
        %v3197 = vpop.f32.mrb[0].mxu0
        %v3198 = vadd.f32 %v744, %v3197
        %v3199 = vpop.f32.mrb[0].mxu0
        %v3200 = vadd.f32 %v748, %v3199
        %v3201 = vpop.f32.mrb[0].mxu0
        %v3202 = vadd.f32 %v744, %v3201
        %v3203 = vpop.f32.mrb[0].mxu0
        %v3204 = vadd.f32 %v748, %v3203
        %3205 = vmatprep.mubr.bf16.mxu0 %v400
        %3206 = vmatmul.mubr.bf16.gmra.mrb[0].mxu0 %v399
        %v3207 = vpop.f32.mrb[0].mxu0
        %v3208 = vadd.f32 %v744, %v3207
        %v3209 = vpop.f32.mrb[0].mxu0
        %v3210 = vadd.f32 %v748, %v3209
        %v3211 = vpop.f32.mrb[0].mxu0
        %v3212 = vadd.f32 %v744, %v3211
        %v3213 = vpop.f32.mrb[0].mxu0
        %v3214 = vadd.f32 %v748, %v3213
        %3215 = vmatprep.mubr.bf16.mxu0 %v406
        %3216 = vmatmul.mubr.bf16.gmra.mrb[0].mxu0 %v405
        %v3217 = vpop.f32.mrb[0].mxu0
        %v3218 = vadd.f32 %v744, %v3217
        %v3219 = vpop.f32.mrb[0].mxu0
        %v3220 = vadd.f32 %v748, %v3219
        %v3221 = vpop.f32.mrb[0].mxu0
        %v3222 = vadd.f32 %v744, %v3221
        %v3223 = vpop.f32.mrb[0].mxu0
        %v3224 = vadd.f32 %v748, %v3223
        %3225 = vmatprep.mubr.bf16.mxu0 %v412
        %3226 = vmatmul.mubr.bf16.gmra.mrb[0].mxu0 %v411
        %v3227 = vpop.f32.mrb[0].mxu0
        %v3228 = vadd.f32 %v744, %v3227
        %v3229 = vpop.f32.mrb[0].mxu0
        %v3230 = vadd.f32 %v748, %v3229
        %v3231 = vpop.f32.mrb[0].mxu0
        %v3232 = vadd.f32 %v744, %v3231
        %v3233 = vpop.f32.mrb[0].mxu0
        %v3234 = vadd.f32 %v748, %v3233
        %3235 = vmatprep.mubr.bf16.mxu0 %v418
        %3236 = vmatmul.mubr.bf16.gmra.mrb[0].mxu0 %v417
        %v3237 = vpop.f32.mrb[0].mxu0
        %v3238 = vadd.f32 %v744, %v3237
        %v3239 = vpop.f32.mrb[0].mxu0
        %v3240 = vadd.f32 %v748, %v3239
        %v3241 = vpop.f32.mrb[0].mxu0
        %v3242 = vadd.f32 %v744, %v3241
        %v3243 = vpop.f32.mrb[0].mxu0
        %v3244 = vadd.f32 %v748, %v3243
        %3245 = vmatprep.mubr.bf16.mxu0 %v424
        %3246 = vmatmul.mubr.bf16.gmra.mrb[0].mxu0 %v423
        %v3247 = vpop.f32.mrb[0].mxu0
        %v3248 = vadd.f32 %v744, %v3247
        %v3249 = vpop.f32.mrb[0].mxu0
        %v3250 = vadd.f32 %v748, %v3249
        %v3251 = vpop.f32.mrb[0].mxu0
        %v3252 = vadd.f32 %v744, %v3251
        %v3253 = vpop.f32.mrb[0].mxu0
        %v3254 = vadd.f32 %v748, %v3253
        %3255 = vmatprep.mubr.bf16.mxu0 %v430
        %3256 = vmatmul.mubr.bf16.gmra.mrb[0].mxu0 %v429
        %v3257 = vpop.f32.mrb[0].mxu0
        %v3258 = vadd.f32 %v744, %v3257
        %v3259 = vpop.f32.mrb[0].mxu0
        %v3260 = vadd.f32 %v748, %v3259
        %v3261 = vpop.f32.mrb[0].mxu0
        %v3262 = vadd.f32 %v744, %v3261
        %v3263 = vpop.f32.mrb[0].mxu0
        %v3264 = vadd.f32 %v748, %v3263
        %3265 = vdwg.mxu0
        %3266 = vmatprep.subr.bf16.mxu0 %v1720
        %3267 = vmatpush1.bf16.msra.mxu0 %v1719
        %3268 = vmatprep.subr.bf16.mxu0 %v1726
        %3269 = vmatpush1.bf16.msra.mxu0 %v1725
        %3270 = vmatprep.subr.bf16.mxu0 %v1732
        %3271 = vmatpush1.bf16.msra.mxu0 %v1731
        %3272 = vmatprep.subr.bf16.mxu0 %v1738
        %3273 = vmatpush1.bf16.msra.mxu0 %v1737
        %3274 = vmatprep.subr.bf16.mxu0 %v1744
        %3275 = vmatpush1.bf16.msra.mxu0 %v1743
        %3276 = vmatprep.subr.bf16.mxu0 %v1750
        %3277 = vmatpush1.bf16.msra.mxu0 %v1749
        %3278 = vmatprep.subr.bf16.mxu0 %v1756
        %3279 = vmatpush1.bf16.msra.mxu0 %v1755
        %3280 = vmatprep.subr.bf16.mxu0 %v1762
        %3281 = vmatpush1.bf16.msra.mxu0 %v1761
        %3282 = vmatprep.subr.bf16.mxu0 %v1768
        %3283 = vmatpush1.bf16.msra.mxu0 %v1767
        %3284 = vmatprep.subr.bf16.mxu0 %v1774
        %3285 = vmatpush1.bf16.msra.mxu0 %v1773
        %3286 = vmatprep.subr.bf16.mxu0 %v1780
        %3287 = vmatpush1.bf16.msra.mxu0 %v1779
        %3288 = vmatprep.subr.bf16.mxu0 %v1786
        %3289 = vmatpush1.bf16.msra.mxu0 %v1785
        %3290 = vmatprep.subr.bf16.mxu0 %v1792
        %3291 = vmatpush1.bf16.msra.mxu0 %v1791
        %3292 = vmatprep.subr.bf16.mxu0 %v1798
        %3293 = vmatpush1.bf16.msra.mxu0 %v1797
        %3294 = vmatprep.subr.bf16.mxu0 %v1804
        %3295 = vmatpush1.bf16.msra.mxu0 %v1803
        %3296 = vmatprep.subr.bf16.mxu0 %v1810
        %3297 = vmatpush1.bf16.msra.mxu0 %v1809
        %3298 = vmatprep.mubr.bf16.mxu0 %v366
        %3299 = vmatmul.mubr.bf16.gmra.mrb[0].mxu0 %v365
        %v3300 = vpop.f32.mrb[0].mxu0
        %v3301 = vadd.f32 %v3148, %v3300
        %v3302 = vpop.f32.mrb[0].mxu0
        %v3303 = vadd.f32 %v3150, %v3302
        %v3304 = vpop.f32.mrb[0].mxu0
        %v3305 = vadd.f32 %v3152, %v3304
        %v3306 = vpop.f32.mrb[0].mxu0
        %v3307 = vadd.f32 %v3154, %v3306
        %3308 = vmatprep.mubr.bf16.mxu0 %v372
        %3309 = vmatmul.mubr.bf16.gmra.mrb[0].mxu0 %v371
        %v3310 = vpop.f32.mrb[0].mxu0
        %v3311 = vadd.f32 %v3158, %v3310
        %v3312 = vpop.f32.mrb[0].mxu0
        %v3313 = vadd.f32 %v3160, %v3312
        %v3314 = vpop.f32.mrb[0].mxu0
        %v3315 = vadd.f32 %v3162, %v3314
        %v3316 = vpop.f32.mrb[0].mxu0
        %v3317 = vadd.f32 %v3164, %v3316
        %3318 = vmatprep.mubr.bf16.mxu0 %v378
        %3319 = vmatmul.mubr.bf16.gmra.mrb[0].mxu0 %v377
        %v3320 = vpop.f32.mrb[0].mxu0
        %v3321 = vadd.f32 %v3168, %v3320
        %v3322 = vpop.f32.mrb[0].mxu0
        %v3323 = vadd.f32 %v3170, %v3322
        %v3324 = vpop.f32.mrb[0].mxu0
        %v3325 = vadd.f32 %v3172, %v3324
        %v3326 = vpop.f32.mrb[0].mxu0
        %v3327 = vadd.f32 %v3174, %v3326
        %3328 = vmatprep.mubr.bf16.mxu0 %v384
        %3329 = vmatmul.mubr.bf16.gmra.mrb[0].mxu0 %v383
        %v3330 = vpop.f32.mrb[0].mxu0
        %v3331 = vadd.f32 %v3178, %v3330
        %v3332 = vpop.f32.mrb[0].mxu0
        %v3333 = vadd.f32 %v3180, %v3332
        %v3334 = vpop.f32.mrb[0].mxu0
        %v3335 = vadd.f32 %v3182, %v3334
        %v3336 = vpop.f32.mrb[0].mxu0
        %v3337 = vadd.f32 %v3184, %v3336
        %3338 = vmatprep.mubr.bf16.mxu0 %v390
        %3339 = vmatmul.mubr.bf16.gmra.mrb[0].mxu0 %v389
        %v3340 = vpop.f32.mrb[0].mxu0
        %v3341 = vadd.f32 %v3188, %v3340
        %v3342 = vpop.f32.mrb[0].mxu0
        %v3343 = vadd.f32 %v3190, %v3342
        %v3344 = vpop.f32.mrb[0].mxu0
        %v3345 = vadd.f32 %v3192, %v3344
        %v3346 = vpop.f32.mrb[0].mxu0
        %v3347 = vadd.f32 %v3194, %v3346
        %3348 = vmatprep.mubr.bf16.mxu0 %v396
        %3349 = vmatmul.mubr.bf16.gmra.mrb[0].mxu0 %v395
        %v3350 = vpop.f32.mrb[0].mxu0
        %v3351 = vadd.f32 %v3198, %v3350
        %v3352 = vpop.f32.mrb[0].mxu0
        %v3353 = vadd.f32 %v3200, %v3352
        %v3354 = vpop.f32.mrb[0].mxu0
        %v3355 = vadd.f32 %v3202, %v3354
        %v3356 = vpop.f32.mrb[0].mxu0
        %v3357 = vadd.f32 %v3204, %v3356
        %3358 = vmatprep.mubr.bf16.mxu0 %v402
        %3359 = vmatmul.mubr.bf16.gmra.mrb[0].mxu0 %v401
        %v3360 = vpop.f32.mrb[0].mxu0
        %v3361 = vadd.f32 %v3208, %v3360
        %v3362 = vpop.f32.mrb[0].mxu0
        %v3363 = vadd.f32 %v3210, %v3362
        %v3364 = vpop.f32.mrb[0].mxu0
        %v3365 = vadd.f32 %v3212, %v3364
        %v3366 = vpop.f32.mrb[0].mxu0
        %v3367 = vadd.f32 %v3214, %v3366
        %3368 = vmatprep.mubr.bf16.mxu0 %v408
        %3369 = vmatmul.mubr.bf16.gmra.mrb[0].mxu0 %v407
        %v3370 = vpop.f32.mrb[0].mxu0
        %v3371 = vadd.f32 %v3218, %v3370
        %v3372 = vpop.f32.mrb[0].mxu0
        %v3373 = vadd.f32 %v3220, %v3372
        %v3374 = vpop.f32.mrb[0].mxu0
        %v3375 = vadd.f32 %v3222, %v3374
        %v3376 = vpop.f32.mrb[0].mxu0
        %v3377 = vadd.f32 %v3224, %v3376
        %3378 = vmatprep.mubr.bf16.mxu0 %v414
        %3379 = vmatmul.mubr.bf16.gmra.mrb[0].mxu0 %v413
        %v3380 = vpop.f32.mrb[0].mxu0
        %v3381 = vadd.f32 %v3228, %v3380
        %v3382 = vpop.f32.mrb[0].mxu0
        %v3383 = vadd.f32 %v3230, %v3382
        %v3384 = vpop.f32.mrb[0].mxu0
        %v3385 = vadd.f32 %v3232, %v3384
        %v3386 = vpop.f32.mrb[0].mxu0
        %v3387 = vadd.f32 %v3234, %v3386
        %3388 = vmatprep.mubr.bf16.mxu0 %v420
        %3389 = vmatmul.mubr.bf16.gmra.mrb[0].mxu0 %v419
        %v3390 = vpop.f32.mrb[0].mxu0
        %v3391 = vadd.f32 %v3238, %v3390
        %v3392 = vpop.f32.mrb[0].mxu0
        %v3393 = vadd.f32 %v3240, %v3392
        %v3394 = vpop.f32.mrb[0].mxu0
        %v3395 = vadd.f32 %v3242, %v3394
        %v3396 = vpop.f32.mrb[0].mxu0
        %v3397 = vadd.f32 %v3244, %v3396
        %3398 = vmatprep.mubr.bf16.mxu0 %v426
        %3399 = vmatmul.mubr.bf16.gmra.mrb[0].mxu0 %v425
        %v3400 = vpop.f32.mrb[0].mxu0
        %v3401 = vadd.f32 %v3248, %v3400
        %v3402 = vpop.f32.mrb[0].mxu0
        %v3403 = vadd.f32 %v3250, %v3402
        %v3404 = vpop.f32.mrb[0].mxu0
        %v3405 = vadd.f32 %v3252, %v3404
        %v3406 = vpop.f32.mrb[0].mxu0
        %v3407 = vadd.f32 %v3254, %v3406
        %3408 = vmatprep.mubr.bf16.mxu0 %v432
        %3409 = vmatmul.mubr.bf16.gmra.mrb[0].mxu0 %v431
        %v3410 = vpop.f32.mrb[0].mxu0
        %v3411 = vadd.f32 %v3258, %v3410
        %v3412 = vpop.f32.mrb[0].mxu0
        %v3413 = vadd.f32 %v3260, %v3412
        %v3414 = vpop.f32.mrb[0].mxu0
        %v3415 = vadd.f32 %v3262, %v3414
        %v3416 = vpop.f32.mrb[0].mxu0
        %v3417 = vadd.f32 %v3264, %v3416
        %3418 = vdwg.mxu0
        %3419 = vmatprep.subr.bf16.mxu0 %v1816
        %3420 = vmatpush1.bf16.msra.mxu0 %v1815
        %3421 = vmatprep.subr.bf16.mxu0 %v1822
        %3422 = vmatpush1.bf16.msra.mxu0 %v1821
        %3423 = vmatprep.subr.bf16.mxu0 %v1828
        %3424 = vmatpush1.bf16.msra.mxu0 %v1827
        %3425 = vmatprep.subr.bf16.mxu0 %v1834
        %3426 = vmatpush1.bf16.msra.mxu0 %v1833
        %3427 = vmatprep.subr.bf16.mxu0 %v1840
        %3428 = vmatpush1.bf16.msra.mxu0 %v1839
        %3429 = vmatprep.subr.bf16.mxu0 %v1846
        %3430 = vmatpush1.bf16.msra.mxu0 %v1845
        %3431 = vmatprep.subr.bf16.mxu0 %v1852
        %3432 = vmatpush1.bf16.msra.mxu0 %v1851
        %3433 = vmatprep.subr.bf16.mxu0 %v1858
        %3434 = vmatpush1.bf16.msra.mxu0 %v1857
        %3435 = vmatprep.subr.bf16.mxu0 %v1864
        %3436 = vmatpush1.bf16.msra.mxu0 %v1863
        %3437 = vmatprep.subr.bf16.mxu0 %v1870
        %3438 = vmatpush1.bf16.msra.mxu0 %v1869
        %3439 = vmatprep.subr.bf16.mxu0 %v1876
        %3440 = vmatpush1.bf16.msra.mxu0 %v1875
        %3441 = vmatprep.subr.bf16.mxu0 %v1882
        %3442 = vmatpush1.bf16.msra.mxu0 %v1881
        %3443 = vmatprep.subr.bf16.mxu0 %v1888
        %3444 = vmatpush1.bf16.msra.mxu0 %v1887
        %3445 = vmatprep.subr.bf16.mxu0 %v1894
        %3446 = vmatpush1.bf16.msra.mxu0 %v1893
        %3447 = vmatprep.subr.bf16.mxu0 %v1900
        %3448 = vmatpush1.bf16.msra.mxu0 %v1899
        %3449 = vmatprep.subr.bf16.mxu0 %v1906
        %3450 = vmatpush1.bf16.msra.mxu0 %v1905
        %3451 = vmatprep.mubr.bf16.mxu0 %v368
        %3452 = vmatmul.mubr.bf16.gmra.mrb[0].mxu0 %v367
        %v3453 = vpop.f32.mrb[0].mxu0
        %v3454 = vadd.f32 %v3301, %v3453
        %v3455 = vpop.f32.mrb[0].mxu0
        %v3456 = vadd.f32 %v3303, %v3455
        %v3457 = vpop.f32.mrb[0].mxu0
        %v3458 = vadd.f32 %v3305, %v3457
        %v3459 = vpop.f32.mrb[0].mxu0
        %v3460 = vadd.f32 %v3307, %v3459
        %3461 = vmatprep.mubr.bf16.mxu0 %v374
        %3462 = vmatmul.mubr.bf16.gmra.mrb[0].mxu0 %v373
        %v3463 = vpop.f32.mrb[0].mxu0
        %v3464 = vadd.f32 %v3311, %v3463
        %v3465 = vpop.f32.mrb[0].mxu0
        %v3466 = vadd.f32 %v3313, %v3465
        %v3467 = vpop.f32.mrb[0].mxu0
        %v3468 = vadd.f32 %v3315, %v3467
        %v3469 = vpop.f32.mrb[0].mxu0
        %v3470 = vadd.f32 %v3317, %v3469
        %3471 = vmatprep.mubr.bf16.mxu0 %v380
        %3472 = vmatmul.mubr.bf16.gmra.mrb[0].mxu0 %v379
        %v3473 = vpop.f32.mrb[0].mxu0
        %v3474 = vadd.f32 %v3321, %v3473
        %v3475 = vpop.f32.mrb[0].mxu0
        %v3476 = vadd.f32 %v3323, %v3475
        %v3477 = vpop.f32.mrb[0].mxu0
        %v3478 = vadd.f32 %v3325, %v3477
        %v3479 = vpop.f32.mrb[0].mxu0
        %v3480 = vadd.f32 %v3327, %v3479
        %3481 = vmatprep.mubr.bf16.mxu0 %v386
        %3482 = vmatmul.mubr.bf16.gmra.mrb[0].mxu0 %v385
        %v3483 = vpop.f32.mrb[0].mxu0
        %v3484 = vadd.f32 %v3331, %v3483
        %v3485 = vpop.f32.mrb[0].mxu0
        %v3486 = vadd.f32 %v3333, %v3485
        %v3487 = vpop.f32.mrb[0].mxu0
        %v3488 = vadd.f32 %v3335, %v3487
        %v3489 = vpop.f32.mrb[0].mxu0
        %v3490 = vadd.f32 %v3337, %v3489
        %3491 = vmatprep.mubr.bf16.mxu0 %v392
        %3492 = vmatmul.mubr.bf16.gmra.mrb[0].mxu0 %v391
        %v3493 = vpop.f32.mrb[0].mxu0
        %v3494 = vadd.f32 %v3341, %v3493
        %v3495 = vpop.f32.mrb[0].mxu0
        %v3496 = vadd.f32 %v3343, %v3495
        %v3497 = vpop.f32.mrb[0].mxu0
        %v3498 = vadd.f32 %v3345, %v3497
        %v3499 = vpop.f32.mrb[0].mxu0
        %v3500 = vadd.f32 %v3347, %v3499
        %3501 = vmatprep.mubr.bf16.mxu0 %v398
        %3502 = vmatmul.mubr.bf16.gmra.mrb[0].mxu0 %v397
        %v3503 = vpop.f32.mrb[0].mxu0
        %v3504 = vadd.f32 %v3351, %v3503
        %v3505 = vpop.f32.mrb[0].mxu0
        %v3506 = vadd.f32 %v3353, %v3505
        %v3507 = vpop.f32.mrb[0].mxu0
        %v3508 = vadd.f32 %v3355, %v3507
        %v3509 = vpop.f32.mrb[0].mxu0
        %v3510 = vadd.f32 %v3357, %v3509
        %3511 = vmatprep.mubr.bf16.mxu0 %v404
        %3512 = vmatmul.mubr.bf16.gmra.mrb[0].mxu0 %v403
        %v3513 = vpop.f32.mrb[0].mxu0
        %v3514 = vadd.f32 %v3361, %v3513
        %v3515 = vpop.f32.mrb[0].mxu0
        %v3516 = vadd.f32 %v3363, %v3515
        %v3517 = vpop.f32.mrb[0].mxu0
        %v3518 = vadd.f32 %v3365, %v3517
        %v3519 = vpop.f32.mrb[0].mxu0
        %v3520 = vadd.f32 %v3367, %v3519
        %3521 = vmatprep.mubr.bf16.mxu0 %v410
        %3522 = vmatmul.mubr.bf16.gmra.mrb[0].mxu0 %v409
        %v3523 = vpop.f32.mrb[0].mxu0
        %v3524 = vadd.f32 %v3371, %v3523
        %v3525 = vpop.f32.mrb[0].mxu0
        %v3526 = vadd.f32 %v3373, %v3525
        %v3527 = vpop.f32.mrb[0].mxu0
        %v3528 = vadd.f32 %v3375, %v3527
        %v3529 = vpop.f32.mrb[0].mxu0
        %v3530 = vadd.f32 %v3377, %v3529
        %3531 = vmatprep.mubr.bf16.mxu0 %v416
        %3532 = vmatmul.mubr.bf16.gmra.mrb[0].mxu0 %v415
        %v3533 = vpop.f32.mrb[0].mxu0
        %v3534 = vadd.f32 %v3381, %v3533
        %v3535 = vpop.f32.mrb[0].mxu0
        %v3536 = vadd.f32 %v3383, %v3535
        %v3537 = vpop.f32.mrb[0].mxu0
        %v3538 = vadd.f32 %v3385, %v3537
        %v3539 = vpop.f32.mrb[0].mxu0
        %v3540 = vadd.f32 %v3387, %v3539
        %3541 = vmatprep.mubr.bf16.mxu0 %v422
        %3542 = vmatmul.mubr.bf16.gmra.mrb[0].mxu0 %v421
        %v3543 = vpop.f32.mrb[0].mxu0
        %v3544 = vadd.f32 %v3391, %v3543
        %v3545 = vpop.f32.mrb[0].mxu0
        %v3546 = vadd.f32 %v3393, %v3545
        %v3547 = vpop.f32.mrb[0].mxu0
        %v3548 = vadd.f32 %v3395, %v3547
        %v3549 = vpop.f32.mrb[0].mxu0
        %v3550 = vadd.f32 %v3397, %v3549
        %3551 = vmatprep.mubr.bf16.mxu0 %v428
        %3552 = vmatmul.mubr.bf16.gmra.mrb[0].mxu0 %v427
        %v3553 = vpop.f32.mrb[0].mxu0
        %v3554 = vadd.f32 %v3401, %v3553
        %v3555 = vpop.f32.mrb[0].mxu0
        %v3556 = vadd.f32 %v3403, %v3555
        %v3557 = vpop.f32.mrb[0].mxu0
        %v3558 = vadd.f32 %v3405, %v3557
        %v3559 = vpop.f32.mrb[0].mxu0
        %v3560 = vadd.f32 %v3407, %v3559
        %3561 = vmatprep.mubr.bf16.mxu0 %v434
        %3562 = vmatmul.mubr.bf16.gmra.mrb[0].mxu0 %v433
        %v3563 = vpop.f32.mrb[0].mxu0
        %v3564 = vadd.f32 %v3411, %v3563
        %v3565 = vpop.f32.mrb[0].mxu0
        %v3566 = vadd.f32 %v3413, %v3565
        %v3567 = vpop.f32.mrb[0].mxu0
        %v3568 = vadd.f32 %v3415, %v3567
        %v3569 = vpop.f32.mrb[0].mxu0
        %v3570 = vadd.f32 %v3417, %v3569
        %3571 = vdwg.mxu0
        %v3572 = vmul.f32 %v2536, %v2536
        %v3573 = vmul.f32 %v2538, %v2538
        %v3574 = vmul.f32 %v2995, %v2995
        %v3575 = vmul.f32 %v2997, %v2997
        %v3576 = vmul.f32 %v3454, %v3454
        %v3577 = vmul.f32 %v3456, %v3456
        %v3578 = vmul.f32 %v2540, %v2540
        %v3579 = vmul.f32 %v2542, %v2542
        %v3580 = vmul.f32 %v2999, %v2999
        %v3581 = vmul.f32 %v3001, %v3001
        %v3582 = vmul.f32 %v3458, %v3458
        %v3583 = vmul.f32 %v3460, %v3460
        %v3584 = vmul.f32 %v2546, %v2546
        %v3585 = vmul.f32 %v2548, %v2548
        %v3586 = vmul.f32 %v3005, %v3005
        %v3587 = vmul.f32 %v3007, %v3007
        %v3588 = vmul.f32 %v3464, %v3464
        %v3589 = vmul.f32 %v3466, %v3466
        %v3590 = vmul.f32 %v2550, %v2550
        %v3591 = vmul.f32 %v2552, %v2552
        %v3592 = vmul.f32 %v3009, %v3009
        %v3593 = vmul.f32 %v3011, %v3011
        %v3594 = vmul.f32 %v3468, %v3468
        %v3595 = vmul.f32 %v3470, %v3470
        %v3596 = vmul.f32 %v2556, %v2556
        %v3597 = vmul.f32 %v2558, %v2558
        %v3598 = vmul.f32 %v3015, %v3015
        %v3599 = vmul.f32 %v3017, %v3017
        %v3600 = vmul.f32 %v3474, %v3474
        %v3601 = vmul.f32 %v3476, %v3476
        %v3602 = vmul.f32 %v2560, %v2560
        %v3603 = vmul.f32 %v2562, %v2562
        %v3604 = vmul.f32 %v3019, %v3019
        %v3605 = vmul.f32 %v3021, %v3021
        %v3606 = vmul.f32 %v3478, %v3478
        %v3607 = vmul.f32 %v3480, %v3480
        %v3608 = vmul.f32 %v2566, %v2566
        %v3609 = vmul.f32 %v2568, %v2568
        %v3610 = vmul.f32 %v3025, %v3025
        %v3611 = vmul.f32 %v3027, %v3027
        %v3612 = vmul.f32 %v3484, %v3484
        %v3613 = vmul.f32 %v3486, %v3486
        %v3614 = vmul.f32 %v2570, %v2570
        %v3615 = vmul.f32 %v2572, %v2572
        %v3616 = vmul.f32 %v3029, %v3029
        %v3617 = vmul.f32 %v3031, %v3031
        %v3618 = vmul.f32 %v3488, %v3488
        %v3619 = vmul.f32 %v3490, %v3490
        %v3620 = vmul.f32 %v2576, %v2576
        %v3621 = vmul.f32 %v2578, %v2578
        %v3622 = vmul.f32 %v3035, %v3035
        %v3623 = vmul.f32 %v3037, %v3037
        %v3624 = vmul.f32 %v3494, %v3494
        %v3625 = vmul.f32 %v3496, %v3496
        %v3626 = vmul.f32 %v2580, %v2580
        %v3627 = vmul.f32 %v2582, %v2582
        %v3628 = vmul.f32 %v3039, %v3039
        %v3629 = vmul.f32 %v3041, %v3041
        %v3630 = vmul.f32 %v3498, %v3498
        %v3631 = vmul.f32 %v3500, %v3500
        %v3632 = vmul.f32 %v2586, %v2586
        %v3633 = vmul.f32 %v2588, %v2588
        %v3634 = vmul.f32 %v3045, %v3045
        %v3635 = vmul.f32 %v3047, %v3047
        %v3636 = vmul.f32 %v3504, %v3504
        %v3637 = vmul.f32 %v3506, %v3506
        %v3638 = vmul.f32 %v2590, %v2590
        %v3639 = vmul.f32 %v2592, %v2592
        %v3640 = vmul.f32 %v3049, %v3049
        %v3641 = vmul.f32 %v3051, %v3051
        %v3642 = vmul.f32 %v3508, %v3508
        %v3643 = vmul.f32 %v3510, %v3510
        %v3644 = vmul.f32 %v2596, %v2596
        %v3645 = vmul.f32 %v2598, %v2598
        %v3646 = vmul.f32 %v3055, %v3055
        %v3647 = vmul.f32 %v3057, %v3057
        %v3648 = vmul.f32 %v3514, %v3514
        %v3649 = vmul.f32 %v3516, %v3516
        %v3650 = vmul.f32 %v2600, %v2600
        %v3651 = vmul.f32 %v2602, %v2602
        %v3652 = vmul.f32 %v3059, %v3059
        %v3653 = vmul.f32 %v3061, %v3061
        %v3654 = vmul.f32 %v3518, %v3518
        %v3655 = vmul.f32 %v3520, %v3520
        %v3656 = vmul.f32 %v2606, %v2606
        %v3657 = vmul.f32 %v2608, %v2608
        %v3658 = vmul.f32 %v3065, %v3065
        %v3659 = vmul.f32 %v3067, %v3067
        %v3660 = vmul.f32 %v3524, %v3524
        %v3661 = vmul.f32 %v3526, %v3526
        %v3662 = vmul.f32 %v2610, %v2610
        %v3663 = vmul.f32 %v2612, %v2612
        %v3664 = vmul.f32 %v3069, %v3069
        %v3665 = vmul.f32 %v3071, %v3071
        %v3666 = vmul.f32 %v3528, %v3528
        %v3667 = vmul.f32 %v3530, %v3530
        %v3668 = vmul.f32 %v2616, %v2616
        %v3669 = vmul.f32 %v2618, %v2618
        %v3670 = vmul.f32 %v3075, %v3075
        %v3671 = vmul.f32 %v3077, %v3077
        %v3672 = vmul.f32 %v3534, %v3534
        %v3673 = vmul.f32 %v3536, %v3536
        %v3674 = vmul.f32 %v2620, %v2620
        %v3675 = vmul.f32 %v2622, %v2622
        %v3676 = vmul.f32 %v3079, %v3079
        %v3677 = vmul.f32 %v3081, %v3081
        %v3678 = vmul.f32 %v3538, %v3538
        %v3679 = vmul.f32 %v3540, %v3540
        %v3680 = vmul.f32 %v2626, %v2626
        %v3681 = vmul.f32 %v2628, %v2628
        %v3682 = vmul.f32 %v3085, %v3085
        %v3683 = vmul.f32 %v3087, %v3087
        %v3684 = vmul.f32 %v3544, %v3544
        %v3685 = vmul.f32 %v3546, %v3546
        %v3686 = vmul.f32 %v2630, %v2630
        %v3687 = vmul.f32 %v2632, %v2632
        %v3688 = vmul.f32 %v3089, %v3089
        %v3689 = vmul.f32 %v3091, %v3091
        %v3690 = vmul.f32 %v3548, %v3548
        %v3691 = vmul.f32 %v3550, %v3550
        %v3692 = vmul.f32 %v2636, %v2636
        %v3693 = vmul.f32 %v2638, %v2638
        %v3694 = vmul.f32 %v3095, %v3095
        %v3695 = vmul.f32 %v3097, %v3097
        %v3696 = vmul.f32 %v3554, %v3554
        %v3697 = vmul.f32 %v3556, %v3556
        %v3698 = vmul.f32 %v2640, %v2640
        %v3699 = vmul.f32 %v2642, %v2642
        %v3700 = vmul.f32 %v3099, %v3099
        %v3701 = vmul.f32 %v3101, %v3101
        %v3702 = vmul.f32 %v3558, %v3558
        %v3703 = vmul.f32 %v3560, %v3560
        %v3704 = vmul.f32 %v2646, %v2646
        %v3705 = vmul.f32 %v2648, %v2648
        %v3706 = vmul.f32 %v3105, %v3105
        %v3707 = vmul.f32 %v3107, %v3107
        %v3708 = vmul.f32 %v3564, %v3564
        %v3709 = vmul.f32 %v3566, %v3566
        %v3710 = vmul.f32 %v2650, %v2650
        %v3711 = vmul.f32 %v2652, %v2652
        %v3712 = vmul.f32 %v3109, %v3109
        %v3713 = vmul.f32 %v3111, %v3111
        %v3714 = vmul.f32 %v3568, %v3568
        %v3715 = vmul.f32 %v3570, %v3570
        %v3716 = vmul.f32 %v2536, %v3572
        %v3717 = vmul.f32 %v2538, %v3573
        %v3718 = vmul.f32 %v2995, %v3574
        %v3719 = vmul.f32 %v2997, %v3575
        %v3720 = vmul.f32 %v3454, %v3576
        %v3721 = vmul.f32 %v3456, %v3577
        %v3722 = vmul.f32 %v2540, %v3578
        %v3723 = vmul.f32 %v2542, %v3579
        %v3724 = vmul.f32 %v2999, %v3580
        %v3725 = vmul.f32 %v3001, %v3581
        %v3726 = vmul.f32 %v3458, %v3582
        %v3727 = vmul.f32 %v3460, %v3583
        %v3728 = vmul.f32 %v2546, %v3584
        %v3729 = vmul.f32 %v2548, %v3585
        %v3730 = vmul.f32 %v3005, %v3586
        %v3731 = vmul.f32 %v3007, %v3587
        %v3732 = vmul.f32 %v3464, %v3588
        %v3733 = vmul.f32 %v3466, %v3589
        %v3734 = vmul.f32 %v2550, %v3590
        %v3735 = vmul.f32 %v2552, %v3591
        %v3736 = vmul.f32 %v3009, %v3592
        %v3737 = vmul.f32 %v3011, %v3593
        %v3738 = vmul.f32 %v3468, %v3594
        %v3739 = vmul.f32 %v3470, %v3595
        %v3740 = vmul.f32 %v2556, %v3596
        %v3741 = vmul.f32 %v2558, %v3597
        %v3742 = vmul.f32 %v3015, %v3598
        %v3743 = vmul.f32 %v3017, %v3599
        %v3744 = vmul.f32 %v3474, %v3600
        %v3745 = vmul.f32 %v3476, %v3601
        %v3746 = vmul.f32 %v2560, %v3602
        %v3747 = vmul.f32 %v2562, %v3603
        %v3748 = vmul.f32 %v3019, %v3604
        %v3749 = vmul.f32 %v3021, %v3605
        %v3750 = vmul.f32 %v3478, %v3606
        %v3751 = vmul.f32 %v3480, %v3607
        %v3752 = vmul.f32 %v2566, %v3608
        %v3753 = vmul.f32 %v2568, %v3609
        %v3754 = vmul.f32 %v3025, %v3610
        %v3755 = vmul.f32 %v3027, %v3611
        %v3756 = vmul.f32 %v3484, %v3612
        %v3757 = vmul.f32 %v3486, %v3613
        %v3758 = vmul.f32 %v2570, %v3614
        %v3759 = vmul.f32 %v2572, %v3615
        %v3760 = vmul.f32 %v3029, %v3616
        %v3761 = vmul.f32 %v3031, %v3617
        %v3762 = vmul.f32 %v3488, %v3618
        %v3763 = vmul.f32 %v3490, %v3619
        %v3764 = vmul.f32 %v2576, %v3620
        %v3765 = vmul.f32 %v2578, %v3621
        %v3766 = vmul.f32 %v3035, %v3622
        %v3767 = vmul.f32 %v3037, %v3623
        %v3768 = vmul.f32 %v3494, %v3624
        %v3769 = vmul.f32 %v3496, %v3625
        %v3770 = vmul.f32 %v2580, %v3626
        %v3771 = vmul.f32 %v2582, %v3627
        %v3772 = vmul.f32 %v3039, %v3628
        %v3773 = vmul.f32 %v3041, %v3629
        %v3774 = vmul.f32 %v3498, %v3630
        %v3775 = vmul.f32 %v3500, %v3631
        %v3776 = vmul.f32 %v2586, %v3632
        %v3777 = vmul.f32 %v2588, %v3633
        %v3778 = vmul.f32 %v3045, %v3634
        %v3779 = vmul.f32 %v3047, %v3635
        %v3780 = vmul.f32 %v3504, %v3636
        %v3781 = vmul.f32 %v3506, %v3637
        %v3782 = vmul.f32 %v2590, %v3638
        %v3783 = vmul.f32 %v2592, %v3639
        %v3784 = vmul.f32 %v3049, %v3640
        %v3785 = vmul.f32 %v3051, %v3641
        %v3786 = vmul.f32 %v3508, %v3642
        %v3787 = vmul.f32 %v3510, %v3643
        %v3788 = vmul.f32 %v2596, %v3644
        %v3789 = vmul.f32 %v2598, %v3645
        %v3790 = vmul.f32 %v3055, %v3646
        %v3791 = vmul.f32 %v3057, %v3647
        %v3792 = vmul.f32 %v3514, %v3648
        %v3793 = vmul.f32 %v3516, %v3649
        %v3794 = vmul.f32 %v2600, %v3650
        %v3795 = vmul.f32 %v2602, %v3651
        %v3796 = vmul.f32 %v3059, %v3652
        %v3797 = vmul.f32 %v3061, %v3653
        %v3798 = vmul.f32 %v3518, %v3654
        %v3799 = vmul.f32 %v3520, %v3655
        %v3800 = vmul.f32 %v2606, %v3656
        %v3801 = vmul.f32 %v2608, %v3657
        %v3802 = vmul.f32 %v3065, %v3658
        %v3803 = vmul.f32 %v3067, %v3659
        %v3804 = vmul.f32 %v3524, %v3660
        %v3805 = vmul.f32 %v3526, %v3661
        %v3806 = vmul.f32 %v2610, %v3662
        %v3807 = vmul.f32 %v2612, %v3663
        %v3808 = vmul.f32 %v3069, %v3664
        %v3809 = vmul.f32 %v3071, %v3665
        %v3810 = vmul.f32 %v3528, %v3666
        %v3811 = vmul.f32 %v3530, %v3667
        %v3812 = vmul.f32 %v2616, %v3668
        %v3813 = vmul.f32 %v2618, %v3669
        %v3814 = vmul.f32 %v3075, %v3670
        %v3815 = vmul.f32 %v3077, %v3671
        %v3816 = vmul.f32 %v3534, %v3672
        %v3817 = vmul.f32 %v3536, %v3673
        %v3818 = vmul.f32 %v2620, %v3674
        %v3819 = vmul.f32 %v2622, %v3675
        %v3820 = vmul.f32 %v3079, %v3676
        %v3821 = vmul.f32 %v3081, %v3677
        %v3822 = vmul.f32 %v3538, %v3678
        %v3823 = vmul.f32 %v3540, %v3679
        %v3824 = vmul.f32 %v2626, %v3680
        %v3825 = vmul.f32 %v2628, %v3681
        %v3826 = vmul.f32 %v3085, %v3682
        %v3827 = vmul.f32 %v3087, %v3683
        %v3828 = vmul.f32 %v3544, %v3684
        %v3829 = vmul.f32 %v3546, %v3685
        %v3830 = vmul.f32 %v2630, %v3686
        %v3831 = vmul.f32 %v2632, %v3687
        %v3832 = vmul.f32 %v3089, %v3688
        %v3833 = vmul.f32 %v3091, %v3689
        %v3834 = vmul.f32 %v3548, %v3690
        %v3835 = vmul.f32 %v3550, %v3691
        %v3836 = vmul.f32 %v2636, %v3692
        %v3837 = vmul.f32 %v2638, %v3693
        %v3838 = vmul.f32 %v3095, %v3694
        %v3839 = vmul.f32 %v3097, %v3695
        %v3840 = vmul.f32 %v3554, %v3696
        %v3841 = vmul.f32 %v3556, %v3697
        %v3842 = vmul.f32 %v2640, %v3698
        %v3843 = vmul.f32 %v2642, %v3699
        %v3844 = vmul.f32 %v3099, %v3700
        %v3845 = vmul.f32 %v3101, %v3701
        %v3846 = vmul.f32 %v3558, %v3702
        %v3847 = vmul.f32 %v3560, %v3703
        %v3848 = vmul.f32 %v2646, %v3704
        %v3849 = vmul.f32 %v2648, %v3705
        %v3850 = vmul.f32 %v3105, %v3706
        %v3851 = vmul.f32 %v3107, %v3707
        %v3852 = vmul.f32 %v3564, %v3708
        %v3853 = vmul.f32 %v3566, %v3709
        %v3854 = vmul.f32 %v2650, %v3710
        %v3855 = vmul.f32 %v2652, %v3711
        %v3856 = vmul.f32 %v3109, %v3712
        %v3857 = vmul.f32 %v3111, %v3713
        %v3858 = vmul.f32 %v3568, %v3714
        %v3859 = vmul.f32 %v3570, %v3715
        %v3860 = vmul.f32 %v3716, 0.044715
        %v3861 = vmul.f32 %v3717, 0.044715
        %v3862 = vmul.f32 %v3718, 0.044715
        %v3863 = vmul.f32 %v3719, 0.044715
        %v3864 = vmul.f32 %v3720, 0.044715
        %v3865 = vmul.f32 %v3721, 0.044715
        %v3866 = vmul.f32 %v3722, 0.044715
        %v3867 = vmul.f32 %v3723, 0.044715
        %v3868 = vmul.f32 %v3724, 0.044715
        %v3869 = vmul.f32 %v3725, 0.044715
        %v3870 = vmul.f32 %v3726, 0.044715
        %v3871 = vmul.f32 %v3727, 0.044715
        %v3872 = vmul.f32 %v3728, 0.044715
        %v3873 = vmul.f32 %v3729, 0.044715
        %v3874 = vmul.f32 %v3730, 0.044715
        %v3875 = vmul.f32 %v3731, 0.044715
        %v3876 = vmul.f32 %v3732, 0.044715
        %v3877 = vmul.f32 %v3733, 0.044715
        %v3878 = vmul.f32 %v3734, 0.044715
        %v3879 = vmul.f32 %v3735, 0.044715
        %v3880 = vmul.f32 %v3736, 0.044715
        %v3881 = vmul.f32 %v3737, 0.044715
        %v3882 = vmul.f32 %v3738, 0.044715
        %v3883 = vmul.f32 %v3739, 0.044715
        %v3884 = vmul.f32 %v3740, 0.044715
        %v3885 = vmul.f32 %v3741, 0.044715
        %v3886 = vmul.f32 %v3742, 0.044715
        %v3887 = vmul.f32 %v3743, 0.044715
        %v3888 = vmul.f32 %v3744, 0.044715
        %v3889 = vmul.f32 %v3745, 0.044715
        %v3890 = vmul.f32 %v3746, 0.044715
        %v3891 = vmul.f32 %v3747, 0.044715
        %v3892 = vmul.f32 %v3748, 0.044715
        %v3893 = vmul.f32 %v3749, 0.044715
        %v3894 = vmul.f32 %v3750, 0.044715
        %v3895 = vmul.f32 %v3751, 0.044715
        %v3896 = vmul.f32 %v3752, 0.044715
        %v3897 = vmul.f32 %v3753, 0.044715
        %v3898 = vmul.f32 %v3754, 0.044715
        %v3899 = vmul.f32 %v3755, 0.044715
        %v3900 = vmul.f32 %v3756, 0.044715
        %v3901 = vmul.f32 %v3757, 0.044715
        %v3902 = vmul.f32 %v3758, 0.044715
        %v3903 = vmul.f32 %v3759, 0.044715
        %v3904 = vmul.f32 %v3760, 0.044715
        %v3905 = vmul.f32 %v3761, 0.044715
        %v3906 = vmul.f32 %v3762, 0.044715
        %v3907 = vmul.f32 %v3763, 0.044715
        %v3908 = vmul.f32 %v3764, 0.044715
        %v3909 = vmul.f32 %v3765, 0.044715
        %v3910 = vmul.f32 %v3766, 0.044715
        %v3911 = vmul.f32 %v3767, 0.044715
        %v3912 = vmul.f32 %v3768, 0.044715
        %v3913 = vmul.f32 %v3769, 0.044715
        %v3914 = vmul.f32 %v3770, 0.044715
        %v3915 = vmul.f32 %v3771, 0.044715
        %v3916 = vmul.f32 %v3772, 0.044715
        %v3917 = vmul.f32 %v3773, 0.044715
        %v3918 = vmul.f32 %v3774, 0.044715
        %v3919 = vmul.f32 %v3775, 0.044715
        %v3920 = vmul.f32 %v3776, 0.044715
        %v3921 = vmul.f32 %v3777, 0.044715
        %v3922 = vmul.f32 %v3778, 0.044715
        %v3923 = vmul.f32 %v3779, 0.044715
        %v3924 = vmul.f32 %v3780, 0.044715
        %v3925 = vmul.f32 %v3781, 0.044715
        %v3926 = vmul.f32 %v3782, 0.044715
        %v3927 = vmul.f32 %v3783, 0.044715
        %v3928 = vmul.f32 %v3784, 0.044715
        %v3929 = vmul.f32 %v3785, 0.044715
        %v3930 = vmul.f32 %v3786, 0.044715
        %v3931 = vmul.f32 %v3787, 0.044715
        %v3932 = vmul.f32 %v3788, 0.044715
        %v3933 = vmul.f32 %v3789, 0.044715
        %v3934 = vmul.f32 %v3790, 0.044715
        %v3935 = vmul.f32 %v3791, 0.044715
        %v3936 = vmul.f32 %v3792, 0.044715
        %v3937 = vmul.f32 %v3793, 0.044715
        %v3938 = vmul.f32 %v3794, 0.044715
        %v3939 = vmul.f32 %v3795, 0.044715
        %v3940 = vmul.f32 %v3796, 0.044715
        %v3941 = vmul.f32 %v3797, 0.044715
        %v3942 = vmul.f32 %v3798, 0.044715
        %v3943 = vmul.f32 %v3799, 0.044715
        %v3944 = vmul.f32 %v3800, 0.044715
        %v3945 = vmul.f32 %v3801, 0.044715
        %v3946 = vmul.f32 %v3802, 0.044715
        %v3947 = vmul.f32 %v3803, 0.044715
        %v3948 = vmul.f32 %v3804, 0.044715
        %v3949 = vmul.f32 %v3805, 0.044715
        %v3950 = vmul.f32 %v3806, 0.044715
        %v3951 = vmul.f32 %v3807, 0.044715
        %v3952 = vmul.f32 %v3808, 0.044715
        %v3953 = vmul.f32 %v3809, 0.044715
        %v3954 = vmul.f32 %v3810, 0.044715
        %v3955 = vmul.f32 %v3811, 0.044715
        %v3956 = vmul.f32 %v3812, 0.044715
        %v3957 = vmul.f32 %v3813, 0.044715
        %v3958 = vmul.f32 %v3814, 0.044715
        %v3959 = vmul.f32 %v3815, 0.044715
        %v3960 = vmul.f32 %v3816, 0.044715
        %v3961 = vmul.f32 %v3817, 0.044715
        %v3962 = vmul.f32 %v3818, 0.044715
        %v3963 = vmul.f32 %v3819, 0.044715
        %v3964 = vmul.f32 %v3820, 0.044715
        %v3965 = vmul.f32 %v3821, 0.044715
        %v3966 = vmul.f32 %v3822, 0.044715
        %v3967 = vmul.f32 %v3823, 0.044715
        %v3968 = vmul.f32 %v3824, 0.044715
        %v3969 = vmul.f32 %v3825, 0.044715
        %v3970 = vmul.f32 %v3826, 0.044715
        %v3971 = vmul.f32 %v3827, 0.044715
        %v3972 = vmul.f32 %v3828, 0.044715
        %v3973 = vmul.f32 %v3829, 0.044715
        %v3974 = vmul.f32 %v3830, 0.044715
        %v3975 = vmul.f32 %v3831, 0.044715
        %v3976 = vmul.f32 %v3832, 0.044715
        %v3977 = vmul.f32 %v3833, 0.044715
        %v3978 = vmul.f32 %v3834, 0.044715
        %v3979 = vmul.f32 %v3835, 0.044715
        %v3980 = vmul.f32 %v3836, 0.044715
        %v3981 = vmul.f32 %v3837, 0.044715
        %v3982 = vmul.f32 %v3838, 0.044715
        %v3983 = vmul.f32 %v3839, 0.044715
        %v3984 = vmul.f32 %v3840, 0.044715
        %v3985 = vmul.f32 %v3841, 0.044715
        %v3986 = vmul.f32 %v3842, 0.044715
        %v3987 = vmul.f32 %v3843, 0.044715
        %v3988 = vmul.f32 %v3844, 0.044715
        %v3989 = vmul.f32 %v3845, 0.044715
        %v3990 = vmul.f32 %v3846, 0.044715
        %v3991 = vmul.f32 %v3847, 0.044715
        %v3992 = vmul.f32 %v3848, 0.044715
        %v3993 = vmul.f32 %v3849, 0.044715
        %v3994 = vmul.f32 %v3850, 0.044715
        %v3995 = vmul.f32 %v3851, 0.044715
        %v3996 = vmul.f32 %v3852, 0.044715
        %v3997 = vmul.f32 %v3853, 0.044715
        %v3998 = vmul.f32 %v3854, 0.044715
        %v3999 = vmul.f32 %v3855, 0.044715
        %v4000 = vmul.f32 %v3856, 0.044715
        %v4001 = vmul.f32 %v3857, 0.044715
        %v4002 = vmul.f32 %v3858, 0.044715
        %v4003 = vmul.f32 %v3859, 0.044715
        %v4004 = vadd.f32 %v2536, %v3860
        %v4005 = vadd.f32 %v2538, %v3861
        %v4006 = vadd.f32 %v2995, %v3862
        %v4007 = vadd.f32 %v2997, %v3863
        %v4008 = vadd.f32 %v3454, %v3864
        %v4009 = vadd.f32 %v3456, %v3865
        %v4010 = vadd.f32 %v2540, %v3866
        %v4011 = vadd.f32 %v2542, %v3867
        %v4012 = vadd.f32 %v2999, %v3868
        %v4013 = vadd.f32 %v3001, %v3869
        %v4014 = vadd.f32 %v3458, %v3870
        %v4015 = vadd.f32 %v3460, %v3871
        %v4016 = vadd.f32 %v2546, %v3872
        %v4017 = vadd.f32 %v2548, %v3873
        %v4018 = vadd.f32 %v3005, %v3874
        %v4019 = vadd.f32 %v3007, %v3875
        %v4020 = vadd.f32 %v3464, %v3876
        %v4021 = vadd.f32 %v3466, %v3877
        %v4022 = vadd.f32 %v2550, %v3878
        %v4023 = vadd.f32 %v2552, %v3879
        %v4024 = vadd.f32 %v3009, %v3880
        %v4025 = vadd.f32 %v3011, %v3881
        %v4026 = vadd.f32 %v3468, %v3882
        %v4027 = vadd.f32 %v3470, %v3883
        %v4028 = vadd.f32 %v2556, %v3884
        %v4029 = vadd.f32 %v2558, %v3885
        %v4030 = vadd.f32 %v3015, %v3886
        %v4031 = vadd.f32 %v3017, %v3887
        %v4032 = vadd.f32 %v3474, %v3888
        %v4033 = vadd.f32 %v3476, %v3889
        %v4034 = vadd.f32 %v2560, %v3890
        %v4035 = vadd.f32 %v2562, %v3891
        %v4036 = vadd.f32 %v3019, %v3892
        %v4037 = vadd.f32 %v3021, %v3893
        %v4038 = vadd.f32 %v3478, %v3894
        %v4039 = vadd.f32 %v3480, %v3895
        %v4040 = vadd.f32 %v2566, %v3896
        %v4041 = vadd.f32 %v2568, %v3897
        %v4042 = vadd.f32 %v3025, %v3898
        %v4043 = vadd.f32 %v3027, %v3899
        %v4044 = vadd.f32 %v3484, %v3900
        %v4045 = vadd.f32 %v3486, %v3901
        %v4046 = vadd.f32 %v2570, %v3902
        %v4047 = vadd.f32 %v2572, %v3903
        %v4048 = vadd.f32 %v3029, %v3904
        %v4049 = vadd.f32 %v3031, %v3905
        %v4050 = vadd.f32 %v3488, %v3906
        %v4051 = vadd.f32 %v3490, %v3907
        %v4052 = vadd.f32 %v2576, %v3908
        %v4053 = vadd.f32 %v2578, %v3909
        %v4054 = vadd.f32 %v3035, %v3910
        %v4055 = vadd.f32 %v3037, %v3911
        %v4056 = vadd.f32 %v3494, %v3912
        %v4057 = vadd.f32 %v3496, %v3913
        %v4058 = vadd.f32 %v2580, %v3914
        %v4059 = vadd.f32 %v2582, %v3915
        %v4060 = vadd.f32 %v3039, %v3916
        %v4061 = vadd.f32 %v3041, %v3917
        %v4062 = vadd.f32 %v3498, %v3918
        %v4063 = vadd.f32 %v3500, %v3919
        %v4064 = vadd.f32 %v2586, %v3920
        %v4065 = vadd.f32 %v2588, %v3921
        %v4066 = vadd.f32 %v3045, %v3922
        %v4067 = vadd.f32 %v3047, %v3923
        %v4068 = vadd.f32 %v3504, %v3924
        %v4069 = vadd.f32 %v3506, %v3925
        %v4070 = vadd.f32 %v2590, %v3926
        %v4071 = vadd.f32 %v2592, %v3927
        %v4072 = vadd.f32 %v3049, %v3928
        %v4073 = vadd.f32 %v3051, %v3929
        %v4074 = vadd.f32 %v3508, %v3930
        %v4075 = vadd.f32 %v3510, %v3931
        %v4076 = vadd.f32 %v2596, %v3932
        %v4077 = vadd.f32 %v2598, %v3933
        %v4078 = vadd.f32 %v3055, %v3934
        %v4079 = vadd.f32 %v3057, %v3935
        %v4080 = vadd.f32 %v3514, %v3936
        %v4081 = vadd.f32 %v3516, %v3937
        %v4082 = vadd.f32 %v2600, %v3938
        %v4083 = vadd.f32 %v2602, %v3939
        %v4084 = vadd.f32 %v3059, %v3940
        %v4085 = vadd.f32 %v3061, %v3941
        %v4086 = vadd.f32 %v3518, %v3942
        %v4087 = vadd.f32 %v3520, %v3943
        %v4088 = vadd.f32 %v2606, %v3944
        %v4089 = vadd.f32 %v2608, %v3945
        %v4090 = vadd.f32 %v3065, %v3946
        %v4091 = vadd.f32 %v3067, %v3947
        %v4092 = vadd.f32 %v3524, %v3948
        %v4093 = vadd.f32 %v3526, %v3949
        %v4094 = vadd.f32 %v2610, %v3950
        %v4095 = vadd.f32 %v2612, %v3951
        %v4096 = vadd.f32 %v3069, %v3952
        %v4097 = vadd.f32 %v3071, %v3953
        %v4098 = vadd.f32 %v3528, %v3954
        %v4099 = vadd.f32 %v3530, %v3955
        %v4100 = vadd.f32 %v2616, %v3956
        %v4101 = vadd.f32 %v2618, %v3957
        %v4102 = vadd.f32 %v3075, %v3958
        %v4103 = vadd.f32 %v3077, %v3959
        %v4104 = vadd.f32 %v3534, %v3960
        %v4105 = vadd.f32 %v3536, %v3961
        %v4106 = vadd.f32 %v2620, %v3962
        %v4107 = vadd.f32 %v2622, %v3963
        %v4108 = vadd.f32 %v3079, %v3964
        %v4109 = vadd.f32 %v3081, %v3965
        %v4110 = vadd.f32 %v3538, %v3966
        %v4111 = vadd.f32 %v3540, %v3967
        %v4112 = vadd.f32 %v2626, %v3968
        %v4113 = vadd.f32 %v2628, %v3969
        %v4114 = vadd.f32 %v3085, %v3970
        %v4115 = vadd.f32 %v3087, %v3971
        %v4116 = vadd.f32 %v3544, %v3972
        %v4117 = vadd.f32 %v3546, %v3973
        %v4118 = vadd.f32 %v2630, %v3974
        %v4119 = vadd.f32 %v2632, %v3975
        %v4120 = vadd.f32 %v3089, %v3976
        %v4121 = vadd.f32 %v3091, %v3977
        %v4122 = vadd.f32 %v3548, %v3978
        %v4123 = vadd.f32 %v3550, %v3979
        %v4124 = vadd.f32 %v2636, %v3980
        %v4125 = vadd.f32 %v2638, %v3981
        %v4126 = vadd.f32 %v3095, %v3982
        %v4127 = vadd.f32 %v3097, %v3983
        %v4128 = vadd.f32 %v3554, %v3984
        %v4129 = vadd.f32 %v3556, %v3985
        %v4130 = vadd.f32 %v2640, %v3986
        %v4131 = vadd.f32 %v2642, %v3987
        %v4132 = vadd.f32 %v3099, %v3988
        %v4133 = vadd.f32 %v3101, %v3989
        %v4134 = vadd.f32 %v3558, %v3990
        %v4135 = vadd.f32 %v3560, %v3991
        %v4136 = vadd.f32 %v2646, %v3992
        %v4137 = vadd.f32 %v2648, %v3993
        %v4138 = vadd.f32 %v3105, %v3994
        %v4139 = vadd.f32 %v3107, %v3995
        %v4140 = vadd.f32 %v3564, %v3996
        %v4141 = vadd.f32 %v3566, %v3997
        %v4142 = vadd.f32 %v2650, %v3998
        %v4143 = vadd.f32 %v2652, %v3999
        %v4144 = vadd.f32 %v3109, %v4000
        %v4145 = vadd.f32 %v3111, %v4001
        %v4146 = vadd.f32 %v3568, %v4002
        %v4147 = vadd.f32 %v3570, %v4003
        %v4148 = vmul.f32 %v4004, 0.7978846
        %v4149 = vmul.f32 %v4005, 0.7978846
        %v4150 = vmul.f32 %v4006, 0.7978846
        %v4151 = vmul.f32 %v4007, 0.7978846
        %v4152 = vmul.f32 %v4008, 0.7978846
        %v4153 = vmul.f32 %v4009, 0.7978846
        %v4154 = vmul.f32 %v4010, 0.7978846
        %v4155 = vmul.f32 %v4011, 0.7978846
        %v4156 = vmul.f32 %v4012, 0.7978846
        %v4157 = vmul.f32 %v4013, 0.7978846
        %v4158 = vmul.f32 %v4014, 0.7978846
        %v4159 = vmul.f32 %v4015, 0.7978846
        %v4160 = vmul.f32 %v4016, 0.7978846
        %v4161 = vmul.f32 %v4017, 0.7978846
        %v4162 = vmul.f32 %v4018, 0.7978846
        %v4163 = vmul.f32 %v4019, 0.7978846
        %v4164 = vmul.f32 %v4020, 0.7978846
        %v4165 = vmul.f32 %v4021, 0.7978846
        %v4166 = vmul.f32 %v4022, 0.7978846
        %v4167 = vmul.f32 %v4023, 0.7978846
        %v4168 = vmul.f32 %v4024, 0.7978846
        %v4169 = vmul.f32 %v4025, 0.7978846
        %v4170 = vmul.f32 %v4026, 0.7978846
        %v4171 = vmul.f32 %v4027, 0.7978846
        %v4172 = vmul.f32 %v4028, 0.7978846
        %v4173 = vmul.f32 %v4029, 0.7978846
        %v4174 = vmul.f32 %v4030, 0.7978846
        %v4175 = vmul.f32 %v4031, 0.7978846
        %v4176 = vmul.f32 %v4032, 0.7978846
        %v4177 = vmul.f32 %v4033, 0.7978846
        %v4178 = vmul.f32 %v4034, 0.7978846
        %v4179 = vmul.f32 %v4035, 0.7978846
        %v4180 = vmul.f32 %v4036, 0.7978846
        %v4181 = vmul.f32 %v4037, 0.7978846
        %v4182 = vmul.f32 %v4038, 0.7978846
        %v4183 = vmul.f32 %v4039, 0.7978846
        %v4184 = vmul.f32 %v4040, 0.7978846
        %v4185 = vmul.f32 %v4041, 0.7978846
        %v4186 = vmul.f32 %v4042, 0.7978846
        %v4187 = vmul.f32 %v4043, 0.7978846
        %v4188 = vmul.f32 %v4044, 0.7978846
        %v4189 = vmul.f32 %v4045, 0.7978846
        %v4190 = vmul.f32 %v4046, 0.7978846
        %v4191 = vmul.f32 %v4047, 0.7978846
        %v4192 = vmul.f32 %v4048, 0.7978846
        %v4193 = vmul.f32 %v4049, 0.7978846
        %v4194 = vmul.f32 %v4050, 0.7978846
        %v4195 = vmul.f32 %v4051, 0.7978846
        %v4196 = vmul.f32 %v4052, 0.7978846
        %v4197 = vmul.f32 %v4053, 0.7978846
        %v4198 = vmul.f32 %v4054, 0.7978846
        %v4199 = vmul.f32 %v4055, 0.7978846
        %v4200 = vmul.f32 %v4056, 0.7978846
        %v4201 = vmul.f32 %v4057, 0.7978846
        %v4202 = vmul.f32 %v4058, 0.7978846
        %v4203 = vmul.f32 %v4059, 0.7978846
        %v4204 = vmul.f32 %v4060, 0.7978846
        %v4205 = vmul.f32 %v4061, 0.7978846
        %v4206 = vmul.f32 %v4062, 0.7978846
        %v4207 = vmul.f32 %v4063, 0.7978846
        %v4208 = vmul.f32 %v4064, 0.7978846
        %v4209 = vmul.f32 %v4065, 0.7978846
        %v4210 = vmul.f32 %v4066, 0.7978846
        %v4211 = vmul.f32 %v4067, 0.7978846
        %v4212 = vmul.f32 %v4068, 0.7978846
        %v4213 = vmul.f32 %v4069, 0.7978846
        %v4214 = vmul.f32 %v4070, 0.7978846
        %v4215 = vmul.f32 %v4071, 0.7978846
        %v4216 = vmul.f32 %v4072, 0.7978846
        %v4217 = vmul.f32 %v4073, 0.7978846
        %v4218 = vmul.f32 %v4074, 0.7978846
        %v4219 = vmul.f32 %v4075, 0.7978846
        %v4220 = vmul.f32 %v4076, 0.7978846
        %v4221 = vmul.f32 %v4077, 0.7978846
        %v4222 = vmul.f32 %v4078, 0.7978846
        %v4223 = vmul.f32 %v4079, 0.7978846
        %v4224 = vmul.f32 %v4080, 0.7978846
        %v4225 = vmul.f32 %v4081, 0.7978846
        %v4226 = vmul.f32 %v4082, 0.7978846
        %v4227 = vmul.f32 %v4083, 0.7978846
        %v4228 = vmul.f32 %v4084, 0.7978846
        %v4229 = vmul.f32 %v4085, 0.7978846
        %v4230 = vmul.f32 %v4086, 0.7978846
        %v4231 = vmul.f32 %v4087, 0.7978846
        %v4232 = vmul.f32 %v4088, 0.7978846
        %v4233 = vmul.f32 %v4089, 0.7978846
        %v4234 = vmul.f32 %v4090, 0.7978846
        %v4235 = vmul.f32 %v4091, 0.7978846
        %v4236 = vmul.f32 %v4092, 0.7978846
        %v4237 = vmul.f32 %v4093, 0.7978846
        %v4238 = vmul.f32 %v4094, 0.7978846
        %v4239 = vmul.f32 %v4095, 0.7978846
        %v4240 = vmul.f32 %v4096, 0.7978846
        %v4241 = vmul.f32 %v4097, 0.7978846
        %v4242 = vmul.f32 %v4098, 0.7978846
        %v4243 = vmul.f32 %v4099, 0.7978846
        %v4244 = vmul.f32 %v4100, 0.7978846
        %v4245 = vmul.f32 %v4101, 0.7978846
        %v4246 = vmul.f32 %v4102, 0.7978846
        %v4247 = vmul.f32 %v4103, 0.7978846
        %v4248 = vmul.f32 %v4104, 0.7978846
        %v4249 = vmul.f32 %v4105, 0.7978846
        %v4250 = vmul.f32 %v4106, 0.7978846
        %v4251 = vmul.f32 %v4107, 0.7978846
        %v4252 = vmul.f32 %v4108, 0.7978846
        %v4253 = vmul.f32 %v4109, 0.7978846
        %v4254 = vmul.f32 %v4110, 0.7978846
        %v4255 = vmul.f32 %v4111, 0.7978846
        %v4256 = vmul.f32 %v4112, 0.7978846
        %v4257 = vmul.f32 %v4113, 0.7978846
        %v4258 = vmul.f32 %v4114, 0.7978846
        %v4259 = vmul.f32 %v4115, 0.7978846
        %v4260 = vmul.f32 %v4116, 0.7978846
        %v4261 = vmul.f32 %v4117, 0.7978846
        %v4262 = vmul.f32 %v4118, 0.7978846
        %v4263 = vmul.f32 %v4119, 0.7978846
        %v4264 = vmul.f32 %v4120, 0.7978846
        %v4265 = vmul.f32 %v4121, 0.7978846
        %v4266 = vmul.f32 %v4122, 0.7978846
        %v4267 = vmul.f32 %v4123, 0.7978846
        %v4268 = vmul.f32 %v4124, 0.7978846
        %v4269 = vmul.f32 %v4125, 0.7978846
        %v4270 = vmul.f32 %v4126, 0.7978846
        %v4271 = vmul.f32 %v4127, 0.7978846
        %v4272 = vmul.f32 %v4128, 0.7978846
        %v4273 = vmul.f32 %v4129, 0.7978846
        %v4274 = vmul.f32 %v4130, 0.7978846
        %v4275 = vmul.f32 %v4131, 0.7978846
        %v4276 = vmul.f32 %v4132, 0.7978846
        %v4277 = vmul.f32 %v4133, 0.7978846
        %v4278 = vmul.f32 %v4134, 0.7978846
        %v4279 = vmul.f32 %v4135, 0.7978846
        %v4280 = vmul.f32 %v4136, 0.7978846
        %v4281 = vmul.f32 %v4137, 0.7978846
        %v4282 = vmul.f32 %v4138, 0.7978846
        %v4283 = vmul.f32 %v4139, 0.7978846
        %v4284 = vmul.f32 %v4140, 0.7978846
        %v4285 = vmul.f32 %v4141, 0.7978846
        %v4286 = vmul.f32 %v4142, 0.7978846
        %v4287 = vmul.f32 %v4143, 0.7978846
        %v4288 = vmul.f32 %v4144, 0.7978846
        %v4289 = vmul.f32 %v4145, 0.7978846
        %v4290 = vmul.f32 %v4146, 0.7978846
        %v4291 = vmul.f32 %v4147, 0.7978846
        %v4292 = vtanh.pop %v4148
        %v4293 = vtanh.pop %v4149
        %v4294 = vtanh.pop %v4150
        %v4295 = vtanh.pop %v4151
        %v4296 = vtanh.pop %v4152
        %v4297 = vtanh.pop %v4153
        %v4298 = vtanh.pop %v4154
        %v4299 = vtanh.pop %v4155
        %v4300 = vtanh.pop %v4156
        %v4301 = vtanh.pop %v4157
        %v4302 = vtanh.pop %v4158
        %v4303 = vtanh.pop %v4159
        %v4304 = vtanh.pop %v4160
        %v4305 = vtanh.pop %v4161
        %v4306 = vtanh.pop %v4162
        %v4307 = vtanh.pop %v4163
        %v4308 = vtanh.pop %v4164
        %v4309 = vtanh.pop %v4165
        %v4310 = vtanh.pop %v4166
        %v4311 = vtanh.pop %v4167
        %v4312 = vtanh.pop %v4168
        %v4313 = vtanh.pop %v4169
        %v4314 = vtanh.pop %v4170
        %v4315 = vtanh.pop %v4171
        %v4316 = vtanh.pop %v4172
        %v4317 = vtanh.pop %v4173
        %v4318 = vtanh.pop %v4174
        %v4319 = vtanh.pop %v4175
        %v4320 = vtanh.pop %v4176
        %v4321 = vtanh.pop %v4177
        %v4322 = vtanh.pop %v4178
        %v4323 = vtanh.pop %v4179
        %v4324 = vtanh.pop %v4180
        %v4325 = vtanh.pop %v4181
        %v4326 = vtanh.pop %v4182
        %v4327 = vtanh.pop %v4183
        %v4328 = vtanh.pop %v4184
        %v4329 = vtanh.pop %v4185
        %v4330 = vtanh.pop %v4186
        %v4331 = vtanh.pop %v4187
        %v4332 = vtanh.pop %v4188
        %v4333 = vtanh.pop %v4189
        %v4334 = vtanh.pop %v4190
        %v4335 = vtanh.pop %v4191
        %v4336 = vtanh.pop %v4192
        %v4337 = vtanh.pop %v4193
        %v4338 = vtanh.pop %v4194
        %v4339 = vtanh.pop %v4195
        %v4340 = vtanh.pop %v4196
        %v4341 = vtanh.pop %v4197
        %v4342 = vtanh.pop %v4198
        %v4343 = vtanh.pop %v4199
        %v4344 = vtanh.pop %v4200
        %v4345 = vtanh.pop %v4201
        %v4346 = vtanh.pop %v4202
        %v4347 = vtanh.pop %v4203
        %v4348 = vtanh.pop %v4204
        %v4349 = vtanh.pop %v4205
        %v4350 = vtanh.pop %v4206
        %v4351 = vtanh.pop %v4207
        %v4352 = vtanh.pop %v4208
        %v4353 = vtanh.pop %v4209
        %v4354 = vtanh.pop %v4210
        %v4355 = vtanh.pop %v4211
        %v4356 = vtanh.pop %v4212
        %v4357 = vtanh.pop %v4213
        %v4358 = vtanh.pop %v4214
        %v4359 = vtanh.pop %v4215
        %v4360 = vtanh.pop %v4216
        %v4361 = vtanh.pop %v4217
        %v4362 = vtanh.pop %v4218
        %v4363 = vtanh.pop %v4219
        %v4364 = vtanh.pop %v4220
        %v4365 = vtanh.pop %v4221
        %v4366 = vtanh.pop %v4222
        %v4367 = vtanh.pop %v4223
        %v4368 = vtanh.pop %v4224
        %v4369 = vtanh.pop %v4225
        %v4370 = vtanh.pop %v4226
        %v4371 = vtanh.pop %v4227
        %v4372 = vtanh.pop %v4228
        %v4373 = vtanh.pop %v4229
        %v4374 = vtanh.pop %v4230
        %v4375 = vtanh.pop %v4231
        %v4376 = vtanh.pop %v4232
        %v4377 = vtanh.pop %v4233
        %v4378 = vtanh.pop %v4234
        %v4379 = vtanh.pop %v4235
        %v4380 = vtanh.pop %v4236
        %v4381 = vtanh.pop %v4237
        %v4382 = vtanh.pop %v4238
        %v4383 = vtanh.pop %v4239
        %v4384 = vtanh.pop %v4240
        %v4385 = vtanh.pop %v4241
        %v4386 = vtanh.pop %v4242
        %v4387 = vtanh.pop %v4243
        %v4388 = vtanh.pop %v4244
        %v4389 = vtanh.pop %v4245
        %v4390 = vtanh.pop %v4246
        %v4391 = vtanh.pop %v4247
        %v4392 = vtanh.pop %v4248
        %v4393 = vtanh.pop %v4249
        %v4394 = vtanh.pop %v4250
        %v4395 = vtanh.pop %v4251
        %v4396 = vtanh.pop %v4252
        %v4397 = vtanh.pop %v4253
        %v4398 = vtanh.pop %v4254
        %v4399 = vtanh.pop %v4255
        %v4400 = vtanh.pop %v4256
        %v4401 = vtanh.pop %v4257
        %v4402 = vtanh.pop %v4258
        %v4403 = vtanh.pop %v4259
        %v4404 = vtanh.pop %v4260
        %v4405 = vtanh.pop %v4261
        %v4406 = vtanh.pop %v4262
        %v4407 = vtanh.pop %v4263
        %v4408 = vtanh.pop %v4264
        %v4409 = vtanh.pop %v4265
        %v4410 = vtanh.pop %v4266
        %v4411 = vtanh.pop %v4267
        %v4412 = vtanh.pop %v4268
        %v4413 = vtanh.pop %v4269
        %v4414 = vtanh.pop %v4270
        %v4415 = vtanh.pop %v4271
        %v4416 = vtanh.pop %v4272
        %v4417 = vtanh.pop %v4273
        %v4418 = vtanh.pop %v4274
        %v4419 = vtanh.pop %v4275
        %v4420 = vtanh.pop %v4276
        %v4421 = vtanh.pop %v4277
        %v4422 = vtanh.pop %v4278
        %v4423 = vtanh.pop %v4279
        %v4424 = vtanh.pop %v4280
        %v4425 = vtanh.pop %v4281
        %v4426 = vtanh.pop %v4282
        %v4427 = vtanh.pop %v4283
        %v4428 = vtanh.pop %v4284
        %v4429 = vtanh.pop %v4285
        %v4430 = vtanh.pop %v4286
        %v4431 = vtanh.pop %v4287
        %v4432 = vtanh.pop %v4288
        %v4433 = vtanh.pop %v4289
        %v4434 = vtanh.pop %v4290
        %v4435 = vtanh.pop %v4291
        %v4436 = vadd.f32 %v4292, 1.0
        %v4437 = vadd.f32 %v4293, 1.0
        %v4438 = vadd.f32 %v4294, 1.0
        %v4439 = vadd.f32 %v4295, 1.0
        %v4440 = vadd.f32 %v4296, 1.0
        %v4441 = vadd.f32 %v4297, 1.0
        %v4442 = vadd.f32 %v4298, 1.0
        %v4443 = vadd.f32 %v4299, 1.0
        %v4444 = vadd.f32 %v4300, 1.0
        %v4445 = vadd.f32 %v4301, 1.0
        %v4446 = vadd.f32 %v4302, 1.0
        %v4447 = vadd.f32 %v4303, 1.0
        %v4448 = vadd.f32 %v4304, 1.0
        %v4449 = vadd.f32 %v4305, 1.0
        %v4450 = vadd.f32 %v4306, 1.0
        %v4451 = vadd.f32 %v4307, 1.0
        %v4452 = vadd.f32 %v4308, 1.0
        %v4453 = vadd.f32 %v4309, 1.0
        %v4454 = vadd.f32 %v4310, 1.0
        %v4455 = vadd.f32 %v4311, 1.0
        %v4456 = vadd.f32 %v4312, 1.0
        %v4457 = vadd.f32 %v4313, 1.0
        %v4458 = vadd.f32 %v4314, 1.0
        %v4459 = vadd.f32 %v4315, 1.0
        %v4460 = vadd.f32 %v4316, 1.0
        %v4461 = vadd.f32 %v4317, 1.0
        %v4462 = vadd.f32 %v4318, 1.0
        %v4463 = vadd.f32 %v4319, 1.0
        %v4464 = vadd.f32 %v4320, 1.0
        %v4465 = vadd.f32 %v4321, 1.0
        %v4466 = vadd.f32 %v4322, 1.0
        %v4467 = vadd.f32 %v4323, 1.0
        %v4468 = vadd.f32 %v4324, 1.0
        %v4469 = vadd.f32 %v4325, 1.0
        %v4470 = vadd.f32 %v4326, 1.0
        %v4471 = vadd.f32 %v4327, 1.0
        %v4472 = vadd.f32 %v4328, 1.0
        %v4473 = vadd.f32 %v4329, 1.0
        %v4474 = vadd.f32 %v4330, 1.0
        %v4475 = vadd.f32 %v4331, 1.0
        %v4476 = vadd.f32 %v4332, 1.0
        %v4477 = vadd.f32 %v4333, 1.0
        %v4478 = vadd.f32 %v4334, 1.0
        %v4479 = vadd.f32 %v4335, 1.0
        %v4480 = vadd.f32 %v4336, 1.0
        %v4481 = vadd.f32 %v4337, 1.0
        %v4482 = vadd.f32 %v4338, 1.0
        %v4483 = vadd.f32 %v4339, 1.0
        %v4484 = vadd.f32 %v4340, 1.0
        %v4485 = vadd.f32 %v4341, 1.0
        %v4486 = vadd.f32 %v4342, 1.0
        %v4487 = vadd.f32 %v4343, 1.0
        %v4488 = vadd.f32 %v4344, 1.0
        %v4489 = vadd.f32 %v4345, 1.0
        %v4490 = vadd.f32 %v4346, 1.0
        %v4491 = vadd.f32 %v4347, 1.0
        %v4492 = vadd.f32 %v4348, 1.0
        %v4493 = vadd.f32 %v4349, 1.0
        %v4494 = vadd.f32 %v4350, 1.0
        %v4495 = vadd.f32 %v4351, 1.0
        %v4496 = vadd.f32 %v4352, 1.0
        %v4497 = vadd.f32 %v4353, 1.0
        %v4498 = vadd.f32 %v4354, 1.0
        %v4499 = vadd.f32 %v4355, 1.0
        %v4500 = vadd.f32 %v4356, 1.0
        %v4501 = vadd.f32 %v4357, 1.0
        %v4502 = vadd.f32 %v4358, 1.0
        %v4503 = vadd.f32 %v4359, 1.0
        %v4504 = vadd.f32 %v4360, 1.0
        %v4505 = vadd.f32 %v4361, 1.0
        %v4506 = vadd.f32 %v4362, 1.0
        %v4507 = vadd.f32 %v4363, 1.0
        %v4508 = vadd.f32 %v4364, 1.0
        %v4509 = vadd.f32 %v4365, 1.0
        %v4510 = vadd.f32 %v4366, 1.0
        %v4511 = vadd.f32 %v4367, 1.0
        %v4512 = vadd.f32 %v4368, 1.0
        %v4513 = vadd.f32 %v4369, 1.0
        %v4514 = vadd.f32 %v4370, 1.0
        %v4515 = vadd.f32 %v4371, 1.0
        %v4516 = vadd.f32 %v4372, 1.0
        %v4517 = vadd.f32 %v4373, 1.0
        %v4518 = vadd.f32 %v4374, 1.0
        %v4519 = vadd.f32 %v4375, 1.0
        %v4520 = vadd.f32 %v4376, 1.0
        %v4521 = vadd.f32 %v4377, 1.0
        %v4522 = vadd.f32 %v4378, 1.0
        %v4523 = vadd.f32 %v4379, 1.0
        %v4524 = vadd.f32 %v4380, 1.0
        %v4525 = vadd.f32 %v4381, 1.0
        %v4526 = vadd.f32 %v4382, 1.0
        %v4527 = vadd.f32 %v4383, 1.0
        %v4528 = vadd.f32 %v4384, 1.0
        %v4529 = vadd.f32 %v4385, 1.0
        %v4530 = vadd.f32 %v4386, 1.0
        %v4531 = vadd.f32 %v4387, 1.0
        %v4532 = vadd.f32 %v4388, 1.0
        %v4533 = vadd.f32 %v4389, 1.0
        %v4534 = vadd.f32 %v4390, 1.0
        %v4535 = vadd.f32 %v4391, 1.0
        %v4536 = vadd.f32 %v4392, 1.0
        %v4537 = vadd.f32 %v4393, 1.0
        %v4538 = vadd.f32 %v4394, 1.0
        %v4539 = vadd.f32 %v4395, 1.0
        %v4540 = vadd.f32 %v4396, 1.0
        %v4541 = vadd.f32 %v4397, 1.0
        %v4542 = vadd.f32 %v4398, 1.0
        %v4543 = vadd.f32 %v4399, 1.0
        %v4544 = vadd.f32 %v4400, 1.0
        %v4545 = vadd.f32 %v4401, 1.0
        %v4546 = vadd.f32 %v4402, 1.0
        %v4547 = vadd.f32 %v4403, 1.0
        %v4548 = vadd.f32 %v4404, 1.0
        %v4549 = vadd.f32 %v4405, 1.0
        %v4550 = vadd.f32 %v4406, 1.0
        %v4551 = vadd.f32 %v4407, 1.0
        %v4552 = vadd.f32 %v4408, 1.0
        %v4553 = vadd.f32 %v4409, 1.0
        %v4554 = vadd.f32 %v4410, 1.0
        %v4555 = vadd.f32 %v4411, 1.0
        %v4556 = vadd.f32 %v4412, 1.0
        %v4557 = vadd.f32 %v4413, 1.0
        %v4558 = vadd.f32 %v4414, 1.0
        %v4559 = vadd.f32 %v4415, 1.0
        %v4560 = vadd.f32 %v4416, 1.0
        %v4561 = vadd.f32 %v4417, 1.0
        %v4562 = vadd.f32 %v4418, 1.0
        %v4563 = vadd.f32 %v4419, 1.0
        %v4564 = vadd.f32 %v4420, 1.0
        %v4565 = vadd.f32 %v4421, 1.0
        %v4566 = vadd.f32 %v4422, 1.0
        %v4567 = vadd.f32 %v4423, 1.0
        %v4568 = vadd.f32 %v4424, 1.0
        %v4569 = vadd.f32 %v4425, 1.0
        %v4570 = vadd.f32 %v4426, 1.0
        %v4571 = vadd.f32 %v4427, 1.0
        %v4572 = vadd.f32 %v4428, 1.0
        %v4573 = vadd.f32 %v4429, 1.0
        %v4574 = vadd.f32 %v4430, 1.0
        %v4575 = vadd.f32 %v4431, 1.0
        %v4576 = vadd.f32 %v4432, 1.0
        %v4577 = vadd.f32 %v4433, 1.0
        %v4578 = vadd.f32 %v4434, 1.0
        %v4579 = vadd.f32 %v4435, 1.0
        %v4580 = vmul.f32 %v4436, 0.5
        %v4581 = vmul.f32 %v4437, 0.5
        %v4582 = vmul.f32 %v4438, 0.5
        %v4583 = vmul.f32 %v4439, 0.5
        %v4584 = vmul.f32 %v4440, 0.5
        %v4585 = vmul.f32 %v4441, 0.5
        %v4586 = vmul.f32 %v4442, 0.5
        %v4587 = vmul.f32 %v4443, 0.5
        %v4588 = vmul.f32 %v4444, 0.5
        %v4589 = vmul.f32 %v4445, 0.5
        %v4590 = vmul.f32 %v4446, 0.5
        %v4591 = vmul.f32 %v4447, 0.5
        %v4592 = vmul.f32 %v4448, 0.5
        %v4593 = vmul.f32 %v4449, 0.5
        %v4594 = vmul.f32 %v4450, 0.5
        %v4595 = vmul.f32 %v4451, 0.5
        %v4596 = vmul.f32 %v4452, 0.5
        %v4597 = vmul.f32 %v4453, 0.5
        %v4598 = vmul.f32 %v4454, 0.5
        %v4599 = vmul.f32 %v4455, 0.5
        %v4600 = vmul.f32 %v4456, 0.5
        %v4601 = vmul.f32 %v4457, 0.5
        %v4602 = vmul.f32 %v4458, 0.5
        %v4603 = vmul.f32 %v4459, 0.5
        %v4604 = vmul.f32 %v4460, 0.5
        %v4605 = vmul.f32 %v4461, 0.5
        %v4606 = vmul.f32 %v4462, 0.5
        %v4607 = vmul.f32 %v4463, 0.5
        %v4608 = vmul.f32 %v4464, 0.5
        %v4609 = vmul.f32 %v4465, 0.5
        %v4610 = vmul.f32 %v4466, 0.5
        %v4611 = vmul.f32 %v4467, 0.5
        %v4612 = vmul.f32 %v4468, 0.5
        %v4613 = vmul.f32 %v4469, 0.5
        %v4614 = vmul.f32 %v4470, 0.5
        %v4615 = vmul.f32 %v4471, 0.5
        %v4616 = vmul.f32 %v4472, 0.5
        %v4617 = vmul.f32 %v4473, 0.5
        %v4618 = vmul.f32 %v4474, 0.5
        %v4619 = vmul.f32 %v4475, 0.5
        %v4620 = vmul.f32 %v4476, 0.5
        %v4621 = vmul.f32 %v4477, 0.5
        %v4622 = vmul.f32 %v4478, 0.5
        %v4623 = vmul.f32 %v4479, 0.5
        %v4624 = vmul.f32 %v4480, 0.5
        %v4625 = vmul.f32 %v4481, 0.5
        %v4626 = vmul.f32 %v4482, 0.5
        %v4627 = vmul.f32 %v4483, 0.5
        %v4628 = vmul.f32 %v4484, 0.5
        %v4629 = vmul.f32 %v4485, 0.5
        %v4630 = vmul.f32 %v4486, 0.5
        %v4631 = vmul.f32 %v4487, 0.5
        %v4632 = vmul.f32 %v4488, 0.5
        %v4633 = vmul.f32 %v4489, 0.5
        %v4634 = vmul.f32 %v4490, 0.5
        %v4635 = vmul.f32 %v4491, 0.5
        %v4636 = vmul.f32 %v4492, 0.5
        %v4637 = vmul.f32 %v4493, 0.5
        %v4638 = vmul.f32 %v4494, 0.5
        %v4639 = vmul.f32 %v4495, 0.5
        %v4640 = vmul.f32 %v4496, 0.5
        %v4641 = vmul.f32 %v4497, 0.5
        %v4642 = vmul.f32 %v4498, 0.5
        %v4643 = vmul.f32 %v4499, 0.5
        %v4644 = vmul.f32 %v4500, 0.5
        %v4645 = vmul.f32 %v4501, 0.5
        %v4646 = vmul.f32 %v4502, 0.5
        %v4647 = vmul.f32 %v4503, 0.5
        %v4648 = vmul.f32 %v4504, 0.5
        %v4649 = vmul.f32 %v4505, 0.5
        %v4650 = vmul.f32 %v4506, 0.5
        %v4651 = vmul.f32 %v4507, 0.5
        %v4652 = vmul.f32 %v4508, 0.5
        %v4653 = vmul.f32 %v4509, 0.5
        %v4654 = vmul.f32 %v4510, 0.5
        %v4655 = vmul.f32 %v4511, 0.5
        %v4656 = vmul.f32 %v4512, 0.5
        %v4657 = vmul.f32 %v4513, 0.5
        %v4658 = vmul.f32 %v4514, 0.5
        %v4659 = vmul.f32 %v4515, 0.5
        %v4660 = vmul.f32 %v4516, 0.5
        %v4661 = vmul.f32 %v4517, 0.5
        %v4662 = vmul.f32 %v4518, 0.5
        %v4663 = vmul.f32 %v4519, 0.5
        %v4664 = vmul.f32 %v4520, 0.5
        %v4665 = vmul.f32 %v4521, 0.5
        %v4666 = vmul.f32 %v4522, 0.5
        %v4667 = vmul.f32 %v4523, 0.5
        %v4668 = vmul.f32 %v4524, 0.5
        %v4669 = vmul.f32 %v4525, 0.5
        %v4670 = vmul.f32 %v4526, 0.5
        %v4671 = vmul.f32 %v4527, 0.5
        %v4672 = vmul.f32 %v4528, 0.5
        %v4673 = vmul.f32 %v4529, 0.5
        %v4674 = vmul.f32 %v4530, 0.5
        %v4675 = vmul.f32 %v4531, 0.5
        %v4676 = vmul.f32 %v4532, 0.5
        %v4677 = vmul.f32 %v4533, 0.5
        %v4678 = vmul.f32 %v4534, 0.5
        %v4679 = vmul.f32 %v4535, 0.5
        %v4680 = vmul.f32 %v4536, 0.5
        %v4681 = vmul.f32 %v4537, 0.5
        %v4682 = vmul.f32 %v4538, 0.5
        %v4683 = vmul.f32 %v4539, 0.5
        %v4684 = vmul.f32 %v4540, 0.5
        %v4685 = vmul.f32 %v4541, 0.5
        %v4686 = vmul.f32 %v4542, 0.5
        %v4687 = vmul.f32 %v4543, 0.5
        %v4688 = vmul.f32 %v4544, 0.5
        %v4689 = vmul.f32 %v4545, 0.5
        %v4690 = vmul.f32 %v4546, 0.5
        %v4691 = vmul.f32 %v4547, 0.5
        %v4692 = vmul.f32 %v4548, 0.5
        %v4693 = vmul.f32 %v4549, 0.5
        %v4694 = vmul.f32 %v4550, 0.5
        %v4695 = vmul.f32 %v4551, 0.5
        %v4696 = vmul.f32 %v4552, 0.5
        %v4697 = vmul.f32 %v4553, 0.5
        %v4698 = vmul.f32 %v4554, 0.5
        %v4699 = vmul.f32 %v4555, 0.5
        %v4700 = vmul.f32 %v4556, 0.5
        %v4701 = vmul.f32 %v4557, 0.5
        %v4702 = vmul.f32 %v4558, 0.5
        %v4703 = vmul.f32 %v4559, 0.5
        %v4704 = vmul.f32 %v4560, 0.5
        %v4705 = vmul.f32 %v4561, 0.5
        %v4706 = vmul.f32 %v4562, 0.5
        %v4707 = vmul.f32 %v4563, 0.5
        %v4708 = vmul.f32 %v4564, 0.5
        %v4709 = vmul.f32 %v4565, 0.5
        %v4710 = vmul.f32 %v4566, 0.5
        %v4711 = vmul.f32 %v4567, 0.5
        %v4712 = vmul.f32 %v4568, 0.5
        %v4713 = vmul.f32 %v4569, 0.5
        %v4714 = vmul.f32 %v4570, 0.5
        %v4715 = vmul.f32 %v4571, 0.5
        %v4716 = vmul.f32 %v4572, 0.5
        %v4717 = vmul.f32 %v4573, 0.5
        %v4718 = vmul.f32 %v4574, 0.5
        %v4719 = vmul.f32 %v4575, 0.5
        %v4720 = vmul.f32 %v4576, 0.5
        %v4721 = vmul.f32 %v4577, 0.5
        %v4722 = vmul.f32 %v4578, 0.5
        %v4723 = vmul.f32 %v4579, 0.5
        %v4724 = vmul.f32 %v2536, %v4580
        %v4725 = vmul.f32 %v2538, %v4581
        %v4726 = vmul.f32 %v2995, %v4582
        %v4727 = vmul.f32 %v2997, %v4583
        %v4728 = vmul.f32 %v3454, %v4584
        %v4729 = vmul.f32 %v3456, %v4585
        %v4730 = vmul.f32 %v2540, %v4586
        %v4731 = vmul.f32 %v2542, %v4587
        %v4732 = vmul.f32 %v2999, %v4588
        %v4733 = vmul.f32 %v3001, %v4589
        %v4734 = vmul.f32 %v3458, %v4590
        %v4735 = vmul.f32 %v3460, %v4591
        %v4736 = vmul.f32 %v2546, %v4592
        %v4737 = vmul.f32 %v2548, %v4593
        %v4738 = vmul.f32 %v3005, %v4594
        %v4739 = vmul.f32 %v3007, %v4595
        %v4740 = vmul.f32 %v3464, %v4596
        %v4741 = vmul.f32 %v3466, %v4597
        %v4742 = vmul.f32 %v2550, %v4598
        %v4743 = vmul.f32 %v2552, %v4599
        %v4744 = vmul.f32 %v3009, %v4600
        %v4745 = vmul.f32 %v3011, %v4601
        %v4746 = vmul.f32 %v3468, %v4602
        %v4747 = vmul.f32 %v3470, %v4603
        %v4748 = vmul.f32 %v2556, %v4604
        %v4749 = vmul.f32 %v2558, %v4605
        %v4750 = vmul.f32 %v3015, %v4606
        %v4751 = vmul.f32 %v3017, %v4607
        %v4752 = vmul.f32 %v3474, %v4608
        %v4753 = vmul.f32 %v3476, %v4609
        %v4754 = vmul.f32 %v2560, %v4610
        %v4755 = vmul.f32 %v2562, %v4611
        %v4756 = vmul.f32 %v3019, %v4612
        %v4757 = vmul.f32 %v3021, %v4613
        %v4758 = vmul.f32 %v3478, %v4614
        %v4759 = vmul.f32 %v3480, %v4615
        %v4760 = vmul.f32 %v2566, %v4616
        %v4761 = vmul.f32 %v2568, %v4617
        %v4762 = vmul.f32 %v3025, %v4618
        %v4763 = vmul.f32 %v3027, %v4619
        %v4764 = vmul.f32 %v3484, %v4620
        %v4765 = vmul.f32 %v3486, %v4621
        %v4766 = vmul.f32 %v2570, %v4622
        %v4767 = vmul.f32 %v2572, %v4623
        %v4768 = vmul.f32 %v3029, %v4624
        %v4769 = vmul.f32 %v3031, %v4625
        %v4770 = vmul.f32 %v3488, %v4626
        %v4771 = vmul.f32 %v3490, %v4627
        %v4772 = vmul.f32 %v2576, %v4628
        %v4773 = vmul.f32 %v2578, %v4629
        %v4774 = vmul.f32 %v3035, %v4630
        %v4775 = vmul.f32 %v3037, %v4631
        %v4776 = vmul.f32 %v3494, %v4632
        %v4777 = vmul.f32 %v3496, %v4633
        %v4778 = vmul.f32 %v2580, %v4634
        %v4779 = vmul.f32 %v2582, %v4635
        %v4780 = vmul.f32 %v3039, %v4636
        %v4781 = vmul.f32 %v3041, %v4637
        %v4782 = vmul.f32 %v3498, %v4638
        %v4783 = vmul.f32 %v3500, %v4639
        %v4784 = vmul.f32 %v2586, %v4640
        %v4785 = vmul.f32 %v2588, %v4641
        %v4786 = vmul.f32 %v3045, %v4642
        %v4787 = vmul.f32 %v3047, %v4643
        %v4788 = vmul.f32 %v3504, %v4644
        %v4789 = vmul.f32 %v3506, %v4645
        %v4790 = vmul.f32 %v2590, %v4646
        %v4791 = vmul.f32 %v2592, %v4647
        %v4792 = vmul.f32 %v3049, %v4648
        %v4793 = vmul.f32 %v3051, %v4649
        %v4794 = vmul.f32 %v3508, %v4650
        %v4795 = vmul.f32 %v3510, %v4651
        %v4796 = vmul.f32 %v2596, %v4652
        %v4797 = vmul.f32 %v2598, %v4653
        %v4798 = vmul.f32 %v3055, %v4654
        %v4799 = vmul.f32 %v3057, %v4655
        %v4800 = vmul.f32 %v3514, %v4656
        %v4801 = vmul.f32 %v3516, %v4657
        %v4802 = vmul.f32 %v2600, %v4658
        %v4803 = vmul.f32 %v2602, %v4659
        %v4804 = vmul.f32 %v3059, %v4660
        %v4805 = vmul.f32 %v3061, %v4661
        %v4806 = vmul.f32 %v3518, %v4662
        %v4807 = vmul.f32 %v3520, %v4663
        %v4808 = vmul.f32 %v2606, %v4664
        %v4809 = vmul.f32 %v2608, %v4665
        %v4810 = vmul.f32 %v3065, %v4666
        %v4811 = vmul.f32 %v3067, %v4667
        %v4812 = vmul.f32 %v3524, %v4668
        %v4813 = vmul.f32 %v3526, %v4669
        %v4814 = vmul.f32 %v2610, %v4670
        %v4815 = vmul.f32 %v2612, %v4671
        %v4816 = vmul.f32 %v3069, %v4672
        %v4817 = vmul.f32 %v3071, %v4673
        %v4818 = vmul.f32 %v3528, %v4674
        %v4819 = vmul.f32 %v3530, %v4675
        %v4820 = vmul.f32 %v2616, %v4676
        %v4821 = vmul.f32 %v2618, %v4677
        %v4822 = vmul.f32 %v3075, %v4678
        %v4823 = vmul.f32 %v3077, %v4679
        %v4824 = vmul.f32 %v3534, %v4680
        %v4825 = vmul.f32 %v3536, %v4681
        %v4826 = vmul.f32 %v2620, %v4682
        %v4827 = vmul.f32 %v2622, %v4683
        %v4828 = vmul.f32 %v3079, %v4684
        %v4829 = vmul.f32 %v3081, %v4685
        %v4830 = vmul.f32 %v3538, %v4686
        %v4831 = vmul.f32 %v3540, %v4687
        %v4832 = vmul.f32 %v2626, %v4688
        %v4833 = vmul.f32 %v2628, %v4689
        %v4834 = vmul.f32 %v3085, %v4690
        %v4835 = vmul.f32 %v3087, %v4691
        %v4836 = vmul.f32 %v3544, %v4692
        %v4837 = vmul.f32 %v3546, %v4693
        %v4838 = vmul.f32 %v2630, %v4694
        %v4839 = vmul.f32 %v2632, %v4695
        %v4840 = vmul.f32 %v3089, %v4696
        %v4841 = vmul.f32 %v3091, %v4697
        %v4842 = vmul.f32 %v3548, %v4698
        %v4843 = vmul.f32 %v3550, %v4699
        %v4844 = vmul.f32 %v2636, %v4700
        %v4845 = vmul.f32 %v2638, %v4701
        %v4846 = vmul.f32 %v3095, %v4702
        %v4847 = vmul.f32 %v3097, %v4703
        %v4848 = vmul.f32 %v3554, %v4704
        %v4849 = vmul.f32 %v3556, %v4705
        %v4850 = vmul.f32 %v2640, %v4706
        %v4851 = vmul.f32 %v2642, %v4707
        %v4852 = vmul.f32 %v3099, %v4708
        %v4853 = vmul.f32 %v3101, %v4709
        %v4854 = vmul.f32 %v3558, %v4710
        %v4855 = vmul.f32 %v3560, %v4711
        %v4856 = vmul.f32 %v2646, %v4712
        %v4857 = vmul.f32 %v2648, %v4713
        %v4858 = vmul.f32 %v3105, %v4714
        %v4859 = vmul.f32 %v3107, %v4715
        %v4860 = vmul.f32 %v3564, %v4716
        %v4861 = vmul.f32 %v3566, %v4717
        %v4862 = vmul.f32 %v2650, %v4718
        %v4863 = vmul.f32 %v2652, %v4719
        %v4864 = vmul.f32 %v3109, %v4720
        %v4865 = vmul.f32 %v3111, %v4721
        %v4866 = vmul.f32 %v3568, %v4722
        %v4867 = vmul.f32 %v3570, %v4723
        %4868 = vst [vmem:[%s216] sm:$0xff] %v4724
        %4869 = vst [vmem:[%s216 + $0x8] sm:$0xff] %v4725
        %4870 = vst [vmem:[%s216 + $0x10] sm:$0xff] %v4726
        %4871 = vst [vmem:[%s216 + $0x18] sm:$0xff] %v4727
        %4872 = vst [vmem:[%s216 + $0x20] sm:$0xff] %v4728
        %4873 = vst [vmem:[%s216 + $0x28] sm:$0xff] %v4729
        %4874 = vst [vmem:[%s216 + $0x30] sm:$0xff] %v4730
        %4875 = vst [vmem:[%s216 + $0x38] sm:$0xff] %v4731
        %4876 = vst [vmem:[%s216 + $0x40] sm:$0xff] %v4732
        %4877 = vst [vmem:[%s216 + $0x48] sm:$0xff] %v4733
        %4878 = vst [vmem:[%s216 + $0x50] sm:$0xff] %v4734
        %4879 = vst [vmem:[%s216 + $0x58] sm:$0xff] %v4735
        %4880 = vst [vmem:[%s216 + $0x60] sm:$0xff] %v4736
        %4881 = vst [vmem:[%s216 + $0x68] sm:$0xff] %v4737
        %4882 = vst [vmem:[%s216 + $0x70] sm:$0xff] %v4738
        %4883 = vst [vmem:[%s216 + $0x78] sm:$0xff] %v4739
        %4884 = vst [vmem:[%s216 + $0x80] sm:$0xff] %v4740
        %4885 = vst [vmem:[%s216 + $0x88] sm:$0xff] %v4741
        %4886 = vst [vmem:[%s216 + $0x90] sm:$0xff] %v4742
        %4887 = vst [vmem:[%s216 + $0x98] sm:$0xff] %v4743
        %4888 = vst [vmem:[%s216 + $0xa0] sm:$0xff] %v4744
        %4889 = vst [vmem:[%s216 + $0xa8] sm:$0xff] %v4745
        %4890 = vst [vmem:[%s216 + $0xb0] sm:$0xff] %v4746
        %4891 = vst [vmem:[%s216 + $0xb8] sm:$0xff] %v4747
        %4892 = vst [vmem:[%s216 + $0xc0] sm:$0xff] %v4748
        %4893 = vst [vmem:[%s216 + $0xc8] sm:$0xff] %v4749
        %4894 = vst [vmem:[%s216 + $0xd0] sm:$0xff] %v4750
        %4895 = vst [vmem:[%s216 + $0xd8] sm:$0xff] %v4751
        %4896 = vst [vmem:[%s216 + $0xe0] sm:$0xff] %v4752
        %4897 = vst [vmem:[%s216 + $0xe8] sm:$0xff] %v4753
        %4898 = vst [vmem:[%s216 + $0xf0] sm:$0xff] %v4754
        %4899 = vst [vmem:[%s216 + $0xf8] sm:$0xff] %v4755
        %4900 = vst [vmem:[%s216 + $0x100] sm:$0xff] %v4756
        %4901 = vst [vmem:[%s216 + $0x108] sm:$0xff] %v4757
        %4902 = vst [vmem:[%s216 + $0x110] sm:$0xff] %v4758
        %4903 = vst [vmem:[%s216 + $0x118] sm:$0xff] %v4759
        %4904 = vst [vmem:[%s216 + $0x120] sm:$0xff] %v4760
        %4905 = vst [vmem:[%s216 + $0x128] sm:$0xff] %v4761
        %4906 = vst [vmem:[%s216 + $0x130] sm:$0xff] %v4762
        %4907 = vst [vmem:[%s216 + $0x138] sm:$0xff] %v4763
        %4908 = vst [vmem:[%s216 + $0x140] sm:$0xff] %v4764
        %4909 = vst [vmem:[%s216 + $0x148] sm:$0xff] %v4765
        %4910 = vst [vmem:[%s216 + $0x150] sm:$0xff] %v4766
        %4911 = vst [vmem:[%s216 + $0x158] sm:$0xff] %v4767
        %4912 = vst [vmem:[%s216 + $0x160] sm:$0xff] %v4768
        %4913 = vst [vmem:[%s216 + $0x168] sm:$0xff] %v4769
        %4914 = vst [vmem:[%s216 + $0x170] sm:$0xff] %v4770
        %4915 = vst [vmem:[%s216 + $0x178] sm:$0xff] %v4771
        %4916 = vst [vmem:[%s216 + $0x180] sm:$0xff] %v4772
        %4917 = vst [vmem:[%s216 + $0x188] sm:$0xff] %v4773
        %4918 = vst [vmem:[%s216 + $0x190] sm:$0xff] %v4774
        %4919 = vst [vmem:[%s216 + $0x198] sm:$0xff] %v4775
        %4920 = vst [vmem:[%s216 + $0x1a0] sm:$0xff] %v4776
        %4921 = vst [vmem:[%s216 + $0x1a8] sm:$0xff] %v4777
        %4922 = vst [vmem:[%s216 + $0x1b0] sm:$0xff] %v4778
        %4923 = vst [vmem:[%s216 + $0x1b8] sm:$0xff] %v4779
        %4924 = vst [vmem:[%s216 + $0x1c0] sm:$0xff] %v4780
        %4925 = vst [vmem:[%s216 + $0x1c8] sm:$0xff] %v4781
        %4926 = vst [vmem:[%s216 + $0x1d0] sm:$0xff] %v4782
        %4927 = vst [vmem:[%s216 + $0x1d8] sm:$0xff] %v4783
        %4928 = vst [vmem:[%s216 + $0x1e0] sm:$0xff] %v4784
        %4929 = vst [vmem:[%s216 + $0x1e8] sm:$0xff] %v4785
        %4930 = vst [vmem:[%s216 + $0x1f0] sm:$0xff] %v4786
        %4931 = vst [vmem:[%s216 + $0x1f8] sm:$0xff] %v4787
        %4932 = vst [vmem:[%s216 + $0x200] sm:$0xff] %v4788
        %4933 = vst [vmem:[%s216 + $0x208] sm:$0xff] %v4789
        %4934 = vst [vmem:[%s216 + $0x210] sm:$0xff] %v4790
        %4935 = vst [vmem:[%s216 + $0x218] sm:$0xff] %v4791
        %4936 = vst [vmem:[%s216 + $0x220] sm:$0xff] %v4792
        %4937 = vst [vmem:[%s216 + $0x228] sm:$0xff] %v4793
        %4938 = vst [vmem:[%s216 + $0x230] sm:$0xff] %v4794
        %4939 = vst [vmem:[%s216 + $0x238] sm:$0xff] %v4795
        %4940 = vst [vmem:[%s216 + $0x240] sm:$0xff] %v4796
        %4941 = vst [vmem:[%s216 + $0x248] sm:$0xff] %v4797
        %4942 = vst [vmem:[%s216 + $0x250] sm:$0xff] %v4798
        %4943 = vst [vmem:[%s216 + $0x258] sm:$0xff] %v4799
        %4944 = vst [vmem:[%s216 + $0x260] sm:$0xff] %v4800
        %4945 = vst [vmem:[%s216 + $0x268] sm:$0xff] %v4801
        %4946 = vst [vmem:[%s216 + $0x270] sm:$0xff] %v4802
        %4947 = vst [vmem:[%s216 + $0x278] sm:$0xff] %v4803
        %4948 = vst [vmem:[%s216 + $0x280] sm:$0xff] %v4804
        %4949 = vst [vmem:[%s216 + $0x288] sm:$0xff] %v4805
        %4950 = vst [vmem:[%s216 + $0x290] sm:$0xff] %v4806
        %4951 = vst [vmem:[%s216 + $0x298] sm:$0xff] %v4807
        %4952 = vst [vmem:[%s216 + $0x2a0] sm:$0xff] %v4808
        %4953 = vst [vmem:[%s216 + $0x2a8] sm:$0xff] %v4809
        %4954 = vst [vmem:[%s216 + $0x2b0] sm:$0xff] %v4810
        %4955 = vst [vmem:[%s216 + $0x2b8] sm:$0xff] %v4811
        %4956 = vst [vmem:[%s216 + $0x2c0] sm:$0xff] %v4812
        %4957 = vst [vmem:[%s216 + $0x2c8] sm:$0xff] %v4813
        %4958 = vst [vmem:[%s216 + $0x2d0] sm:$0xff] %v4814
        %4959 = vst [vmem:[%s216 + $0x2d8] sm:$0xff] %v4815
        %4960 = vst [vmem:[%s216 + $0x2e0] sm:$0xff] %v4816
        %4961 = vst [vmem:[%s216 + $0x2e8] sm:$0xff] %v4817
        %4962 = vst [vmem:[%s216 + $0x2f0] sm:$0xff] %v4818
        %4963 = vst [vmem:[%s216 + $0x2f8] sm:$0xff] %v4819
        %4964 = vst [vmem:[%s216 + $0x300] sm:$0xff] %v4820
        %4965 = vst [vmem:[%s216 + $0x308] sm:$0xff] %v4821
        %4966 = vst [vmem:[%s216 + $0x310] sm:$0xff] %v4822
        %4967 = vst [vmem:[%s216 + $0x318] sm:$0xff] %v4823
        %4968 = vst [vmem:[%s216 + $0x320] sm:$0xff] %v4824
        %4969 = vst [vmem:[%s216 + $0x328] sm:$0xff] %v4825
        %4970 = vst [vmem:[%s216 + $0x330] sm:$0xff] %v4826
        %4971 = vst [vmem:[%s216 + $0x338] sm:$0xff] %v4827
        %4972 = vst [vmem:[%s216 + $0x340] sm:$0xff] %v4828
        %4973 = vst [vmem:[%s216 + $0x348] sm:$0xff] %v4829
        %4974 = vst [vmem:[%s216 + $0x350] sm:$0xff] %v4830
        %4975 = vst [vmem:[%s216 + $0x358] sm:$0xff] %v4831
        %4976 = vst [vmem:[%s216 + $0x360] sm:$0xff] %v4832
        %4977 = vst [vmem:[%s216 + $0x368] sm:$0xff] %v4833
        %4978 = vst [vmem:[%s216 + $0x370] sm:$0xff] %v4834
        %4979 = vst [vmem:[%s216 + $0x378] sm:$0xff] %v4835
        %4980 = vst [vmem:[%s216 + $0x380] sm:$0xff] %v4836
        %4981 = vst [vmem:[%s216 + $0x388] sm:$0xff] %v4837
        %4982 = vst [vmem:[%s216 + $0x390] sm:$0xff] %v4838
        %4983 = vst [vmem:[%s216 + $0x398] sm:$0xff] %v4839
        %4984 = vst [vmem:[%s216 + $0x3a0] sm:$0xff] %v4840
        %4985 = vst [vmem:[%s216 + $0x3a8] sm:$0xff] %v4841
        %4986 = vst [vmem:[%s216 + $0x3b0] sm:$0xff] %v4842
        %4987 = vst [vmem:[%s216 + $0x3b8] sm:$0xff] %v4843
        %4988 = vst [vmem:[%s216 + $0x3c0] sm:$0xff] %v4844
        %4989 = vst [vmem:[%s216 + $0x3c8] sm:$0xff] %v4845
        %4990 = vst [vmem:[%s216 + $0x3d0] sm:$0xff] %v4846
        %4991 = vst [vmem:[%s216 + $0x3d8] sm:$0xff] %v4847
        %4992 = vst [vmem:[%s216 + $0x3e0] sm:$0xff] %v4848
        %4993 = vst [vmem:[%s216 + $0x3e8] sm:$0xff] %v4849
        %4994 = vst [vmem:[%s216 + $0x3f0] sm:$0xff] %v4850
        %4995 = vst [vmem:[%s216 + $0x3f8] sm:$0xff] %v4851
        %4996 = vst [vmem:[%s216 + $0x400] sm:$0xff] %v4852
        %4997 = vst [vmem:[%s216 + $0x408] sm:$0xff] %v4853
        %4998 = vst [vmem:[%s216 + $0x410] sm:$0xff] %v4854
        %4999 = vst [vmem:[%s216 + $0x418] sm:$0xff] %v4855
        %5000 = vst [vmem:[%s216 + $0x420] sm:$0xff] %v4856
        %5001 = vst [vmem:[%s216 + $0x428] sm:$0xff] %v4857
        %5002 = vst [vmem:[%s216 + $0x430] sm:$0xff] %v4858
        %5003 = vst [vmem:[%s216 + $0x438] sm:$0xff] %v4859
        %5004 = vst [vmem:[%s216 + $0x440] sm:$0xff] %v4860
        %5005 = vst [vmem:[%s216 + $0x448] sm:$0xff] %v4861
        %5006 = vst [vmem:[%s216 + $0x450] sm:$0xff] %v4862
        %5007 = vst [vmem:[%s216 + $0x458] sm:$0xff] %v4863
        %5008 = vst [vmem:[%s216 + $0x460] sm:$0xff] %v4864
        %5009 = vst [vmem:[%s216 + $0x468] sm:$0xff] %v4865
        %5010 = vst [vmem:[%s216 + $0x470] sm:$0xff] %v4866
        %5011 = vst [vmem:[%s216 + $0x478] sm:$0xff] %v4867
        %s5012 = sand.u32 %s97, 1
        %s5013 = scalar_lea.sflag [#allocation4], %s5012
        %s5014 = sand.u32 %s97, 1
        %s5015 = smul.addr %s5014, 1152
        %s5016 = scalar_lea.vmem [#allocation8], %s5015
        // Predicated region
        $region45: #{_lambda_.1} parent=31 // pred_check
          %p5017 = pneg %p107
        $region46: #{_lambda_.1} parent=31 // pred_check_branch
          %5019 = sbr.rel (%p5017) target = $region48
        $region47: #{_lambda_.1} parent=31 // pred_region
          %s5020 = smul.u32 24, %s21
          %s5022 = ssub.s32 18432, 18432
          %5023 = vsyncadd %s5013, %s5022
          %s5024 = smul.addr %s5020, 6
          %s5025 = smul.addr %s5024, 128
          %s5026 = scalar_lea.hbm %s3, %s5025
          %s5027 = sshll.u32 %s5016, 4
          %s5028 = int_to_ptr.vmem [resolvable:$true] %s5027
          %5033 = dma.vmem_to_hbm [thread:$0]  %s5028, 18432, %s5026, %s5013, 768, 768, 48
        $region48: #{_lambda_.1} parent=31 // pred_fallthru
          _
      $region32: #{_lambda_.1} parent=5 // pred_fallthru
        _
      %p5034 = scmp.le.s32.totalorder 2, %s16
      // Predicated region
      $region49: #{_lambda_.1} parent=5 // pred_check
        %p5035 = pneg %p5034
      $region50: #{_lambda_.1} parent=5 // pred_check_branch
        %5037 = sbr.rel (%p5035) target = $region52
      $region51: #{_lambda_.1} parent=5 // pred_region
        %s5038 = ssub.s32 %s16, 2
        // Predicated region
        $region53: #{_lambda_.1} parent=51 // pred_check
          %p5039 = pneg %p113
        $region54: #{_lambda_.1} parent=51 // pred_check_branch
          %5041 = sbr.rel (%p5039) target = $region56
        $region55: #{_lambda_.1} parent=51 // pred_region
          %s5042 = sand.u32 %s98, 1
          %s5043 = scalar_lea.sflag [#allocation4], %s5042
          %s5044 = sand.u32 %s98, 1
          %s5045 = smul.addr %s5044, 1152
          %s5046 = scalar_lea.vmem [#allocation8], %s5045
          %5047 = dma.done %s5043, 18432
        $region56: #{_lambda_.1} parent=51 // pred_fallthru
          _
      $region52: #{_lambda_.1} parent=5 // pred_fallthru
        _
    $region6: #{_lambda_.1} parent=1 // loop_footer
      %s20 = sadd.s32 1, %s16
    $region7: #{_lambda_.1} parent=1 // loop_footer_branch
      %15 = sbr.rel target = $region3
    $region8: #{_lambda_.1} parent=1 // loop_exit
      _
    %5048 = vsyncpa [#allocation3], 1
    %s5049 = scalar_lea.sflag [#allocation3], 1
    %5050 = vsyncpa %s5049, 1
    %5051 = vsyncpa [#allocation6], 1
    %5052 = vsyncpa [#allocation4], 1
    %s5053 = scalar_lea.sflag [#allocation4], 1
    %5054 = vsyncpa %s5053, 1

</llo_original>
